<compile_context>
chip_gen: v5e
topology: v5e:2x2
jax: 0.10.0
libtpu: 0.0.40
codegen_flags: <defaults>
</compile_context>

<pallas_src>
import math
import functools

import jax
import jax.numpy as jnp
from jax.experimental import pallas as pl
from jax.experimental.pallas import tpu as pltpu

EMBED_DIM = 192
NUM_HEADS = 3
MLP_RATIO = 4.0
LN_EPS = 1e-5

_PARAM_ORDER = ("ln1_w", "ln1_b", "wqkv", "bqkv", "wo", "bo",
                "ln2_w", "ln2_b", "w1", "b1", "w2", "b2")


# ----------------------------------------------------------------------------
# Kernel
# ----------------------------------------------------------------------------
def _encoder_kernel(num_heads, n_valid,
                    x_ref,
                    ln1w_ref, ln1b_ref,
                    wqkv_ref, bqkv_ref,
                    wo_ref, bo_ref,
                    ln2w_ref, ln2b_ref,
                    w1_ref, b1_ref, w2_ref, b2_ref,
                    o_ref):
    """One full transformer-encoder block on a (Bt, N, D) batch tile."""
    Bt, N, D = x_ref.shape
    M = Bt * N
    hd = D // num_heads
    Dp = wqkv_ref.shape[1] // 3          # 128-lane aligned q/k/v group width

    x = x_ref[...].astype(jnp.float32).reshape(M, D)          # (M, D) f32

    def layernorm(v, w, b):
        mu = jnp.mean(v, axis=-1, keepdims=True)
        c = v - mu
        var = jnp.mean(c * c, axis=-1, keepdims=True)
        return c * jax.lax.rsqrt(var + LN_EPS) * w + b

    # -------- pre-norm + multi-head self-attention --------
    xn = layernorm(x, ln1w_ref[...], ln1b_ref[...])           # (M, D) f32

    # Fused QKV projection (bf16 MXU operands, f32 accumulation).  The q/k/v
    # groups are padded to Dp columns so the slices below start on 128-lane
    # boundaries (softmax scale is pre-folded into the q columns/bias).
    qkv = jnp.dot(xn.astype(jnp.bfloat16), wqkv_ref[...],
                  preferred_element_type=jnp.float32) + bqkv_ref[...]   # (M, 3*Dp)

    q = qkv[:, 0 * Dp:0 * Dp + D].reshape(Bt, N, D)
    k = qkv[:, 1 * Dp:1 * Dp + D].reshape(Bt, N, D)
    v = qkv[:, 2 * Dp:2 * Dp + D].reshape(Bt, N, D)

    # Key-padding mask (only when the wrapper padded N to a multiple of 8).
    key_bias = None
    if n_valid < N:
        kidx = jax.lax.broadcasted_iota(jnp.int32, (Bt, N, N), 2)
        key_bias = jnp.where(kidx < n_valid, 0.0, -1e30).astype(jnp.float32)

    head_outs = []
    for h in range(num_heads):                                 # small, unrolled
        sl = slice(h * hd, (h + 1) * hd)
        q_h = q[..., sl].astype(jnp.bfloat16)                  # (Bt, N, hd)
        k_h = k[..., sl].astype(jnp.bfloat16)
        v_h = v[..., sl].astype(jnp.bfloat16)

        # scores: batched over the batch tile (scale already folded into q)
        s = jnp.einsum('bqd,bkd->bqk', q_h, k_h,
                       preferred_element_type=jnp.float32)     # (Bt, N, N) f32
        if key_bias is not None:
            s = s + key_bias
        s = s - jnp.max(s, axis=-1, keepdims=True)
        p = jnp.exp(s)
        p = p * pl.reciprocal(jnp.sum(p, axis=-1, keepdims=True), approx=True)

        head_outs.append(
            jnp.einsum('bqk,bkd->bqd', p.astype(jnp.bfloat16), v_h,
                       preferred_element_type=jnp.float32)     # (Bt, N, hd) f32
            .astype(jnp.bfloat16))

    # Single fused output projection: the head concat is cheap lane plumbing
    # that overlaps with the MXU; one (M,D)x(D,D) dot replaces three K=64 dots.
    attn_cat = jnp.concatenate(head_outs, axis=-1).reshape(M, D)
    attn = jnp.dot(attn_cat, wo_ref[...],
                   preferred_element_type=jnp.float32) + bo_ref[...]

    x = x + attn                                               # residual 1

    # -------- pre-norm + MLP (Linear -> GELU -> Linear) --------
    xn2 = layernorm(x, ln2w_ref[...], ln2b_ref[...])
    h1 = jnp.dot(xn2.astype(jnp.bfloat16), w1_ref[...],
                 preferred_element_type=jnp.float32) + b1_ref[...]      # (M, Hmlp)
    # tanh-approximate GELU: transcendental goes to the EUP slot instead of a
    # long erf polynomial on the VALU (the previously saturating unit).
    c0 = 0.7978845608028654                                    # sqrt(2/pi)
    g = 0.5 * h1 * (1.0 + jnp.tanh(c0 * (h1 + 0.044715 * h1 * h1 * h1)))
    h2 = jnp.dot(g.astype(jnp.bfloat16), w2_ref[...],
                 preferred_element_type=jnp.float32) + b2_ref[...]      # (M, D)

    o_ref[...] = (x + h2).reshape(Bt, N, D).astype(o_ref.dtype)


# ----------------------------------------------------------------------------
# Parameters
# ----------------------------------------------------------------------------
def init_params(key, embed_dim=EMBED_DIM, mlp_ratio=MLP_RATIO):
    """Deterministic parameter init, PyTorch-style shapes (out_features, in_features)."""
    hidden = int(embed_dim * mlp_ratio)
    ks = jax.random.split(key, 6)
    std = 0.02
    return {
        "ln1_w": jnp.ones((embed_dim,), jnp.float32),
        "ln1_b": jnp.zeros((embed_dim,), jnp.float32),
        # nn.MultiheadAttention in_proj_weight: (3D, D), in_proj_bias: (3D,)
        "in_proj_w": std * jax.random.normal(ks[0], (3 * embed_dim, embed_dim), jnp.float32),
        "in_proj_b": std * jax.random.normal(ks[1], (3 * embed_dim,), jnp.float32),
        "out_proj_w": std * jax.random.normal(ks[2], (embed_dim, embed_dim), jnp.float32),
        "out_proj_b": jnp.zeros((embed_dim,), jnp.float32),
        "ln2_w": jnp.ones((embed_dim,), jnp.float32),
        "ln2_b": jnp.zeros((embed_dim,), jnp.float32),
        "fc1_w": std * jax.random.normal(ks[3], (hidden, embed_dim), jnp.float32),
        "fc1_b": std * jax.random.normal(ks[4], (hidden,), jnp.float32),
        "fc2_w": std * jax.random.normal(ks[5], (embed_dim, hidden), jnp.float32),
        "fc2_b": jnp.zeros((embed_dim,), jnp.float32),
    }


def prepare_params(params, num_heads=NUM_HEADS):
    """One-time PyTorch-layout -> kernel-layout prep (hoisted out of the call
    path): transpose, fuse QKV with 128-lane-aligned (padded) q/k/v groups,
    fold the softmax scale into q, and pre-cast matmul weights to bf16."""
    D = params["ln1_w"].shape[0]
    hd = D // num_heads
    H = params["fc1_w"].shape[0]
    scale = 1.0 / math.sqrt(hd)
    Dp = ((D + 127) // 128) * 128            # aligned group width (192 -> 256)

    def pad_cols(w):                         # (D, D) -> (D, Dp), zero padding
        return jnp.pad(w, ((0, 0), (0, Dp - D)))

    def pad_vec(b):                          # (D,) -> (Dp,)
        return jnp.pad(b, (0, Dp - D))

    wq = params["in_proj_w"][0 * D:1 * D, :].T * scale          # scale folded into q
    wk = params["in_proj_w"][1 * D:2 * D, :].T
    wv = params["in_proj_w"][2 * D:3 * D, :].T
    bq = params["in_proj_b"][0 * D:1 * D] * scale
    bk = params["in_proj_b"][1 * D:2 * D]
    bv = params["in_proj_b"][2 * D:3 * D]

    wqkv = jnp.concatenate([pad_cols(wq), pad_cols(wk), pad_cols(wv)], axis=1)  # (D, 3*Dp)
    bqkv = jnp.concatenate([pad_vec(bq), pad_vec(bk), pad_vec(bv)]).reshape(1, 3 * Dp)

    return {
        "ln1_w": params["ln1_w"].reshape(1, D).astype(jnp.float32),
        "ln1_b": params["ln1_b"].reshape(1, D).astype(jnp.float32),
        "wqkv": wqkv.astype(jnp.bfloat16),                                   # (D, 3*Dp)
        "bqkv": bqkv.astype(jnp.float32),
        "wo": params["out_proj_w"].T.astype(jnp.bfloat16),                   # (D, D)
        "bo": params["out_proj_b"].reshape(1, D).astype(jnp.float32),
        "ln2_w": params["ln2_w"].reshape(1, D).astype(jnp.float32),
        "ln2_b": params["ln2_b"].reshape(1, D).astype(jnp.float32),
        "w1": params["fc1_w"].T.astype(jnp.bfloat16),                        # (D, H)
        "b1": params["fc1_b"].reshape(1, H).astype(jnp.float32),
        "w2": params["fc2_w"].T.astype(jnp.bfloat16),                        # (H, D)
        "b2": params["fc2_b"].reshape(1, D).astype(jnp.float32),
    }


# ----------------------------------------------------------------------------
# Tiling / wrapper
# ----------------------------------------------------------------------------
def _device_tuning():
    """(per-tile VMEM budget, scoped vmem limit, min grid steps) by TPU generation."""
    try:
        kind = jax.devices()[0].device_kind.lower()
    except Exception:
        kind = ""
    if "v7" in kind:
        # v7x: 64 MiB VMEM per TensorCore, 2 TCs -> smaller tiles, >=2 grid steps.
        return 40 * (1 << 20), 60 * (1 << 20), 2
    # v5e / v6e: 128 MiB VMEM, 1 TensorCore -> take much larger tiles.
    return 80 * (1 << 20), 100 * (1 << 20), 1


def _tile_footprint_bytes(bt, N, D, dp3, hidden):
    """Rough per-tile VMEM estimate (double-buffered I/O + f32 intermediates)."""
    m = bt * N
    io = 2 * 2 * m * D * 4                        # in+out blocks, double buffered
    dense = m * (5 * D + dp3 + 2 * hidden) * 4    # x, xn, attn, qkv, h1, g, ...
    scores = 3 * bt * N * N * 4                   # per-head scores/probs (+slack)
    weights = 2 * (1 << 20)
    return io + dense + scores + weights


def _pick_batch_tile(B, N, D, dp3, hidden, vmem_budget,
                     target_rows=2048, min_grid_steps=1):
    """Largest useful batch tile: fill the MXU (Bt*N >= target_rows when
    possible) while keeping the estimated per-tile VMEM under budget; keep
    >= min_grid_steps grid steps (only meaningful on 2-TensorCore chips)."""
    divisors = [d for d in range(1, B + 1) if B % d == 0]
    fits = [d for d in divisors
            if _tile_footprint_bytes(d, N, D, dp3, hidden) <= vmem_budget] or [1]
    multi = [d for d in fits if B // d >= min_grid_steps] or fits
    reach = [d for d in multi if d * N >= target_rows]
    return min(reach) if reach else max(multi)


def transformer_encoder(x, prepared, num_heads=NUM_HEADS, batch_tile=None):
    """x: (B, N, D) float; prepared = prepare_params(...). Returns (B, N, D)."""
    B, N, D = x.shape
    n_valid = N
    N_pad = -(-N // 8) * 8                       # keep reshapes (8,128)-friendly
    if N_pad != N:
        x = jnp.pad(x, ((0, 0), (0, N_pad - N), (0, 0)))

    hidden = prepared["w1"].shape[1]
    dp3 = prepared["wqkv"].shape[1]

    vmem_budget, vmem_limit, min_steps = _device_tuning()
    Bt = batch_tile if batch_tile is not None else _pick_batch_tile(
        B, N_pad, D, dp3, hidden, vmem_budget, min_grid_steps=min_steps)
    assert B % Bt == 0, "batch_tile must divide the batch"

    param_arrays = [prepared[k] for k in _PARAM_ORDER]

    def rep_spec(a):
        nd = a.ndim
        return pl.BlockSpec(a.shape, lambda g, _n=nd: (0,) * _n)

    kernel = functools.partial(_encoder_kernel, num_heads, n_valid)

    hd = D // num_heads
    flops = int(2 * B * N_pad * D * dp3                      # fused QKV
                + 4 * B * num_heads * N_pad * N_pad * hd     # scores + AV
                + 2 * B * N_pad * D * D                      # out projection
                + 4 * B * N_pad * D * hidden)                # MLP
    transcendentals = int(B * N_pad * (hidden + num_heads * N_pad))
    bytes_accessed = int(2 * x.size * x.dtype.itemsize
                         + sum(a.size * a.dtype.itemsize for a in param_arrays))

    out = pl.pallas_call(
        kernel,
        out_shape=jax.ShapeDtypeStruct((B, N_pad, D), x.dtype),
        grid_spec=pltpu.PrefetchScalarGridSpec(
            num_scalar_prefetch=0,
            grid=(B // Bt,),
            in_specs=[pl.BlockSpec((Bt, N_pad, D), lambda g: (g, 0, 0))]
                     + [rep_spec(a) for a in param_arrays],
            out_specs=pl.BlockSpec((Bt, N_pad, D), lambda g: (g, 0, 0)),
        ),
        compiler_params=pltpu.CompilerParams(
            dimension_semantics=("parallel",),
            vmem_limit_bytes=vmem_limit),
        cost_estimate=pl.CostEstimate(flops=flops,
                                      transcendentals=transcendentals,
                                      bytes_accessed=bytes_accessed),
    )(x, *param_arrays)

    return out[:, :n_valid, :] if N_pad != n_valid else out


# ----------------------------------------------------------------------------
# Plain-JAX reference (matches the PyTorch module, eval mode, exact GELU)
# ----------------------------------------------------------------------------
def _reference_forward(x, params, num_heads):
    B, N, D = x.shape
    hd = D // num_heads

    def ln(v, w, b):
        mu = jnp.mean(v, axis=-1, keepdims=True)
        var = jnp.mean((v - mu) ** 2, axis=-1, keepdims=True)
        return (v - mu) / jnp.sqrt(var + LN_EPS) * w + b

    xn = ln(x, params["ln1_w"], params["ln1_b"])
    qkv = xn @ params["in_proj_w"].T + params["in_proj_b"]
    q, k, v = jnp.split(qkv, 3, axis=-1)
    q = q.reshape(B, N, num_heads, hd).transpose(0, 2, 1, 3) / math.sqrt(hd)
    k = k.reshape(B, N, num_heads, hd).transpose(0, 2, 1, 3)
    v = v.reshape(B, N, num_heads, hd).transpose(0, 2, 1, 3)
    p = jax.nn.softmax(q @ jnp.swapaxes(k, -1, -2), axis=-1)
    o = (p @ v).transpose(0, 2, 1, 3).reshape(B, N, D)
    o = o @ params["out_proj_w"].T + params["out_proj_b"]
    x = x + o
    xn2 = ln(x, params["ln2_w"], params["ln2_b"])
    h1 = xn2 @ params["fc1_w"].T + params["fc1_b"]
    g = 0.5 * h1 * (1.0 + jax.lax.erf(h1 / math.sqrt(2.0)))
    return x + (g @ params["fc2_w"].T + params["fc2_b"])


if __name__ == "__main__":
    key = jax.random.PRNGKey(0)
    k_x, k_p, k_x2 = jax.random.split(key, 3)

    B, N, D = 8, 8, EMBED_DIM          # small test shapes; D from module default
    x = jax.random.normal(k_x, (B, N, D), jnp.float32)
    params = init_params(k_p, embed_dim=D, mlp_ratio=MLP_RATIO)
    prepped = prepare_params(params, num_heads=NUM_HEADS)   # one-time weight prep

    out = transformer_encoder(x, prepped, num_heads=NUM_HEADS)
    jax.block_until_ready(out)
    assert out.shape == (B, N, D)

    # Sanity check vs a plain-JAX reference (bf16 MXU + tanh GELU -> loose tol).
    ref = _reference_forward(x, params, NUM_HEADS)
    err = float(jnp.max(jnp.abs(out - ref)))
    assert err < 5e-2, f"max abs error {err}"

    # Awkward sequence length: exercises wrapper-side pad-to-multiple-of-8 plus
    # in-kernel key masking (keeps the (Bt,N,D)<->(M,D) reshapes tile-aligned).
    B2, N2 = 4, 12
    x2 = jax.random.normal(k_x2, (B2, N2, D), jnp.float32)
    out2 = transformer_encoder(x2, prepped, num_heads=NUM_HEADS)
    jax.block_until_ready(out2)
    ref2 = _reference_forward(x2, params, NUM_HEADS)
    err2 = float(jnp.max(jnp.abs(out2 - ref2)))
    assert err2 < 5e-2, f"max abs error (padded N) {err2}"

    print("KERNEL_OK")
</pallas_src>

<mosaic_0001>
module attributes {stable_mosaic.version = 11 : i64} {
  func.func @_encoder_kernel(%arg0: i32, %arg1: memref<8x8x192xf32, #tpu.memory_space<vmem>>, %arg2: memref<1x192xf32, #tpu.memory_space<vmem>>, %arg3: memref<1x192xf32, #tpu.memory_space<vmem>>, %arg4: memref<192x768xbf16, #tpu.memory_space<vmem>>, %arg5: memref<1x768xf32, #tpu.memory_space<vmem>>, %arg6: memref<192x192xbf16, #tpu.memory_space<vmem>>, %arg7: memref<1x192xf32, #tpu.memory_space<vmem>>, %arg8: memref<1x192xf32, #tpu.memory_space<vmem>>, %arg9: memref<1x192xf32, #tpu.memory_space<vmem>>, %arg10: memref<192x768xbf16, #tpu.memory_space<vmem>>, %arg11: memref<1x768xf32, #tpu.memory_space<vmem>>, %arg12: memref<768x192xbf16, #tpu.memory_space<vmem>>, %arg13: memref<1x192xf32, #tpu.memory_space<vmem>>, %arg14: memref<8x8x192xf32, #tpu.memory_space<vmem>>) attributes {dimension_semantics = [#tpu.dimension_semantics<parallel>], iteration_bounds = array<i64: 1>, scalar_prefetch = 0 : i64, scratch_operands = 0 : i64, tpu.core_type = #tpu.core_type<tc>, window_params = [{transform_indices = @transform_0, window_bounds = array<i64: 8, 8, 192>}, {pipeline_mode = #tpu.pipeline_mode<synchronous>, transform_indices = @transform_1, window_bounds = array<i64: 1, 192>}, {pipeline_mode = #tpu.pipeline_mode<synchronous>, transform_indices = @transform_2, window_bounds = array<i64: 1, 192>}, {pipeline_mode = #tpu.pipeline_mode<synchronous>, transform_indices = @transform_3, window_bounds = array<i64: 192, 768>}, {pipeline_mode = #tpu.pipeline_mode<synchronous>, transform_indices = @transform_4, window_bounds = array<i64: 1, 768>}, {pipeline_mode = #tpu.pipeline_mode<synchronous>, transform_indices = @transform_5, window_bounds = array<i64: 192, 192>}, {pipeline_mode = #tpu.pipeline_mode<synchronous>, transform_indices = @transform_6, window_bounds = array<i64: 1, 192>}, {pipeline_mode = #tpu.pipeline_mode<synchronous>, transform_indices = @transform_7, window_bounds = array<i64: 1, 192>}, {pipeline_mode = #tpu.pipeline_mode<synchronous>, transform_indices = @transform_8, window_bounds = array<i64: 1, 192>}, {pipeline_mode = #tpu.pipeline_mode<synchronous>, transform_indices = @transform_9, window_bounds = array<i64: 192, 768>}, {pipeline_mode = #tpu.pipeline_mode<synchronous>, transform_indices = @transform_10, window_bounds = array<i64: 1, 768>}, {pipeline_mode = #tpu.pipeline_mode<synchronous>, transform_indices = @transform_11, window_bounds = array<i64: 768, 192>}, {pipeline_mode = #tpu.pipeline_mode<synchronous>, transform_indices = @transform_12, window_bounds = array<i64: 1, 192>}, {transform_indices = @transform_13, window_bounds = array<i64: 8, 8, 192>}]} {
    %c0 = arith.constant 0 : index
    %c0_0 = arith.constant 0 : index
    %c0_1 = arith.constant 0 : index
    %0 = vector.load %arg1[%c0, %c0_0, %c0_1] : memref<8x8x192xf32, #tpu.memory_space<vmem>>, vector<8x8x192xf32>
    %1 = vector.shape_cast %0 : vector<8x8x192xf32> to vector<64x192xf32>
    %c0_2 = arith.constant 0 : index
    %c0_3 = arith.constant 0 : index
    %2 = vector.load %arg2[%c0_2, %c0_3] : memref<1x192xf32, #tpu.memory_space<vmem>>, vector<1x192xf32>
    %c0_4 = arith.constant 0 : index
    %c0_5 = arith.constant 0 : index
    %3 = vector.load %arg3[%c0_4, %c0_5] : memref<1x192xf32, #tpu.memory_space<vmem>>, vector<1x192xf32>
    %cst = arith.constant dense<0.000000e+00> : vector<64xf32>
    %4 = vector.multi_reduction <add>, %1, %cst [1] : vector<64x192xf32> to vector<64xf32>
    %5 = vector.shape_cast %4 : vector<64xf32> to vector<64x1xf32>
    %cst_6 = arith.constant 1.920000e+02 : f32
    %6 = vector.broadcast %cst_6 : f32 to vector<64x1xf32>
    %7 = arith.divf %5, %6 : vector<64x1xf32>
    %8 = vector.broadcast %7 : vector<64x1xf32> to vector<64x192xf32>
    %9 = arith.subf %1, %8 : vector<64x192xf32>
    %10 = arith.mulf %9, %9 : vector<64x192xf32>
    %cst_7 = arith.constant dense<0.000000e+00> : vector<64xf32>
    %11 = vector.multi_reduction <add>, %10, %cst_7 [1] : vector<64x192xf32> to vector<64xf32>
    %12 = vector.shape_cast %11 : vector<64xf32> to vector<64x1xf32>
    %cst_8 = arith.constant 1.920000e+02 : f32
    %13 = vector.broadcast %cst_8 : f32 to vector<64x1xf32>
    %14 = arith.divf %12, %13 : vector<64x1xf32>
    %cst_9 = arith.constant 9.99999974E-6 : f32
    %15 = vector.broadcast %cst_9 : f32 to vector<64x1xf32>
    %16 = arith.addf %14, %15 : vector<64x1xf32>
    %17 = math.rsqrt %16 : vector<64x1xf32>
    %18 = vector.broadcast %17 : vector<64x1xf32> to vector<64x192xf32>
    %19 = arith.mulf %9, %18 : vector<64x192xf32>
    %20 = vector.broadcast %2 : vector<1x192xf32> to vector<64x192xf32>
    %21 = arith.mulf %19, %20 : vector<64x192xf32>
    %22 = vector.broadcast %3 : vector<1x192xf32> to vector<64x192xf32>
    %23 = arith.addf %21, %22 : vector<64x192xf32>
    %24 = arith.truncf %23 : vector<64x192xf32> to vector<64x192xbf16>
    %c0_10 = arith.constant 0 : index
    %c0_11 = arith.constant 0 : index
    %25 = vector.load %arg4[%c0_10, %c0_11] : memref<192x768xbf16, #tpu.memory_space<vmem>>, vector<192x768xbf16>
    %cst_12 = arith.constant dense<0.000000e+00> : vector<64x768xf32>
    %26 = tpu.matmul %24, %25, %cst_12 {dimension_numbers = #tpu.dot_dimension_numbers<[1], [0], [0], [1], [0, 0, 1, 1], [], []>} : vector<64x192xbf16>, vector<192x768xbf16>, vector<64x768xf32> -> vector<64x768xf32>
    %c0_13 = arith.constant 0 : index
    %c0_14 = arith.constant 0 : index
    %27 = vector.load %arg5[%c0_13, %c0_14] : memref<1x768xf32, #tpu.memory_space<vmem>>, vector<1x768xf32>
    %28 = vector.broadcast %27 : vector<1x768xf32> to vector<64x768xf32>
    %29 = arith.addf %26, %28 : vector<64x768xf32>
    %30 = vector.extract_strided_slice %29 {offsets = [0, 0], sizes = [64, 192], strides = [1, 1]} : vector<64x768xf32> to vector<64x192xf32>
    %31 = vector.shape_cast %30 : vector<64x192xf32> to vector<8x8x192xf32>
    %32 = vector.extract_strided_slice %29 {offsets = [0, 256], sizes = [64, 192], strides = [1, 1]} : vector<64x768xf32> to vector<64x192xf32>
    %33 = vector.shape_cast %32 : vector<64x192xf32> to vector<8x8x192xf32>
    %34 = vector.extract_strided_slice %29 {offsets = [0, 512], sizes = [64, 192], strides = [1, 1]} : vector<64x768xf32> to vector<64x192xf32>
    %35 = vector.shape_cast %34 : vector<64x192xf32> to vector<8x8x192xf32>
    %36 = vector.extract_strided_slice %31 {offsets = [0, 0, 0], sizes = [8, 8, 64], strides = [1, 1, 1]} : vector<8x8x192xf32> to vector<8x8x64xf32>
    %37 = arith.truncf %36 : vector<8x8x64xf32> to vector<8x8x64xbf16>
    %38 = vector.extract_strided_slice %33 {offsets = [0, 0, 0], sizes = [8, 8, 64], strides = [1, 1, 1]} : vector<8x8x192xf32> to vector<8x8x64xf32>
    %39 = arith.truncf %38 : vector<8x8x64xf32> to vector<8x8x64xbf16>
    %40 = vector.extract_strided_slice %35 {offsets = [0, 0, 0], sizes = [8, 8, 64], strides = [1, 1, 1]} : vector<8x8x192xf32> to vector<8x8x64xf32>
    %41 = arith.truncf %40 : vector<8x8x64xf32> to vector<8x8x64xbf16>
    "tpu.trace_start"() <{level = 10 : i32, message = "bqd,bkd->bqk"}> : () -> ()
    %cst_15 = arith.constant dense<0.000000e+00> : vector<8x8x8xf32>
    %42 = tpu.matmul %37, %39, %cst_15 {dimension_numbers = #tpu.dot_dimension_numbers<[2], [2], [1], [1], [0, 0, 0, 1, 1, 1], [0], [0]>} : vector<8x8x64xbf16>, vector<8x8x64xbf16>, vector<8x8x8xf32> -> vector<8x8x8xf32>
    "tpu.trace_stop"() : () -> ()
    %cst_16 = arith.constant dense<0xFF800000> : vector<8x8xf32>
    %43 = vector.multi_reduction <maximumf>, %42, %cst_16 [2] : vector<8x8x8xf32> to vector<8x8xf32>
    %44 = vector.shape_cast %43 : vector<8x8xf32> to vector<8x8x1xf32>
    %45 = vector.broadcast %44 : vector<8x8x1xf32> to vector<8x8x8xf32>
    %46 = arith.subf %42, %45 : vector<8x8x8xf32>
    %47 = math.exp %46 : vector<8x8x8xf32>
    %cst_17 = arith.constant dense<0.000000e+00> : vector<8x8xf32>
    %48 = vector.multi_reduction <add>, %47, %cst_17 [2] : vector<8x8x8xf32> to vector<8x8xf32>
    %49 = vector.shape_cast %48 : vector<8x8xf32> to vector<8x8x1xf32>
    %50 = tpu.reciprocal %49 {approx = true} : vector<8x8x1xf32> -> vector<8x8x1xf32>
    %51 = vector.broadcast %50 : vector<8x8x1xf32> to vector<8x8x8xf32>
    %52 = arith.mulf %47, %51 : vector<8x8x8xf32>
    %53 = arith.truncf %52 : vector<8x8x8xf32> to vector<8x8x8xbf16>
    "tpu.trace_start"() <{level = 10 : i32, message = "bqk,bkd->bqd"}> : () -> ()
    %cst_18 = arith.constant dense<0.000000e+00> : vector<8x8x64xf32>
    %54 = tpu.matmul %53, %41, %cst_18 {dimension_numbers = #tpu.dot_dimension_numbers<[2], [1], [1], [2], [0, 0, 0, 1, 1, 2], [0], [0]>} : vector<8x8x8xbf16>, vector<8x8x64xbf16>, vector<8x8x64xf32> -> vector<8x8x64xf32>
    "tpu.trace_stop"() : () -> ()
    %55 = arith.truncf %54 : vector<8x8x64xf32> to vector<8x8x64xbf16>
    %56 = vector.extract_strided_slice %31 {offsets = [0, 0, 64], sizes = [8, 8, 64], strides = [1, 1, 1]} : vector<8x8x192xf32> to vector<8x8x64xf32>
    %57 = arith.truncf %56 : vector<8x8x64xf32> to vector<8x8x64xbf16>
    %58 = vector.extract_strided_slice %33 {offsets = [0, 0, 64], sizes = [8, 8, 64], strides = [1, 1, 1]} : vector<8x8x192xf32> to vector<8x8x64xf32>
    %59 = arith.truncf %58 : vector<8x8x64xf32> to vector<8x8x64xbf16>
    %60 = vector.extract_strided_slice %35 {offsets = [0, 0, 64], sizes = [8, 8, 64], strides = [1, 1, 1]} : vector<8x8x192xf32> to vector<8x8x64xf32>
    %61 = arith.truncf %60 : vector<8x8x64xf32> to vector<8x8x64xbf16>
    "tpu.trace_start"() <{level = 10 : i32, message = "bqd,bkd->bqk"}> : () -> ()
    %cst_19 = arith.constant dense<0.000000e+00> : vector<8x8x8xf32>
    %62 = tpu.matmul %57, %59, %cst_19 {dimension_numbers = #tpu.dot_dimension_numbers<[2], [2], [1], [1], [0, 0, 0, 1, 1, 1], [0], [0]>} : vector<8x8x64xbf16>, vector<8x8x64xbf16>, vector<8x8x8xf32> -> vector<8x8x8xf32>
    "tpu.trace_stop"() : () -> ()
    %cst_20 = arith.constant dense<0xFF800000> : vector<8x8xf32>
    %63 = vector.multi_reduction <maximumf>, %62, %cst_20 [2] : vector<8x8x8xf32> to vector<8x8xf32>
    %64 = vector.shape_cast %63 : vector<8x8xf32> to vector<8x8x1xf32>
    %65 = vector.broadcast %64 : vector<8x8x1xf32> to vector<8x8x8xf32>
    %66 = arith.subf %62, %65 : vector<8x8x8xf32>
    %67 = math.exp %66 : vector<8x8x8xf32>
    %cst_21 = arith.constant dense<0.000000e+00> : vector<8x8xf32>
    %68 = vector.multi_reduction <add>, %67, %cst_21 [2] : vector<8x8x8xf32> to vector<8x8xf32>
    %69 = vector.shape_cast %68 : vector<8x8xf32> to vector<8x8x1xf32>
    %70 = tpu.reciprocal %69 {approx = true} : vector<8x8x1xf32> -> vector<8x8x1xf32>
    %71 = vector.broadcast %70 : vector<8x8x1xf32> to vector<8x8x8xf32>
    %72 = arith.mulf %67, %71 : vector<8x8x8xf32>
    %73 = arith.truncf %72 : vector<8x8x8xf32> to vector<8x8x8xbf16>
    "tpu.trace_start"() <{level = 10 : i32, message = "bqk,bkd->bqd"}> : () -> ()
    %cst_22 = arith.constant dense<0.000000e+00> : vector<8x8x64xf32>
    %74 = tpu.matmul %73, %61, %cst_22 {dimension_numbers = #tpu.dot_dimension_numbers<[2], [1], [1], [2], [0, 0, 0, 1, 1, 2], [0], [0]>} : vector<8x8x8xbf16>, vector<8x8x64xbf16>, vector<8x8x64xf32> -> vector<8x8x64xf32>
    "tpu.trace_stop"() : () -> ()
    %75 = arith.truncf %74 : vector<8x8x64xf32> to vector<8x8x64xbf16>
    %76 = vector.extract_strided_slice %31 {offsets = [0, 0, 128], sizes = [8, 8, 64], strides = [1, 1, 1]} : vector<8x8x192xf32> to vector<8x8x64xf32>
    %77 = arith.truncf %76 : vector<8x8x64xf32> to vector<8x8x64xbf16>
    %78 = vector.extract_strided_slice %33 {offsets = [0, 0, 128], sizes = [8, 8, 64], strides = [1, 1, 1]} : vector<8x8x192xf32> to vector<8x8x64xf32>
    %79 = arith.truncf %78 : vector<8x8x64xf32> to vector<8x8x64xbf16>
    %80 = vector.extract_strided_slice %35 {offsets = [0, 0, 128], sizes = [8, 8, 64], strides = [1, 1, 1]} : vector<8x8x192xf32> to vector<8x8x64xf32>
    %81 = arith.truncf %80 : vector<8x8x64xf32> to vector<8x8x64xbf16>
    "tpu.trace_start"() <{level = 10 : i32, message = "bqd,bkd->bqk"}> : () -> ()
    %cst_23 = arith.constant dense<0.000000e+00> : vector<8x8x8xf32>
    %82 = tpu.matmul %77, %79, %cst_23 {dimension_numbers = #tpu.dot_dimension_numbers<[2], [2], [1], [1], [0, 0, 0, 1, 1, 1], [0], [0]>} : vector<8x8x64xbf16>, vector<8x8x64xbf16>, vector<8x8x8xf32> -> vector<8x8x8xf32>
    "tpu.trace_stop"() : () -> ()
    %cst_24 = arith.constant dense<0xFF800000> : vector<8x8xf32>
    %83 = vector.multi_reduction <maximumf>, %82, %cst_24 [2] : vector<8x8x8xf32> to vector<8x8xf32>
    %84 = vector.shape_cast %83 : vector<8x8xf32> to vector<8x8x1xf32>
    %85 = vector.broadcast %84 : vector<8x8x1xf32> to vector<8x8x8xf32>
    %86 = arith.subf %82, %85 : vector<8x8x8xf32>
    %87 = math.exp %86 : vector<8x8x8xf32>
    %cst_25 = arith.constant dense<0.000000e+00> : vector<8x8xf32>
    %88 = vector.multi_reduction <add>, %87, %cst_25 [2] : vector<8x8x8xf32> to vector<8x8xf32>
    %89 = vector.shape_cast %88 : vector<8x8xf32> to vector<8x8x1xf32>
    %90 = tpu.reciprocal %89 {approx = true} : vector<8x8x1xf32> -> vector<8x8x1xf32>
    %91 = vector.broadcast %90 : vector<8x8x1xf32> to vector<8x8x8xf32>
    %92 = arith.mulf %87, %91 : vector<8x8x8xf32>
    %93 = arith.truncf %92 : vector<8x8x8xf32> to vector<8x8x8xbf16>
    "tpu.trace_start"() <{level = 10 : i32, message = "bqk,bkd->bqd"}> : () -> ()
    %cst_26 = arith.constant dense<0.000000e+00> : vector<8x8x64xf32>
    %94 = tpu.matmul %93, %81, %cst_26 {dimension_numbers = #tpu.dot_dimension_numbers<[2], [1], [1], [2], [0, 0, 0, 1, 1, 2], [0], [0]>} : vector<8x8x8xbf16>, vector<8x8x64xbf16>, vector<8x8x64xf32> -> vector<8x8x64xf32>
    "tpu.trace_stop"() : () -> ()
    %95 = arith.truncf %94 : vector<8x8x64xf32> to vector<8x8x64xbf16>
    %96 = tpu.concatenate %55, %75, %95 in 2 : vector<8x8x64xbf16>, vector<8x8x64xbf16>, vector<8x8x64xbf16> -> vector<8x8x192xbf16>
    %97 = vector.shape_cast %96 : vector<8x8x192xbf16> to vector<64x192xbf16>
    %c0_27 = arith.constant 0 : index
    %c0_28 = arith.constant 0 : index
    %98 = vector.load %arg6[%c0_27, %c0_28] : memref<192x192xbf16, #tpu.memory_space<vmem>>, vector<192x192xbf16>
    %cst_29 = arith.constant dense<0.000000e+00> : vector<64x192xf32>
    %99 = tpu.matmul %97, %98, %cst_29 {dimension_numbers = #tpu.dot_dimension_numbers<[1], [0], [0], [1], [0, 0, 1, 1], [], []>} : vector<64x192xbf16>, vector<192x192xbf16>, vector<64x192xf32> -> vector<64x192xf32>
    %c0_30 = arith.constant 0 : index
    %c0_31 = arith.constant 0 : index
    %100 = vector.load %arg7[%c0_30, %c0_31] : memref<1x192xf32, #tpu.memory_space<vmem>>, vector<1x192xf32>
    %101 = vector.broadcast %100 : vector<1x192xf32> to vector<64x192xf32>
    %102 = arith.addf %99, %101 : vector<64x192xf32>
    %103 = arith.addf %1, %102 : vector<64x192xf32>
    %c0_32 = arith.constant 0 : index
    %c0_33 = arith.constant 0 : index
    %104 = vector.load %arg8[%c0_32, %c0_33] : memref<1x192xf32, #tpu.memory_space<vmem>>, vector<1x192xf32>
    %c0_34 = arith.constant 0 : index
    %c0_35 = arith.constant 0 : index
    %105 = vector.load %arg9[%c0_34, %c0_35] : memref<1x192xf32, #tpu.memory_space<vmem>>, vector<1x192xf32>
    %cst_36 = arith.constant dense<0.000000e+00> : vector<64xf32>
    %106 = vector.multi_reduction <add>, %103, %cst_36 [1] : vector<64x192xf32> to vector<64xf32>
    %107 = vector.shape_cast %106 : vector<64xf32> to vector<64x1xf32>
    %cst_37 = arith.constant 1.920000e+02 : f32
    %108 = vector.broadcast %cst_37 : f32 to vector<64x1xf32>
    %109 = arith.divf %107, %108 : vector<64x1xf32>
    %110 = vector.broadcast %109 : vector<64x1xf32> to vector<64x192xf32>
    %111 = arith.subf %103, %110 : vector<64x192xf32>
    %112 = arith.mulf %111, %111 : vector<64x192xf32>
    %cst_38 = arith.constant dense<0.000000e+00> : vector<64xf32>
    %113 = vector.multi_reduction <add>, %112, %cst_38 [1] : vector<64x192xf32> to vector<64xf32>
    %114 = vector.shape_cast %113 : vector<64xf32> to vector<64x1xf32>
    %cst_39 = arith.constant 1.920000e+02 : f32
    %115 = vector.broadcast %cst_39 : f32 to vector<64x1xf32>
    %116 = arith.divf %114, %115 : vector<64x1xf32>
    %cst_40 = arith.constant 9.99999974E-6 : f32
    %117 = vector.broadcast %cst_40 : f32 to vector<64x1xf32>
    %118 = arith.addf %116, %117 : vector<64x1xf32>
    %119 = math.rsqrt %118 : vector<64x1xf32>
    %120 = vector.broadcast %119 : vector<64x1xf32> to vector<64x192xf32>
    %121 = arith.mulf %111, %120 : vector<64x192xf32>
    %122 = vector.broadcast %104 : vector<1x192xf32> to vector<64x192xf32>
    %123 = arith.mulf %121, %122 : vector<64x192xf32>
    %124 = vector.broadcast %105 : vector<1x192xf32> to vector<64x192xf32>
    %125 = arith.addf %123, %124 : vector<64x192xf32>
    %126 = arith.truncf %125 : vector<64x192xf32> to vector<64x192xbf16>
    %c0_41 = arith.constant 0 : index
    %c0_42 = arith.constant 0 : index
    %127 = vector.load %arg10[%c0_41, %c0_42] : memref<192x768xbf16, #tpu.memory_space<vmem>>, vector<192x768xbf16>
    %cst_43 = arith.constant dense<0.000000e+00> : vector<64x768xf32>
    %128 = tpu.matmul %126, %127, %cst_43 {dimension_numbers = #tpu.dot_dimension_numbers<[1], [0], [0], [1], [0, 0, 1, 1], [], []>} : vector<64x192xbf16>, vector<192x768xbf16>, vector<64x768xf32> -> vector<64x768xf32>
    %c0_44 = arith.constant 0 : index
    %c0_45 = arith.constant 0 : index
    %129 = vector.load %arg11[%c0_44, %c0_45] : memref<1x768xf32, #tpu.memory_space<vmem>>, vector<1x768xf32>
    %130 = vector.broadcast %129 : vector<1x768xf32> to vector<64x768xf32>
    %131 = arith.addf %128, %130 : vector<64x768xf32>
    %cst_46 = arith.constant 5.000000e-01 : f32
    %132 = vector.broadcast %cst_46 : f32 to vector<64x768xf32>
    %133 = arith.mulf %132, %131 : vector<64x768xf32>
    %cst_47 = arith.constant 4.471500e-02 : f32
    %134 = vector.broadcast %cst_47 : f32 to vector<64x768xf32>
    %135 = arith.mulf %134, %131 : vector<64x768xf32>
    %136 = arith.mulf %135, %131 : vector<64x768xf32>
    %137 = arith.mulf %136, %131 : vector<64x768xf32>
    %138 = arith.addf %131, %137 : vector<64x768xf32>
    %cst_48 = arith.constant 0.797884583 : f32
    %139 = vector.broadcast %cst_48 : f32 to vector<64x768xf32>
    %140 = arith.mulf %139, %138 : vector<64x768xf32>
    %141 = math.tanh %140 : vector<64x768xf32>
    %cst_49 = arith.constant 1.000000e+00 : f32
    %142 = vector.broadcast %cst_49 : f32 to vector<64x768xf32>
    %143 = arith.addf %142, %141 : vector<64x768xf32>
    %144 = arith.mulf %133, %143 : vector<64x768xf32>
    %145 = arith.truncf %144 : vector<64x768xf32> to vector<64x768xbf16>
    %c0_50 = arith.constant 0 : index
    %c0_51 = arith.constant 0 : index
    %146 = vector.load %arg12[%c0_50, %c0_51] : memref<768x192xbf16, #tpu.memory_space<vmem>>, vector<768x192xbf16>
    %cst_52 = arith.constant dense<0.000000e+00> : vector<64x192xf32>
    %147 = tpu.matmul %145, %146, %cst_52 {dimension_numbers = #tpu.dot_dimension_numbers<[1], [0], [0], [1], [0, 0, 1, 1], [], []>} : vector<64x768xbf16>, vector<768x192xbf16>, vector<64x192xf32> -> vector<64x192xf32>
    %c0_53 = arith.constant 0 : index
    %c0_54 = arith.constant 0 : index
    %148 = vector.load %arg13[%c0_53, %c0_54] : memref<1x192xf32, #tpu.memory_space<vmem>>, vector<1x192xf32>
    %149 = vector.broadcast %148 : vector<1x192xf32> to vector<64x192xf32>
    %150 = arith.addf %147, %149 : vector<64x192xf32>
    %151 = arith.addf %103, %150 : vector<64x192xf32>
    %152 = vector.shape_cast %151 : vector<64x192xf32> to vector<8x8x192xf32>
    %c0_55 = arith.constant 0 : index
    %c0_56 = arith.constant 0 : index
    %c0_57 = arith.constant 0 : index
    %153 = vector.load %arg14[%c0_55, %c0_56, %c0_57] : memref<8x8x192xf32, #tpu.memory_space<vmem>>, vector<8x8x192xf32>
    tpu.vector_store %arg14[%c0_55, %c0_56, %c0_57], %152 {strides = array<i32>} : memref<8x8x192xf32, #tpu.memory_space<vmem>>, vector<8x8x192xf32>,
    return
  }
  func.func @transform_0(%arg0: i32) -> (i32, i32, i32) {
    %c0_i32 = arith.constant 0 : i32
    %c0_i32_0 = arith.constant 0 : i32
    %c0_i32_1 = arith.constant 0 : i32
    return %arg0, %c0_i32, %c0_i32_0 : i32, i32, i32
  }
  func.func @transform_1(%arg0: i32) -> (i32, i32) {
    %c0_i32 = arith.constant 0 : i32
    %c0_i32_0 = arith.constant 0 : i32
    %c0_i32_1 = arith.constant 0 : i32
    return %c0_i32, %c0_i32_0 : i32, i32
  }
  func.func @transform_2(%arg0: i32) -> (i32, i32) {
    %c0_i32 = arith.constant 0 : i32
    %c0_i32_0 = arith.constant 0 : i32
    %c0_i32_1 = arith.constant 0 : i32
    return %c0_i32, %c0_i32_0 : i32, i32
  }
  func.func @transform_3(%arg0: i32) -> (i32, i32) {
    %c0_i32 = arith.constant 0 : i32
    %c0_i32_0 = arith.constant 0 : i32
    %c0_i32_1 = arith.constant 0 : i32
    return %c0_i32, %c0_i32_0 : i32, i32
  }
  func.func @transform_4(%arg0: i32) -> (i32, i32) {
    %c0_i32 = arith.constant 0 : i32
    %c0_i32_0 = arith.constant 0 : i32
    %c0_i32_1 = arith.constant 0 : i32
    return %c0_i32, %c0_i32_0 : i32, i32
  }
  func.func @transform_5(%arg0: i32) -> (i32, i32) {
    %c0_i32 = arith.constant 0 : i32
    %c0_i32_0 = arith.constant 0 : i32
    %c0_i32_1 = arith.constant 0 : i32
    return %c0_i32, %c0_i32_0 : i32, i32
  }
  func.func @transform_6(%arg0: i32) -> (i32, i32) {
    %c0_i32 = arith.constant 0 : i32
    %c0_i32_0 = arith.constant 0 : i32
    %c0_i32_1 = arith.constant 0 : i32
    return %c0_i32, %c0_i32_0 : i32, i32
  }
  func.func @transform_7(%arg0: i32) -> (i32, i32) {
    %c0_i32 = arith.constant 0 : i32
    %c0_i32_0 = arith.constant 0 : i32
    %c0_i32_1 = arith.constant 0 : i32
    return %c0_i32, %c0_i32_0 : i32, i32
  }
  func.func @transform_8(%arg0: i32) -> (i32, i32) {
    %c0_i32 = arith.constant 0 : i32
    %c0_i32_0 = arith.constant 0 : i32
    %c0_i32_1 = arith.constant 0 : i32
    return %c0_i32, %c0_i32_0 : i32, i32
  }
  func.func @transform_9(%arg0: i32) -> (i32, i32) {
    %c0_i32 = arith.constant 0 : i32
    %c0_i32_0 = arith.constant 0 : i32
    %c0_i32_1 = arith.constant 0 : i32
    return %c0_i32, %c0_i32_0 : i32, i32
  }
  func.func @transform_10(%arg0: i32) -> (i32, i32) {
    %c0_i32 = arith.constant 0 : i32
    %c0_i32_0 = arith.constant 0 : i32
    %c0_i32_1 = arith.constant 0 : i32
    return %c0_i32, %c0_i32_0 : i32, i32
  }
  func.func @transform_11(%arg0: i32) -> (i32, i32) {
    %c0_i32 = arith.constant 0 : i32
    %c0_i32_0 = arith.constant 0 : i32
    %c0_i32_1 = arith.constant 0 : i32
    return %c0_i32, %c0_i32_0 : i32, i32
  }
  func.func @transform_12(%arg0: i32) -> (i32, i32) {
    %c0_i32 = arith.constant 0 : i32
    %c0_i32_0 = arith.constant 0 : i32
    %c0_i32_1 = arith.constant 0 : i32
    return %c0_i32, %c0_i32_0 : i32, i32
  }
  func.func @transform_13(%arg0: i32) -> (i32, i32, i32) {
    %c0_i32 = arith.constant 0 : i32
    %c0_i32_0 = arith.constant 0 : i32
    %c0_i32_1 = arith.constant 0 : i32
    return %arg0, %c0_i32, %c0_i32_0 : i32, i32, i32
  }
}

</mosaic_0001>

<llo_original>
// kernel: tpu_custom_call.1
$region0: #{tpu_custom_call.1}
  #allocation0 [shape = 'u32[]', space=smem, size = 0x4, offset = 0x4, fixed_abs, tag = 'smem constant byte address 0x4 - core index']
  #allocation1 [shape = 'u32[72,128]{1,0:T(1,128)}', space=vmem, size = 0x9000, scoped, tag = 'internal scratch']
  %s0 = inlined_call_operand.hbm [shape: f32[8,8,192], index: 0, kind: input, shape index: {}]
  %s1 = inlined_call_operand.hbm [shape: f32[1,192], index: 1, kind: input, shape index: {}]
  %s2 = inlined_call_operand.hbm [shape: f32[1,192], index: 2, kind: input, shape index: {}]
  %s3 = inlined_call_operand.vmem [shape: bf16[192,768], index: 3, kind: input, shape index: {}]
  %s4 = inlined_call_operand.hbm [shape: f32[1,768], index: 4, kind: input, shape index: {}]
  %s5 = inlined_call_operand.vmem [shape: bf16[192,192], index: 5, kind: input, shape index: {}]
  %s6 = inlined_call_operand.hbm [shape: f32[1,192], index: 6, kind: input, shape index: {}]
  %s7 = inlined_call_operand.hbm [shape: f32[1,192], index: 7, kind: input, shape index: {}]
  %s8 = inlined_call_operand.hbm [shape: f32[1,192], index: 8, kind: input, shape index: {}]
  %s9 = inlined_call_operand.vmem [shape: bf16[192,768], index: 9, kind: input, shape index: {}]
  %s10 = inlined_call_operand.hbm [shape: f32[1,768], index: 10, kind: input, shape index: {}]
  %s11 = inlined_call_operand.vmem [shape: bf16[768,192], index: 11, kind: input, shape index: {}]
  %s12 = inlined_call_operand.hbm [shape: f32[1,192], index: 12, kind: input, shape index: {}]
  %s13 = inlined_call_operand.hbm [shape: f32[8,8,192], index: 13, kind: output, shape index: {}]
  %s14 = sld [smem:[#allocation0]]
  $region98: #{tpu_custom_call.1} parent=0
    _
  %s16 = ssub.s32 1, %s14
  %s17 = scalar_select 0, %s16, %s14
  $region1: #{tpu_custom_call.1} parent=0
    #allocation2 [shape = 'u8[65536]{0}', space=vmem, size = 0x10000, scoped, tag = 'input window, operand 0, single buffered']
    #allocation3 [shape = 's32[1]{0}', space=sflag, size = 0x4, scoped, tag = 'scoped memory for tpu_custom_call.1']
    #allocation4 [shape = 's32[1]{0}', space=sflag, size = 0x4, scoped, tag = 'scoped memory for tpu_custom_call.1']
    #allocation5 [shape = 'u8[1024]{0}', space=vmem, size = 0x400, scoped, tag = 'input window, operand 1, single buffered']
    #allocation6 [shape = 's32[1]{0}', space=sflag, size = 0x4, scoped, tag = 'scoped memory for tpu_custom_call.1']
    #allocation7 [shape = 'u8[1024]{0}', space=vmem, size = 0x400, scoped, tag = 'input window, operand 2, single buffered']
    #allocation8 [shape = 'u8[3072]{0}', space=vmem, size = 0xc00, scoped, tag = 'input window, operand 4, single buffered']
    #allocation9 [shape = 's32[1]{0}', space=sflag, size = 0x4, scoped, tag = 'scoped memory for tpu_custom_call.1']
    #allocation10 [shape = 'u8[1024]{0}', space=vmem, size = 0x400, scoped, tag = 'input window, operand 6, single buffered']
    #allocation11 [shape = 'u8[1024]{0}', space=vmem, size = 0x400, scoped, tag = 'input window, operand 7, single buffered']
    #allocation12 [shape = 's32[1]{0}', space=sflag, size = 0x4, scoped, tag = 'scoped memory for tpu_custom_call.1']
    #allocation13 [shape = 'u8[1024]{0}', space=vmem, size = 0x400, scoped, tag = 'input window, operand 8, single buffered']
    #allocation14 [shape = 'u8[3072]{0}', space=vmem, size = 0xc00, scoped, tag = 'input window, operand 10, single buffered']
    #allocation15 [shape = 's32[1]{0}', space=sflag, size = 0x4, scoped, tag = 'scoped memory for tpu_custom_call.1']
    #allocation16 [shape = 'u8[1024]{0}', space=vmem, size = 0x400, scoped, tag = 'input window, operand 12, single buffered']
    #allocation17 [shape = 'u8[65536]{0}', space=vmem, size = 0x10000, scoped, tag = 'output window, operand 0, single buffered']
    %18 = vsyncpa [#allocation3], 0
    %19 = vsyncpa [#allocation6], 0
    %20 = vsyncpa [#allocation9], 0
    %21 = vsyncpa [#allocation12], 0
    %22 = vsyncpa [#allocation15], 0
    %23 = vsyncpa [#allocation4], 0
    // Predicated region
    $region2: #{tpu_custom_call.1} parent=1 // pred_check
      _
    $region3: #{tpu_custom_call.1} parent=1 // pred_check_branch
      %25 = sbr.rel (0) target = $region5
    $region4: #{tpu_custom_call.1} parent=1 // pred_region
      %27 = vsyncadd [#allocation3], 0
      %s28 = sshll.u32 %s0, 4
      %s29 = int_to_ptr.hbm [resolvable:$true] %s28
      %s30 = sshll.u32 [#allocation2], 4
      %s31 = int_to_ptr.vmem [resolvable:$true] %s30
      %36 = dma.hbm_to_vmem [thread:$0]  %s29, 2048, %s31, [#allocation3], 256, 256, 16
    $region5: #{tpu_custom_call.1} parent=1 // pred_fallthru
      _
    // Predicated region
    $region6: #{tpu_custom_call.1} parent=1 // pred_check
      _
    $region7: #{tpu_custom_call.1} parent=1 // pred_check_branch
      %38 = sbr.rel (0) target = $region9
    $region8: #{tpu_custom_call.1} parent=1 // pred_region
      %40 = vsyncadd [#allocation6], 0
      %s42 = sshll.u32 %s1, 4
      %s43 = int_to_ptr.hbm [resolvable:$true] %s42
      %s44 = sshll.u32 [#allocation5], 4
      %s45 = int_to_ptr.vmem [resolvable:$true] %s44
      %47 = dma.hbm_to_vmem [thread:$0]  %s43, 32, %s45, [#allocation6]
    $region9: #{tpu_custom_call.1} parent=1 // pred_fallthru
      _
    // Predicated region
    $region10: #{tpu_custom_call.1} parent=1 // pred_check
      _
    $region11: #{tpu_custom_call.1} parent=1 // pred_check_branch
      %49 = sbr.rel (0) target = $region13
    $region12: #{tpu_custom_call.1} parent=1 // pred_region
      %51 = vsyncadd [#allocation6], 0
      %s53 = sshll.u32 %s2, 4
      %s54 = int_to_ptr.hbm [resolvable:$true] %s53
      %s55 = sshll.u32 [#allocation7], 4
      %s56 = int_to_ptr.vmem [resolvable:$true] %s55
      %58 = dma.hbm_to_vmem [thread:$0]  %s54, 32, %s56, [#allocation6]
    $region13: #{tpu_custom_call.1} parent=1 // pred_fallthru
      _
    // Predicated region
    $region14: #{tpu_custom_call.1} parent=1 // pred_check
      _
    $region15: #{tpu_custom_call.1} parent=1 // pred_check_branch
      %60 = sbr.rel (0) target = $region17
    $region16: #{tpu_custom_call.1} parent=1 // pred_region
      _
    $region17: #{tpu_custom_call.1} parent=1 // pred_fallthru
      _
    // Predicated region
    $region18: #{tpu_custom_call.1} parent=1 // pred_check
      _
    $region19: #{tpu_custom_call.1} parent=1 // pred_check_branch
      %62 = sbr.rel (0) target = $region21
    $region20: #{tpu_custom_call.1} parent=1 // pred_region
      %64 = vsyncadd [#allocation9], 0
      %s66 = sshll.u32 %s4, 4
      %s67 = int_to_ptr.hbm [resolvable:$true] %s66
      %s68 = sshll.u32 [#allocation8], 4
      %s69 = int_to_ptr.vmem [resolvable:$true] %s68
      %71 = dma.hbm_to_vmem [thread:$0]  %s67, 96, %s69, [#allocation9]
    $region21: #{tpu_custom_call.1} parent=1 // pred_fallthru
      _
    // Predicated region
    $region22: #{tpu_custom_call.1} parent=1 // pred_check
      _
    $region23: #{tpu_custom_call.1} parent=1 // pred_check_branch
      %73 = sbr.rel (0) target = $region25
    $region24: #{tpu_custom_call.1} parent=1 // pred_region
      _
    $region25: #{tpu_custom_call.1} parent=1 // pred_fallthru
      _
    // Predicated region
    $region26: #{tpu_custom_call.1} parent=1 // pred_check
      _
    $region27: #{tpu_custom_call.1} parent=1 // pred_check_branch
      %75 = sbr.rel (0) target = $region29
    $region28: #{tpu_custom_call.1} parent=1 // pred_region
      %77 = vsyncadd [#allocation9], 0
      %s79 = sshll.u32 %s6, 4
      %s80 = int_to_ptr.hbm [resolvable:$true] %s79
      %s81 = sshll.u32 [#allocation10], 4
      %s82 = int_to_ptr.vmem [resolvable:$true] %s81
      %84 = dma.hbm_to_vmem [thread:$0]  %s80, 32, %s82, [#allocation9]
    $region29: #{tpu_custom_call.1} parent=1 // pred_fallthru
      _
    // Predicated region
    $region30: #{tpu_custom_call.1} parent=1 // pred_check
      _
    $region31: #{tpu_custom_call.1} parent=1 // pred_check_branch
      %86 = sbr.rel (0) target = $region33
    $region32: #{tpu_custom_call.1} parent=1 // pred_region
      %88 = vsyncadd [#allocation12], 0
      %s90 = sshll.u32 %s7, 4
      %s91 = int_to_ptr.hbm [resolvable:$true] %s90
      %s92 = sshll.u32 [#allocation11], 4
      %s93 = int_to_ptr.vmem [resolvable:$true] %s92
      %95 = dma.hbm_to_vmem [thread:$0]  %s91, 32, %s93, [#allocation12]
    $region33: #{tpu_custom_call.1} parent=1 // pred_fallthru
      _
    // Predicated region
    $region34: #{tpu_custom_call.1} parent=1 // pred_check
      _
    $region35: #{tpu_custom_call.1} parent=1 // pred_check_branch
      %97 = sbr.rel (0) target = $region37
    $region36: #{tpu_custom_call.1} parent=1 // pred_region
      %99 = vsyncadd [#allocation12], 0
      %s101 = sshll.u32 %s8, 4
      %s102 = int_to_ptr.hbm [resolvable:$true] %s101
      %s103 = sshll.u32 [#allocation13], 4
      %s104 = int_to_ptr.vmem [resolvable:$true] %s103
      %106 = dma.hbm_to_vmem [thread:$0]  %s102, 32, %s104, [#allocation12]
    $region37: #{tpu_custom_call.1} parent=1 // pred_fallthru
      _
    // Predicated region
    $region38: #{tpu_custom_call.1} parent=1 // pred_check
      _
    $region39: #{tpu_custom_call.1} parent=1 // pred_check_branch
      %108 = sbr.rel (0) target = $region41
    $region40: #{tpu_custom_call.1} parent=1 // pred_region
      _
    $region41: #{tpu_custom_call.1} parent=1 // pred_fallthru
      _
    // Predicated region
    $region42: #{tpu_custom_call.1} parent=1 // pred_check
      _
    $region43: #{tpu_custom_call.1} parent=1 // pred_check_branch
      %110 = sbr.rel (0) target = $region45
    $region44: #{tpu_custom_call.1} parent=1 // pred_region
      %112 = vsyncadd [#allocation15], 0
      %s114 = sshll.u32 %s10, 4
      %s115 = int_to_ptr.hbm [resolvable:$true] %s114
      %s116 = sshll.u32 [#allocation14], 4
      %s117 = int_to_ptr.vmem [resolvable:$true] %s116
      %119 = dma.hbm_to_vmem [thread:$0]  %s115, 96, %s117, [#allocation15]
    $region45: #{tpu_custom_call.1} parent=1 // pred_fallthru
      _
    // Predicated region
    $region46: #{tpu_custom_call.1} parent=1 // pred_check
      _
    $region47: #{tpu_custom_call.1} parent=1 // pred_check_branch
      %121 = sbr.rel (0) target = $region49
    $region48: #{tpu_custom_call.1} parent=1 // pred_region
      _
    $region49: #{tpu_custom_call.1} parent=1 // pred_fallthru
      _
    // Predicated region
    $region50: #{tpu_custom_call.1} parent=1 // pred_check
      _
    $region51: #{tpu_custom_call.1} parent=1 // pred_check_branch
      %123 = sbr.rel (0) target = $region53
    $region52: #{tpu_custom_call.1} parent=1 // pred_region
      %125 = vsyncadd [#allocation15], 0
      %s127 = sshll.u32 %s12, 4
      %s128 = int_to_ptr.hbm [resolvable:$true] %s127
      %s129 = sshll.u32 [#allocation16], 4
      %s130 = int_to_ptr.vmem [resolvable:$true] %s129
      %132 = dma.hbm_to_vmem [thread:$0]  %s128, 32, %s130, [#allocation15]
    $region53: #{tpu_custom_call.1} parent=1 // pred_fallthru
      _
    // Predicated region
    $region54: #{tpu_custom_call.1} parent=1 // pred_check
      _
    $region55: #{tpu_custom_call.1} parent=1 // pred_check_branch
      %134 = sbr.rel (0) target = $region57
    $region56: #{tpu_custom_call.1} parent=1 // pred_region
      %136 = dma.done [#allocation3], 2048
    $region57: #{tpu_custom_call.1} parent=1 // pred_fallthru
      _
    // Predicated region
    $region58: #{tpu_custom_call.1} parent=1 // pred_check
      _
    $region59: #{tpu_custom_call.1} parent=1 // pred_check_branch
      %138 = sbr.rel (0) target = $region61
    $region60: #{tpu_custom_call.1} parent=1 // pred_region
      %140 = dma.done [#allocation6], 32
    $region61: #{tpu_custom_call.1} parent=1 // pred_fallthru
      _
    // Predicated region
    $region62: #{tpu_custom_call.1} parent=1 // pred_check
      _
    $region63: #{tpu_custom_call.1} parent=1 // pred_check_branch
      %142 = sbr.rel (0) target = $region65
    $region64: #{tpu_custom_call.1} parent=1 // pred_region
      %144 = dma.done [#allocation6], 32
    $region65: #{tpu_custom_call.1} parent=1 // pred_fallthru
      _
    // Predicated region
    $region66: #{tpu_custom_call.1} parent=1 // pred_check
      _
    $region67: #{tpu_custom_call.1} parent=1 // pred_check_branch
      %146 = sbr.rel (0) target = $region69
    $region68: #{tpu_custom_call.1} parent=1 // pred_region
      %148 = dma.done [#allocation9], 96
    $region69: #{tpu_custom_call.1} parent=1 // pred_fallthru
      _
    // Predicated region
    $region70: #{tpu_custom_call.1} parent=1 // pred_check
      _
    $region71: #{tpu_custom_call.1} parent=1 // pred_check_branch
      %150 = sbr.rel (0) target = $region73
    $region72: #{tpu_custom_call.1} parent=1 // pred_region
      %152 = dma.done [#allocation9], 32
    $region73: #{tpu_custom_call.1} parent=1 // pred_fallthru
      _
    // Predicated region
    $region74: #{tpu_custom_call.1} parent=1 // pred_check
      _
    $region75: #{tpu_custom_call.1} parent=1 // pred_check_branch
      %154 = sbr.rel (0) target = $region77
    $region76: #{tpu_custom_call.1} parent=1 // pred_region
      %156 = dma.done [#allocation12], 32
    $region77: #{tpu_custom_call.1} parent=1 // pred_fallthru
      _
    // Predicated region
    $region78: #{tpu_custom_call.1} parent=1 // pred_check
      _
    $region79: #{tpu_custom_call.1} parent=1 // pred_check_branch
      %158 = sbr.rel (0) target = $region81
    $region80: #{tpu_custom_call.1} parent=1 // pred_region
      %160 = dma.done [#allocation12], 32
    $region81: #{tpu_custom_call.1} parent=1 // pred_fallthru
      _
    // Predicated region
    $region82: #{tpu_custom_call.1} parent=1 // pred_check
      _
    $region83: #{tpu_custom_call.1} parent=1 // pred_check_branch
      %162 = sbr.rel (0) target = $region85
    $region84: #{tpu_custom_call.1} parent=1 // pred_region
      %164 = dma.done [#allocation15], 96
    $region85: #{tpu_custom_call.1} parent=1 // pred_fallthru
      _
    // Predicated region
    $region86: #{tpu_custom_call.1} parent=1 // pred_check
      _
    $region87: #{tpu_custom_call.1} parent=1 // pred_check_branch
      %166 = sbr.rel (0) target = $region89
    $region88: #{tpu_custom_call.1} parent=1 // pred_region
      %168 = dma.done [#allocation15], 32
    $region89: #{tpu_custom_call.1} parent=1 // pred_fallthru
      _
    %v170 = vld [vmem:[#allocation2] sm:$0xff]
    %v171 = vld [vmem:[#allocation2 + $0x8] sm:$0xff]
    %v172 = vld [vmem:[#allocation2 + $0x10] sm:$0xff]
    %v173 = vld [vmem:[#allocation2 + $0x18] sm:$0xff]
    %v174 = vld [vmem:[#allocation2 + $0x20] sm:$0xff]
    %v175 = vld [vmem:[#allocation2 + $0x28] sm:$0xff]
    %v176 = vld [vmem:[#allocation2 + $0x30] sm:$0xff]
    %v177 = vld [vmem:[#allocation2 + $0x38] sm:$0xff]
    %v178 = vld [vmem:[#allocation2 + $0x40] sm:$0xff]
    %v179 = vld [vmem:[#allocation2 + $0x48] sm:$0xff]
    %v180 = vld [vmem:[#allocation2 + $0x50] sm:$0xff]
    %v181 = vld [vmem:[#allocation2 + $0x58] sm:$0xff]
    %v182 = vld [vmem:[#allocation2 + $0x60] sm:$0xff]
    %v183 = vld [vmem:[#allocation2 + $0x68] sm:$0xff]
    %v184 = vld [vmem:[#allocation2 + $0x70] sm:$0xff]
    %v185 = vld [vmem:[#allocation2 + $0x78] sm:$0xff]
    %v186 = vld [vmem:[#allocation5] sm:$0x3]
    %v187 = vld [vmem:[#allocation7] sm:$0x3]
    %vm188 = vcmask 523264
    %v189 = vsel %vm188, %v171, 0.0
    %v190 = vadd.f32 %v170, %v189
    %191 = vadd.xlane.f32.xlu0 %v190
    %v192 = vpop.xlane.xlu0 %191
    %v193 = vsel %vm188, %v173, 0.0
    %v194 = vadd.f32 %v172, %v193
    %195 = vadd.xlane.f32.xlu0 %v194
    %v196 = vpop.xlane.xlu0 %195
    %v197 = vsel %vm188, %v175, 0.0
    %v198 = vadd.f32 %v174, %v197
    %199 = vadd.xlane.f32.xlu0 %v198
    %v200 = vpop.xlane.xlu0 %199
    %v201 = vsel %vm188, %v177, 0.0
    %v202 = vadd.f32 %v176, %v201
    %203 = vadd.xlane.f32.xlu0 %v202
    %v204 = vpop.xlane.xlu0 %203
    %v205 = vsel %vm188, %v179, 0.0
    %v206 = vadd.f32 %v178, %v205
    %207 = vadd.xlane.f32.xlu0 %v206
    %v208 = vpop.xlane.xlu0 %207
    %v209 = vsel %vm188, %v181, 0.0
    %v210 = vadd.f32 %v180, %v209
    %211 = vadd.xlane.f32.xlu0 %v210
    %v212 = vpop.xlane.xlu0 %211
    %v213 = vsel %vm188, %v183, 0.0
    %v214 = vadd.f32 %v182, %v213
    %215 = vadd.xlane.f32.xlu0 %v214
    %v216 = vpop.xlane.xlu0 %215
    %v217 = vsel %vm188, %v185, 0.0
    %v218 = vadd.f32 %v184, %v217
    %219 = vadd.xlane.f32.xlu0 %v218
    %v220 = vpop.xlane.xlu0 %219
    %v221 = vrcp.pop 192.0
    %v222 = vmul.f32 192.0, %v221
    %v223 = vsub.f32 1.0, %v222
    %v224 = vmul.f32 %v221, %v223
    %v225 = vadd.f32 %v221, %v224
    %vm226 = vweird.f32 %v221
    %v227 = vsel %vm226, %v221, %v225
    %v228 = vmul.f32 %v192, %v227
    %v229 = vmul.f32 %v196, %v227
    %v230 = vmul.f32 %v200, %v227
    %v231 = vmul.f32 %v204, %v227
    %v232 = vmul.f32 %v208, %v227
    %v233 = vmul.f32 %v212, %v227
    %v234 = vmul.f32 %v216, %v227
    %v235 = vmul.f32 %v220, %v227
    %v236 = vsub.f32 %v170, %v228
    %v237 = vsub.f32 %v171, %v228
    %v238 = vsub.f32 %v172, %v229
    %v239 = vsub.f32 %v173, %v229
    %v240 = vsub.f32 %v174, %v230
    %v241 = vsub.f32 %v175, %v230
    %v242 = vsub.f32 %v176, %v231
    %v243 = vsub.f32 %v177, %v231
    %v244 = vsub.f32 %v178, %v232
    %v245 = vsub.f32 %v179, %v232
    %v246 = vsub.f32 %v180, %v233
    %v247 = vsub.f32 %v181, %v233
    %v248 = vsub.f32 %v182, %v234
    %v249 = vsub.f32 %v183, %v234
    %v250 = vsub.f32 %v184, %v235
    %v251 = vsub.f32 %v185, %v235
    %v252 = vmul.f32 %v236, %v236
    %v253 = vmul.f32 %v237, %v237
    %v254 = vmul.f32 %v238, %v238
    %v255 = vmul.f32 %v239, %v239
    %v256 = vmul.f32 %v240, %v240
    %v257 = vmul.f32 %v241, %v241
    %v258 = vmul.f32 %v242, %v242
    %v259 = vmul.f32 %v243, %v243
    %v260 = vmul.f32 %v244, %v244
    %v261 = vmul.f32 %v245, %v245
    %v262 = vmul.f32 %v246, %v246
    %v263 = vmul.f32 %v247, %v247
    %v264 = vmul.f32 %v248, %v248
    %v265 = vmul.f32 %v249, %v249
    %v266 = vmul.f32 %v250, %v250
    %v267 = vmul.f32 %v251, %v251
    %v268 = vsel %vm188, %v253, 0.0
    %v269 = vadd.f32 %v252, %v268
    %270 = vadd.xlane.f32.xlu0 %v269
    %v271 = vpop.xlane.xlu0 %270
    %v272 = vsel %vm188, %v255, 0.0
    %v273 = vadd.f32 %v254, %v272
    %274 = vadd.xlane.f32.xlu0 %v273
    %v275 = vpop.xlane.xlu0 %274
    %v276 = vsel %vm188, %v257, 0.0
    %v277 = vadd.f32 %v256, %v276
    %278 = vadd.xlane.f32.xlu0 %v277
    %v279 = vpop.xlane.xlu0 %278
    %v280 = vsel %vm188, %v259, 0.0
    %v281 = vadd.f32 %v258, %v280
    %282 = vadd.xlane.f32.xlu0 %v281
    %v283 = vpop.xlane.xlu0 %282
    %v284 = vsel %vm188, %v261, 0.0
    %v285 = vadd.f32 %v260, %v284
    %286 = vadd.xlane.f32.xlu0 %v285
    %v287 = vpop.xlane.xlu0 %286
    %v288 = vsel %vm188, %v263, 0.0
    %v289 = vadd.f32 %v262, %v288
    %290 = vadd.xlane.f32.xlu0 %v289
    %v291 = vpop.xlane.xlu0 %290
    %v292 = vsel %vm188, %v265, 0.0
    %v293 = vadd.f32 %v264, %v292
    %294 = vadd.xlane.f32.xlu0 %v293
    %v295 = vpop.xlane.xlu0 %294
    %v296 = vsel %vm188, %v267, 0.0
    %v297 = vadd.f32 %v266, %v296
    %298 = vadd.xlane.f32.xlu0 %v297
    %v299 = vpop.xlane.xlu0 %298
    %v300 = vmul.f32 %v271, %v227
    %v301 = vmul.f32 %v275, %v227
    %v302 = vmul.f32 %v279, %v227
    %v303 = vmul.f32 %v283, %v227
    %v304 = vmul.f32 %v287, %v227
    %v305 = vmul.f32 %v291, %v227
    %v306 = vmul.f32 %v295, %v227
    %v307 = vmul.f32 %v299, %v227
    %v308 = vadd.f32 %v300, 1e-05
    %v309 = vadd.f32 %v301, 1e-05
    %v310 = vadd.f32 %v302, 1e-05
    %v311 = vadd.f32 %v303, 1e-05
    %v312 = vadd.f32 %v304, 1e-05
    %v313 = vadd.f32 %v305, 1e-05
    %v314 = vadd.f32 %v306, 1e-05
    %v315 = vadd.f32 %v307, 1e-05
    %v316 = vrsqrt.pop %v308
    %v317 = vmul.f32 %v316, %v308
    %v318 = vmul.f32 %v317, %v316
    %v319 = vmul.f32 0.5, %v318
    %v320 = vsub.f32 1.5, %v319
    %v321 = vmul.f32 %v316, %v320
    %vm322 = vweird.f32 %v308
    %vm323 = vweird.f32 %v316
    %vm324 = vmor %vm322, %vm323
    %v325 = vsel %vm324, %v316, %v321
    %v326 = vrsqrt.pop %v309
    %v327 = vmul.f32 %v326, %v309
    %v328 = vmul.f32 %v327, %v326
    %v329 = vmul.f32 0.5, %v328
    %v330 = vsub.f32 1.5, %v329
    %v331 = vmul.f32 %v326, %v330
    %vm332 = vweird.f32 %v309
    %vm333 = vweird.f32 %v326
    %vm334 = vmor %vm332, %vm333
    %v335 = vsel %vm334, %v326, %v331
    %v336 = vrsqrt.pop %v310
    %v337 = vmul.f32 %v336, %v310
    %v338 = vmul.f32 %v337, %v336
    %v339 = vmul.f32 0.5, %v338
    %v340 = vsub.f32 1.5, %v339
    %v341 = vmul.f32 %v336, %v340
    %vm342 = vweird.f32 %v310
    %vm343 = vweird.f32 %v336
    %vm344 = vmor %vm342, %vm343
    %v345 = vsel %vm344, %v336, %v341
    %v346 = vrsqrt.pop %v311
    %v347 = vmul.f32 %v346, %v311
    %v348 = vmul.f32 %v347, %v346
    %v349 = vmul.f32 0.5, %v348
    %v350 = vsub.f32 1.5, %v349
    %v351 = vmul.f32 %v346, %v350
    %vm352 = vweird.f32 %v311
    %vm353 = vweird.f32 %v346
    %vm354 = vmor %vm352, %vm353
    %v355 = vsel %vm354, %v346, %v351
    %v356 = vrsqrt.pop %v312
    %v357 = vmul.f32 %v356, %v312
    %v358 = vmul.f32 %v357, %v356
    %v359 = vmul.f32 0.5, %v358
    %v360 = vsub.f32 1.5, %v359
    %v361 = vmul.f32 %v356, %v360
    %vm362 = vweird.f32 %v312
    %vm363 = vweird.f32 %v356
    %vm364 = vmor %vm362, %vm363
    %v365 = vsel %vm364, %v356, %v361
    %v366 = vrsqrt.pop %v313
    %v367 = vmul.f32 %v366, %v313
    %v368 = vmul.f32 %v367, %v366
    %v369 = vmul.f32 0.5, %v368
    %v370 = vsub.f32 1.5, %v369
    %v371 = vmul.f32 %v366, %v370
    %vm372 = vweird.f32 %v313
    %vm373 = vweird.f32 %v366
    %vm374 = vmor %vm372, %vm373
    %v375 = vsel %vm374, %v366, %v371
    %v376 = vrsqrt.pop %v314
    %v377 = vmul.f32 %v376, %v314
    %v378 = vmul.f32 %v377, %v376
    %v379 = vmul.f32 0.5, %v378
    %v380 = vsub.f32 1.5, %v379
    %v381 = vmul.f32 %v376, %v380
    %vm382 = vweird.f32 %v314
    %vm383 = vweird.f32 %v376
    %vm384 = vmor %vm382, %vm383
    %v385 = vsel %vm384, %v376, %v381
    %v386 = vrsqrt.pop %v315
    %v387 = vmul.f32 %v386, %v315
    %v388 = vmul.f32 %v387, %v386
    %v389 = vmul.f32 0.5, %v388
    %v390 = vsub.f32 1.5, %v389
    %v391 = vmul.f32 %v386, %v390
    %vm392 = vweird.f32 %v315
    %vm393 = vweird.f32 %v386
    %vm394 = vmor %vm392, %vm393
    %v395 = vsel %vm394, %v386, %v391
    %v396 = vmul.f32 %v236, %v325
    %v397 = vmul.f32 %v237, %v325
    %v398 = vmul.f32 %v238, %v335
    %v399 = vmul.f32 %v239, %v335
    %v400 = vmul.f32 %v240, %v345
    %v401 = vmul.f32 %v241, %v345
    %v402 = vmul.f32 %v242, %v355
    %v403 = vmul.f32 %v243, %v355
    %v404 = vmul.f32 %v244, %v365
    %v405 = vmul.f32 %v245, %v365
    %v406 = vmul.f32 %v246, %v375
    %v407 = vmul.f32 %v247, %v375
    %v408 = vmul.f32 %v248, %v385
    %v409 = vmul.f32 %v249, %v385
    %v410 = vmul.f32 %v250, %v395
    %v411 = vmul.f32 %v251, %v395
    %v413 = vperm.slane %v186, 0
    %v414 = vperm.slane %v186, 1
    %v417 = vmul.f32 %v396, %v413
    %v418 = vmul.f32 %v397, %v414
    %v419 = vmul.f32 %v398, %v413
    %v420 = vmul.f32 %v399, %v414
    %v421 = vmul.f32 %v400, %v413
    %v422 = vmul.f32 %v401, %v414
    %v423 = vmul.f32 %v402, %v413
    %v424 = vmul.f32 %v403, %v414
    %v425 = vmul.f32 %v404, %v413
    %v426 = vmul.f32 %v405, %v414
    %v427 = vmul.f32 %v406, %v413
    %v428 = vmul.f32 %v407, %v414
    %v429 = vmul.f32 %v408, %v413
    %v430 = vmul.f32 %v409, %v414
    %v431 = vmul.f32 %v410, %v413
    %v432 = vmul.f32 %v411, %v414
    %v434 = vperm.slane %v187, 0
    %v435 = vperm.slane %v187, 1
    %v438 = vadd.f32 %v417, %v434
    %v439 = vadd.f32 %v418, %v435
    %v440 = vadd.f32 %v419, %v434
    %v441 = vadd.f32 %v420, %v435
    %v442 = vadd.f32 %v421, %v434
    %v443 = vadd.f32 %v422, %v435
    %v444 = vadd.f32 %v423, %v434
    %v445 = vadd.f32 %v424, %v435
    %v446 = vadd.f32 %v425, %v434
    %v447 = vadd.f32 %v426, %v435
    %v448 = vadd.f32 %v427, %v434
    %v449 = vadd.f32 %v428, %v435
    %v450 = vadd.f32 %v429, %v434
    %v451 = vadd.f32 %v430, %v435
    %v452 = vadd.f32 %v431, %v434
    %v453 = vadd.f32 %v432, %v435
    %v454 = vpack.c.bf16 %v440, %v438
    %v455 = vpack.c.bf16 %v441, %v439
    %v456 = vpack.c.bf16 %v444, %v442
    %v457 = vpack.c.bf16 %v445, %v443
    %v458 = vpack.c.bf16 %v448, %v446
    %v459 = vpack.c.bf16 %v449, %v447
    %v460 = vpack.c.bf16 %v452, %v450
    %v461 = vpack.c.bf16 %v453, %v451
    %v462 = vld [vmem:[%s3] sm:$0xff]
    %v463 = vld [vmem:[%s3 + $0x8] sm:$0xff]
    %v464 = vld [vmem:[%s3 + $0x10] sm:$0xff]
    %v465 = vld [vmem:[%s3 + $0x18] sm:$0xff]
    %v466 = vld [vmem:[%s3 + $0x20] sm:$0xff]
    %v467 = vld [vmem:[%s3 + $0x28] sm:$0xff]
    %v468 = vld [vmem:[%s3 + $0x30] sm:$0xff]
    %v469 = vld [vmem:[%s3 + $0x38] sm:$0xff]
    %v470 = vld [vmem:[%s3 + $0x40] sm:$0xff]
    %v471 = vld [vmem:[%s3 + $0x48] sm:$0xff]
    %v472 = vld [vmem:[%s3 + $0x50] sm:$0xff]
    %v473 = vld [vmem:[%s3 + $0x58] sm:$0xff]
    %v474 = vld [vmem:[%s3 + $0x60] sm:$0xff]
    %v475 = vld [vmem:[%s3 + $0x68] sm:$0xff]
    %v476 = vld [vmem:[%s3 + $0x70] sm:$0xff]
    %v477 = vld [vmem:[%s3 + $0x78] sm:$0xff]
    %v478 = vld [vmem:[%s3 + $0x80] sm:$0xff]
    %v479 = vld [vmem:[%s3 + $0x88] sm:$0xff]
    %v480 = vld [vmem:[%s3 + $0x90] sm:$0xff]
    %v481 = vld [vmem:[%s3 + $0x98] sm:$0xff]
    %v482 = vld [vmem:[%s3 + $0xa0] sm:$0xff]
    %v483 = vld [vmem:[%s3 + $0xa8] sm:$0xff]
    %v484 = vld [vmem:[%s3 + $0xb0] sm:$0xff]
    %v485 = vld [vmem:[%s3 + $0xb8] sm:$0xff]
    %v486 = vld [vmem:[%s3 + $0xc0] sm:$0xff]
    %v487 = vld [vmem:[%s3 + $0xc8] sm:$0xff]
    %v488 = vld [vmem:[%s3 + $0xd0] sm:$0xff]
    %v489 = vld [vmem:[%s3 + $0xd8] sm:$0xff]
    %v490 = vld [vmem:[%s3 + $0xe0] sm:$0xff]
    %v491 = vld [vmem:[%s3 + $0xe8] sm:$0xff]
    %v492 = vld [vmem:[%s3 + $0xf0] sm:$0xff]
    %v493 = vld [vmem:[%s3 + $0xf8] sm:$0xff]
    %v494 = vld [vmem:[%s3 + $0x100] sm:$0xff]
    %v495 = vld [vmem:[%s3 + $0x108] sm:$0xff]
    %v496 = vld [vmem:[%s3 + $0x110] sm:$0xff]
    %v497 = vld [vmem:[%s3 + $0x118] sm:$0xff]
    %v498 = vld [vmem:[%s3 + $0x120] sm:$0xff]
    %v499 = vld [vmem:[%s3 + $0x128] sm:$0xff]
    %v500 = vld [vmem:[%s3 + $0x130] sm:$0xff]
    %v501 = vld [vmem:[%s3 + $0x138] sm:$0xff]
    %v502 = vld [vmem:[%s3 + $0x140] sm:$0xff]
    %v503 = vld [vmem:[%s3 + $0x148] sm:$0xff]
    %v504 = vld [vmem:[%s3 + $0x150] sm:$0xff]
    %v505 = vld [vmem:[%s3 + $0x158] sm:$0xff]
    %v506 = vld [vmem:[%s3 + $0x160] sm:$0xff]
    %v507 = vld [vmem:[%s3 + $0x168] sm:$0xff]
    %v508 = vld [vmem:[%s3 + $0x170] sm:$0xff]
    %v509 = vld [vmem:[%s3 + $0x178] sm:$0xff]
    %v510 = vld [vmem:[%s3 + $0x180] sm:$0xff]
    %v511 = vld [vmem:[%s3 + $0x188] sm:$0xff]
    %v512 = vld [vmem:[%s3 + $0x190] sm:$0xff]
    %v513 = vld [vmem:[%s3 + $0x198] sm:$0xff]
    %v514 = vld [vmem:[%s3 + $0x1a0] sm:$0xff]
    %v515 = vld [vmem:[%s3 + $0x1a8] sm:$0xff]
    %v516 = vld [vmem:[%s3 + $0x1b0] sm:$0xff]
    %v517 = vld [vmem:[%s3 + $0x1b8] sm:$0xff]
    %v518 = vld [vmem:[%s3 + $0x1c0] sm:$0xff]
    %v519 = vld [vmem:[%s3 + $0x1c8] sm:$0xff]
    %v520 = vld [vmem:[%s3 + $0x1d0] sm:$0xff]
    %v521 = vld [vmem:[%s3 + $0x1d8] sm:$0xff]
    %v522 = vld [vmem:[%s3 + $0x1e0] sm:$0xff]
    %v523 = vld [vmem:[%s3 + $0x1e8] sm:$0xff]
    %v524 = vld [vmem:[%s3 + $0x1f0] sm:$0xff]
    %v525 = vld [vmem:[%s3 + $0x1f8] sm:$0xff]
    %v526 = vld [vmem:[%s3 + $0x200] sm:$0xff]
    %v527 = vld [vmem:[%s3 + $0x208] sm:$0xff]
    %v528 = vld [vmem:[%s3 + $0x210] sm:$0xff]
    %v529 = vld [vmem:[%s3 + $0x218] sm:$0xff]
    %v530 = vld [vmem:[%s3 + $0x220] sm:$0xff]
    %v531 = vld [vmem:[%s3 + $0x228] sm:$0xff]
    %v532 = vld [vmem:[%s3 + $0x230] sm:$0xff]
    %v533 = vld [vmem:[%s3 + $0x238] sm:$0xff]
    %v534 = vld [vmem:[#allocation8] sm:$0x3f]
    %v536 = vperm.slane %v534, 0
    %v537 = vperm.slane %v534, 1
    %v538 = vperm.slane %v534, 2
    %v539 = vperm.slane %v534, 3
    %v540 = vperm.slane %v534, 4
    %v541 = vperm.slane %v534, 5
    %v620 = vunpack.c.l.b16 %v462
    %v621 = vunpack.c.h.b16 %v462
    %v622 = vunpack.c.l.b16 %v463
    %v623 = vunpack.c.h.b16 %v463
    %v624 = vunpack.c.l.b16 %v464
    %v625 = vunpack.c.h.b16 %v464
    %v626 = vunpack.c.l.b16 %v465
    %v627 = vunpack.c.h.b16 %v465
    %v628 = vunpack.c.l.b16 %v466
    %v629 = vunpack.c.h.b16 %v466
    %v630 = vunpack.c.l.b16 %v467
    %v631 = vunpack.c.h.b16 %v467
    %v632 = vunpack.c.l.b16 %v468
    %v633 = vunpack.c.h.b16 %v468
    %v634 = vunpack.c.l.b16 %v469
    %v635 = vunpack.c.h.b16 %v469
    %v636 = vunpack.c.l.b16 %v470
    %v637 = vunpack.c.h.b16 %v470
    %v638 = vunpack.c.l.b16 %v471
    %v639 = vunpack.c.h.b16 %v471
    %v640 = vunpack.c.l.b16 %v472
    %v641 = vunpack.c.h.b16 %v472
    %v642 = vunpack.c.l.b16 %v473
    %v643 = vunpack.c.h.b16 %v473
    %v644 = vunpack.c.l.b16 %v474
    %v645 = vunpack.c.h.b16 %v474
    %v646 = vunpack.c.l.b16 %v475
    %v647 = vunpack.c.h.b16 %v475
    %v648 = vunpack.c.l.b16 %v476
    %v649 = vunpack.c.h.b16 %v476
    %v650 = vunpack.c.l.b16 %v477
    %v651 = vunpack.c.h.b16 %v477
    %v652 = vunpack.c.l.b16 %v478
    %v653 = vunpack.c.h.b16 %v478
    %v654 = vunpack.c.l.b16 %v479
    %v655 = vunpack.c.h.b16 %v479
    %v656 = vunpack.c.l.b16 %v480
    %v657 = vunpack.c.h.b16 %v480
    %v658 = vunpack.c.l.b16 %v481
    %v659 = vunpack.c.h.b16 %v481
    %v660 = vunpack.c.l.b16 %v482
    %v661 = vunpack.c.h.b16 %v482
    %v662 = vunpack.c.l.b16 %v483
    %v663 = vunpack.c.h.b16 %v483
    %v664 = vunpack.c.l.b16 %v484
    %v665 = vunpack.c.h.b16 %v484
    %v666 = vunpack.c.l.b16 %v485
    %v667 = vunpack.c.h.b16 %v485
    %v668 = vunpack.c.l.b16 %v486
    %v669 = vunpack.c.h.b16 %v486
    %v670 = vunpack.c.l.b16 %v487
    %v671 = vunpack.c.h.b16 %v487
    %v672 = vunpack.c.l.b16 %v488
    %v673 = vunpack.c.h.b16 %v488
    %v674 = vunpack.c.l.b16 %v489
    %v675 = vunpack.c.h.b16 %v489
    %v676 = vunpack.c.l.b16 %v490
    %v677 = vunpack.c.h.b16 %v490
    %v678 = vunpack.c.l.b16 %v491
    %v679 = vunpack.c.h.b16 %v491
    %v680 = vunpack.c.l.b16 %v492
    %v681 = vunpack.c.h.b16 %v492
    %v682 = vunpack.c.l.b16 %v493
    %v683 = vunpack.c.h.b16 %v493
    %v684 = vunpack.c.l.b16 %v494
    %v685 = vunpack.c.h.b16 %v494
    %v686 = vunpack.c.l.b16 %v495
    %v687 = vunpack.c.h.b16 %v495
    %v688 = vunpack.c.l.b16 %v496
    %v689 = vunpack.c.h.b16 %v496
    %v690 = vunpack.c.l.b16 %v497
    %v691 = vunpack.c.h.b16 %v497
    %v692 = vunpack.c.l.b16 %v498
    %v693 = vunpack.c.h.b16 %v498
    %v694 = vunpack.c.l.b16 %v499
    %v695 = vunpack.c.h.b16 %v499
    %v696 = vunpack.c.l.b16 %v500
    %v697 = vunpack.c.h.b16 %v500
    %v698 = vunpack.c.l.b16 %v501
    %v699 = vunpack.c.h.b16 %v501
    %v700 = vunpack.c.l.b16 %v502
    %v701 = vunpack.c.h.b16 %v502
    %v702 = vunpack.c.l.b16 %v503
    %v703 = vunpack.c.h.b16 %v503
    %v704 = vunpack.c.l.b16 %v504
    %v705 = vunpack.c.h.b16 %v504
    %v706 = vunpack.c.l.b16 %v505
    %v707 = vunpack.c.h.b16 %v505
    %v708 = vunpack.c.l.b16 %v506
    %v709 = vunpack.c.h.b16 %v506
    %v710 = vunpack.c.l.b16 %v507
    %v711 = vunpack.c.h.b16 %v507
    %v712 = vunpack.c.l.b16 %v508
    %v713 = vunpack.c.h.b16 %v508
    %v714 = vunpack.c.l.b16 %v509
    %v715 = vunpack.c.h.b16 %v509
    %v716 = vunpack.c.l.b16 %v510
    %v717 = vunpack.c.h.b16 %v510
    %v718 = vunpack.c.l.b16 %v511
    %v719 = vunpack.c.h.b16 %v511
    %v720 = vunpack.c.l.b16 %v512
    %v721 = vunpack.c.h.b16 %v512
    %v722 = vunpack.c.l.b16 %v513
    %v723 = vunpack.c.h.b16 %v513
    %v724 = vunpack.c.l.b16 %v514
    %v725 = vunpack.c.h.b16 %v514
    %v726 = vunpack.c.l.b16 %v515
    %v727 = vunpack.c.h.b16 %v515
    %v728 = vunpack.c.l.b16 %v516
    %v729 = vunpack.c.h.b16 %v516
    %v730 = vunpack.c.l.b16 %v517
    %v731 = vunpack.c.h.b16 %v517
    %v732 = vunpack.c.l.b16 %v518
    %v733 = vunpack.c.h.b16 %v518
    %v734 = vunpack.c.l.b16 %v519
    %v735 = vunpack.c.h.b16 %v519
    %v736 = vunpack.c.l.b16 %v520
    %v737 = vunpack.c.h.b16 %v520
    %v738 = vunpack.c.l.b16 %v521
    %v739 = vunpack.c.h.b16 %v521
    %v740 = vunpack.c.l.b16 %v522
    %v741 = vunpack.c.h.b16 %v522
    %v742 = vunpack.c.l.b16 %v523
    %v743 = vunpack.c.h.b16 %v523
    %v744 = vunpack.c.l.b16 %v524
    %v745 = vunpack.c.h.b16 %v524
    %v746 = vunpack.c.l.b16 %v525
    %v747 = vunpack.c.h.b16 %v525
    %v748 = vunpack.c.l.b16 %v526
    %v749 = vunpack.c.h.b16 %v526
    %v750 = vunpack.c.l.b16 %v527
    %v751 = vunpack.c.h.b16 %v527
    %v752 = vunpack.c.l.b16 %v528
    %v753 = vunpack.c.h.b16 %v528
    %v754 = vunpack.c.l.b16 %v529
    %v755 = vunpack.c.h.b16 %v529
    %v756 = vunpack.c.l.b16 %v530
    %v757 = vunpack.c.h.b16 %v530
    %v758 = vunpack.c.l.b16 %v531
    %v759 = vunpack.c.h.b16 %v531
    %v760 = vunpack.c.l.b16 %v532
    %v761 = vunpack.c.h.b16 %v532
    %v762 = vunpack.c.l.b16 %v533
    %v763 = vunpack.c.h.b16 %v533
    %v764 = vpack.c.b16 %v626, %v620
    %v765 = vpack.c.b16 %v627, %v621
    %v766 = vpack.c.b16 %v628, %v622
    %v767 = vpack.c.b16 %v629, %v623
    %v768 = vpack.c.b16 %v630, %v624
    %v769 = vpack.c.b16 %v631, %v625
    %v770 = vpack.c.b16 %v638, %v632
    %v771 = vpack.c.b16 %v639, %v633
    %v772 = vpack.c.b16 %v640, %v634
    %v773 = vpack.c.b16 %v641, %v635
    %v774 = vpack.c.b16 %v642, %v636
    %v775 = vpack.c.b16 %v643, %v637
    %v776 = vpack.c.b16 %v650, %v644
    %v777 = vpack.c.b16 %v651, %v645
    %v778 = vpack.c.b16 %v652, %v646
    %v779 = vpack.c.b16 %v653, %v647
    %v780 = vpack.c.b16 %v654, %v648
    %v781 = vpack.c.b16 %v655, %v649
    %v782 = vpack.c.b16 %v662, %v656
    %v783 = vpack.c.b16 %v663, %v657
    %v784 = vpack.c.b16 %v664, %v658
    %v785 = vpack.c.b16 %v665, %v659
    %v786 = vpack.c.b16 %v666, %v660
    %v787 = vpack.c.b16 %v667, %v661
    %v788 = vpack.c.b16 %v674, %v668
    %v789 = vpack.c.b16 %v675, %v669
    %v790 = vpack.c.b16 %v676, %v670
    %v791 = vpack.c.b16 %v677, %v671
    %v792 = vpack.c.b16 %v678, %v672
    %v793 = vpack.c.b16 %v679, %v673
    %v794 = vpack.c.b16 %v686, %v680
    %v795 = vpack.c.b16 %v687, %v681
    %v796 = vpack.c.b16 %v688, %v682
    %v797 = vpack.c.b16 %v689, %v683
    %v798 = vpack.c.b16 %v690, %v684
    %v799 = vpack.c.b16 %v691, %v685
    %v800 = vpack.c.b16 %v698, %v692
    %v801 = vpack.c.b16 %v699, %v693
    %v802 = vpack.c.b16 %v700, %v694
    %v803 = vpack.c.b16 %v701, %v695
    %v804 = vpack.c.b16 %v702, %v696
    %v805 = vpack.c.b16 %v703, %v697
    %v806 = vpack.c.b16 %v710, %v704
    %v807 = vpack.c.b16 %v711, %v705
    %v808 = vpack.c.b16 %v712, %v706
    %v809 = vpack.c.b16 %v713, %v707
    %v810 = vpack.c.b16 %v714, %v708
    %v811 = vpack.c.b16 %v715, %v709
    %v812 = vpack.c.b16 %v722, %v716
    %v813 = vpack.c.b16 %v723, %v717
    %v814 = vpack.c.b16 %v724, %v718
    %v815 = vpack.c.b16 %v725, %v719
    %v816 = vpack.c.b16 %v726, %v720
    %v817 = vpack.c.b16 %v727, %v721
    %v818 = vpack.c.b16 %v734, %v728
    %v819 = vpack.c.b16 %v735, %v729
    %v820 = vpack.c.b16 %v736, %v730
    %v821 = vpack.c.b16 %v737, %v731
    %v822 = vpack.c.b16 %v738, %v732
    %v823 = vpack.c.b16 %v739, %v733
    %v824 = vpack.c.b16 %v746, %v740
    %v825 = vpack.c.b16 %v747, %v741
    %v826 = vpack.c.b16 %v748, %v742
    %v827 = vpack.c.b16 %v749, %v743
    %v828 = vpack.c.b16 %v750, %v744
    %v829 = vpack.c.b16 %v751, %v745
    %v830 = vpack.c.b16 %v758, %v752
    %v831 = vpack.c.b16 %v759, %v753
    %v832 = vpack.c.b16 %v760, %v754
    %v833 = vpack.c.b16 %v761, %v755
    %v834 = vpack.c.b16 %v762, %v756
    %v835 = vpack.c.b16 %v763, %v757
    %v909 = vsel %vm188, %v455, 0
    %v912 = vsel %vm188, %v457, 0
    %v915 = vsel %vm188, %v459, 0
    %v918 = vsel %vm188, %v461, 0
    %920 = vmatpush.bf16.msra.mxu0 %v806
    %921 = vmatpush.bf16.msra.mxu0 %v800
    %922 = vmatpush.bf16.msra.mxu0 %v794
    %923 = vmatpush.bf16.msra.mxu0 %v788
    %924 = vmatpush.bf16.msra.mxu0 %v782
    %925 = vmatpush.bf16.msra.mxu0 %v776
    %926 = vmatpush.bf16.msra.mxu0 %v770
    %927 = vmatpush.bf16.msra.mxu0 %v764
    %928 = vmatmul.bf16.gmra.mxu0 %v454
    %v929 = vpop.f32.mrf.mxu0
    %v930 = vadd.f32 %v536, %v929
    %v931 = vpop.f32.mrf.mxu0
    %v932 = vadd.f32 %v536, %v931
    %933 = vmatmul.bf16.gmra.mxu0 %v456
    %v934 = vpop.f32.mrf.mxu0
    %v935 = vadd.f32 %v536, %v934
    %v936 = vpop.f32.mrf.mxu0
    %v937 = vadd.f32 %v536, %v936
    %938 = vmatmul.bf16.gmra.mxu0 %v458
    %v939 = vpop.f32.mrf.mxu0
    %v940 = vadd.f32 %v536, %v939
    %v941 = vpop.f32.mrf.mxu0
    %v942 = vadd.f32 %v536, %v941
    %943 = vmatmul.bf16.gmra.mxu0 %v460
    %v944 = vpop.f32.mrf.mxu0
    %v945 = vadd.f32 %v536, %v944
    %v946 = vpop.f32.mrf.mxu0
    %v947 = vadd.f32 %v536, %v946
    %948 = vdwg.mxu0
    %949 = vmatpush.bf16.msra.mxu0 0
    %950 = vmatpush.bf16.msra.mxu0 0
    %951 = vmatpush.bf16.msra.mxu0 0
    %952 = vmatpush.bf16.msra.mxu0 0
    %953 = vmatpush.bf16.msra.mxu0 %v830
    %954 = vmatpush.bf16.msra.mxu0 %v824
    %955 = vmatpush.bf16.msra.mxu0 %v818
    %956 = vmatpush.bf16.msra.mxu0 %v812
    %957 = vmatmul.bf16.gmra.mxu0 %v909
    %v958 = vpop.f32.mrf.mxu0
    %v959 = vadd.f32 %v930, %v958
    %v960 = vpop.f32.mrf.mxu0
    %v961 = vadd.f32 %v932, %v960
    %962 = vmatmul.bf16.gmra.mxu0 %v912
    %v963 = vpop.f32.mrf.mxu0
    %v964 = vadd.f32 %v935, %v963
    %v965 = vpop.f32.mrf.mxu0
    %v966 = vadd.f32 %v937, %v965
    %967 = vmatmul.bf16.gmra.mxu0 %v915
    %v968 = vpop.f32.mrf.mxu0
    %v969 = vadd.f32 %v940, %v968
    %v970 = vpop.f32.mrf.mxu0
    %v971 = vadd.f32 %v942, %v970
    %972 = vmatmul.bf16.gmra.mxu0 %v918
    %v973 = vpop.f32.mrf.mxu0
    %v974 = vadd.f32 %v945, %v973
    %v975 = vpop.f32.mrf.mxu0
    %v976 = vadd.f32 %v947, %v975
    %977 = vdwg.mxu0
    %978 = vmatpush.bf16.msra.mxu0 %v807
    %979 = vmatpush.bf16.msra.mxu0 %v801
    %980 = vmatpush.bf16.msra.mxu0 %v795
    %981 = vmatpush.bf16.msra.mxu0 %v789
    %982 = vmatpush.bf16.msra.mxu0 %v783
    %983 = vmatpush.bf16.msra.mxu0 %v777
    %984 = vmatpush.bf16.msra.mxu0 %v771
    %985 = vmatpush.bf16.msra.mxu0 %v765
    %986 = vmatmul.bf16.gmra.mxu0 %v454
    %v987 = vpop.f32.mrf.mxu0
    %v988 = vadd.f32 %v537, %v987
    %v989 = vpop.f32.mrf.mxu0
    %v990 = vadd.f32 %v537, %v989
    %991 = vmatmul.bf16.gmra.mxu0 %v456
    %v992 = vpop.f32.mrf.mxu0
    %v993 = vadd.f32 %v537, %v992
    %v994 = vpop.f32.mrf.mxu0
    %v995 = vadd.f32 %v537, %v994
    %996 = vmatmul.bf16.gmra.mxu0 %v458
    %v997 = vpop.f32.mrf.mxu0
    %v998 = vadd.f32 %v537, %v997
    %v999 = vpop.f32.mrf.mxu0
    %v1000 = vadd.f32 %v537, %v999
    %1001 = vmatmul.bf16.gmra.mxu0 %v460
    %v1002 = vpop.f32.mrf.mxu0
    %v1003 = vadd.f32 %v537, %v1002
    %v1004 = vpop.f32.mrf.mxu0
    %v1005 = vadd.f32 %v537, %v1004
    %1006 = vdwg.mxu0
    %1007 = vmatpush.bf16.msra.mxu0 0
    %1008 = vmatpush.bf16.msra.mxu0 0
    %1009 = vmatpush.bf16.msra.mxu0 0
    %1010 = vmatpush.bf16.msra.mxu0 0
    %1011 = vmatpush.bf16.msra.mxu0 %v831
    %1012 = vmatpush.bf16.msra.mxu0 %v825
    %1013 = vmatpush.bf16.msra.mxu0 %v819
    %1014 = vmatpush.bf16.msra.mxu0 %v813
    %1015 = vmatmul.bf16.gmra.mxu0 %v909
    %v1016 = vpop.f32.mrf.mxu0
    %v1017 = vadd.f32 %v988, %v1016
    %v1018 = vpop.f32.mrf.mxu0
    %v1019 = vadd.f32 %v990, %v1018
    %1020 = vmatmul.bf16.gmra.mxu0 %v912
    %v1021 = vpop.f32.mrf.mxu0
    %v1022 = vadd.f32 %v993, %v1021
    %v1023 = vpop.f32.mrf.mxu0
    %v1024 = vadd.f32 %v995, %v1023
    %1025 = vmatmul.bf16.gmra.mxu0 %v915
    %v1026 = vpop.f32.mrf.mxu0
    %v1027 = vadd.f32 %v998, %v1026
    %v1028 = vpop.f32.mrf.mxu0
    %v1029 = vadd.f32 %v1000, %v1028
    %1030 = vmatmul.bf16.gmra.mxu0 %v918
    %v1031 = vpop.f32.mrf.mxu0
    %v1032 = vadd.f32 %v1003, %v1031
    %v1033 = vpop.f32.mrf.mxu0
    %v1034 = vadd.f32 %v1005, %v1033
    %1035 = vdwg.mxu0
    %1036 = vmatpush.bf16.msra.mxu0 %v808
    %1037 = vmatpush.bf16.msra.mxu0 %v802
    %1038 = vmatpush.bf16.msra.mxu0 %v796
    %1039 = vmatpush.bf16.msra.mxu0 %v790
    %1040 = vmatpush.bf16.msra.mxu0 %v784
    %1041 = vmatpush.bf16.msra.mxu0 %v778
    %1042 = vmatpush.bf16.msra.mxu0 %v772
    %1043 = vmatpush.bf16.msra.mxu0 %v766
    %1044 = vmatmul.bf16.gmra.mxu0 %v454
    %v1045 = vpop.f32.mrf.mxu0
    %v1046 = vadd.f32 %v538, %v1045
    %v1047 = vpop.f32.mrf.mxu0
    %v1048 = vadd.f32 %v538, %v1047
    %1049 = vmatmul.bf16.gmra.mxu0 %v456
    %v1050 = vpop.f32.mrf.mxu0
    %v1051 = vadd.f32 %v538, %v1050
    %v1052 = vpop.f32.mrf.mxu0
    %v1053 = vadd.f32 %v538, %v1052
    %1054 = vmatmul.bf16.gmra.mxu0 %v458
    %v1055 = vpop.f32.mrf.mxu0
    %v1056 = vadd.f32 %v538, %v1055
    %v1057 = vpop.f32.mrf.mxu0
    %v1058 = vadd.f32 %v538, %v1057
    %1059 = vmatmul.bf16.gmra.mxu0 %v460
    %v1060 = vpop.f32.mrf.mxu0
    %v1061 = vadd.f32 %v538, %v1060
    %v1062 = vpop.f32.mrf.mxu0
    %v1063 = vadd.f32 %v538, %v1062
    %1064 = vdwg.mxu0
    %1065 = vmatpush.bf16.msra.mxu0 0
    %1066 = vmatpush.bf16.msra.mxu0 0
    %1067 = vmatpush.bf16.msra.mxu0 0
    %1068 = vmatpush.bf16.msra.mxu0 0
    %1069 = vmatpush.bf16.msra.mxu0 %v832
    %1070 = vmatpush.bf16.msra.mxu0 %v826
    %1071 = vmatpush.bf16.msra.mxu0 %v820
    %1072 = vmatpush.bf16.msra.mxu0 %v814
    %1073 = vmatmul.bf16.gmra.mxu0 %v909
    %v1074 = vpop.f32.mrf.mxu0
    %v1075 = vadd.f32 %v1046, %v1074
    %v1076 = vpop.f32.mrf.mxu0
    %v1077 = vadd.f32 %v1048, %v1076
    %1078 = vmatmul.bf16.gmra.mxu0 %v912
    %v1079 = vpop.f32.mrf.mxu0
    %v1080 = vadd.f32 %v1051, %v1079
    %v1081 = vpop.f32.mrf.mxu0
    %v1082 = vadd.f32 %v1053, %v1081
    %1083 = vmatmul.bf16.gmra.mxu0 %v915
    %v1084 = vpop.f32.mrf.mxu0
    %v1085 = vadd.f32 %v1056, %v1084
    %v1086 = vpop.f32.mrf.mxu0
    %v1087 = vadd.f32 %v1058, %v1086
    %1088 = vmatmul.bf16.gmra.mxu0 %v918
    %v1089 = vpop.f32.mrf.mxu0
    %v1090 = vadd.f32 %v1061, %v1089
    %v1091 = vpop.f32.mrf.mxu0
    %v1092 = vadd.f32 %v1063, %v1091
    %1093 = vdwg.mxu0
    %1094 = vmatpush.bf16.msra.mxu0 %v809
    %1095 = vmatpush.bf16.msra.mxu0 %v803
    %1096 = vmatpush.bf16.msra.mxu0 %v797
    %1097 = vmatpush.bf16.msra.mxu0 %v791
    %1098 = vmatpush.bf16.msra.mxu0 %v785
    %1099 = vmatpush.bf16.msra.mxu0 %v779
    %1100 = vmatpush.bf16.msra.mxu0 %v773
    %1101 = vmatpush.bf16.msra.mxu0 %v767
    %1102 = vmatmul.bf16.gmra.mxu0 %v454
    %v1103 = vpop.f32.mrf.mxu0
    %v1104 = vadd.f32 %v539, %v1103
    %v1105 = vpop.f32.mrf.mxu0
    %v1106 = vadd.f32 %v539, %v1105
    %1107 = vmatmul.bf16.gmra.mxu0 %v456
    %v1108 = vpop.f32.mrf.mxu0
    %v1109 = vadd.f32 %v539, %v1108
    %v1110 = vpop.f32.mrf.mxu0
    %v1111 = vadd.f32 %v539, %v1110
    %1112 = vmatmul.bf16.gmra.mxu0 %v458
    %v1113 = vpop.f32.mrf.mxu0
    %v1114 = vadd.f32 %v539, %v1113
    %v1115 = vpop.f32.mrf.mxu0
    %v1116 = vadd.f32 %v539, %v1115
    %1117 = vmatmul.bf16.gmra.mxu0 %v460
    %v1118 = vpop.f32.mrf.mxu0
    %v1119 = vadd.f32 %v539, %v1118
    %v1120 = vpop.f32.mrf.mxu0
    %v1121 = vadd.f32 %v539, %v1120
    %1122 = vdwg.mxu0
    %1123 = vmatpush.bf16.msra.mxu0 0
    %1124 = vmatpush.bf16.msra.mxu0 0
    %1125 = vmatpush.bf16.msra.mxu0 0
    %1126 = vmatpush.bf16.msra.mxu0 0
    %1127 = vmatpush.bf16.msra.mxu0 %v833
    %1128 = vmatpush.bf16.msra.mxu0 %v827
    %1129 = vmatpush.bf16.msra.mxu0 %v821
    %1130 = vmatpush.bf16.msra.mxu0 %v815
    %1131 = vmatmul.bf16.gmra.mxu0 %v909
    %v1132 = vpop.f32.mrf.mxu0
    %v1133 = vadd.f32 %v1104, %v1132
    %v1134 = vpop.f32.mrf.mxu0
    %v1135 = vadd.f32 %v1106, %v1134
    %1136 = vmatmul.bf16.gmra.mxu0 %v912
    %v1137 = vpop.f32.mrf.mxu0
    %v1138 = vadd.f32 %v1109, %v1137
    %v1139 = vpop.f32.mrf.mxu0
    %v1140 = vadd.f32 %v1111, %v1139
    %1141 = vmatmul.bf16.gmra.mxu0 %v915
    %v1142 = vpop.f32.mrf.mxu0
    %v1143 = vadd.f32 %v1114, %v1142
    %v1144 = vpop.f32.mrf.mxu0
    %v1145 = vadd.f32 %v1116, %v1144
    %1146 = vmatmul.bf16.gmra.mxu0 %v918
    %v1147 = vpop.f32.mrf.mxu0
    %v1148 = vadd.f32 %v1119, %v1147
    %v1149 = vpop.f32.mrf.mxu0
    %v1150 = vadd.f32 %v1121, %v1149
    %1151 = vdwg.mxu0
    %1152 = vmatpush.bf16.msra.mxu0 %v810
    %1153 = vmatpush.bf16.msra.mxu0 %v804
    %1154 = vmatpush.bf16.msra.mxu0 %v798
    %1155 = vmatpush.bf16.msra.mxu0 %v792
    %1156 = vmatpush.bf16.msra.mxu0 %v786
    %1157 = vmatpush.bf16.msra.mxu0 %v780
    %1158 = vmatpush.bf16.msra.mxu0 %v774
    %1159 = vmatpush.bf16.msra.mxu0 %v768
    %1160 = vmatmul.bf16.gmra.mxu0 %v454
    %v1161 = vpop.f32.mrf.mxu0
    %v1162 = vadd.f32 %v540, %v1161
    %v1163 = vpop.f32.mrf.mxu0
    %v1164 = vadd.f32 %v540, %v1163
    %1165 = vmatmul.bf16.gmra.mxu0 %v456
    %v1166 = vpop.f32.mrf.mxu0
    %v1167 = vadd.f32 %v540, %v1166
    %v1168 = vpop.f32.mrf.mxu0
    %v1169 = vadd.f32 %v540, %v1168
    %1170 = vmatmul.bf16.gmra.mxu0 %v458
    %v1171 = vpop.f32.mrf.mxu0
    %v1172 = vadd.f32 %v540, %v1171
    %v1173 = vpop.f32.mrf.mxu0
    %v1174 = vadd.f32 %v540, %v1173
    %1175 = vmatmul.bf16.gmra.mxu0 %v460
    %v1176 = vpop.f32.mrf.mxu0
    %v1177 = vadd.f32 %v540, %v1176
    %v1178 = vpop.f32.mrf.mxu0
    %v1179 = vadd.f32 %v540, %v1178
    %1180 = vdwg.mxu0
    %1181 = vmatpush.bf16.msra.mxu0 0
    %1182 = vmatpush.bf16.msra.mxu0 0
    %1183 = vmatpush.bf16.msra.mxu0 0
    %1184 = vmatpush.bf16.msra.mxu0 0
    %1185 = vmatpush.bf16.msra.mxu0 %v834
    %1186 = vmatpush.bf16.msra.mxu0 %v828
    %1187 = vmatpush.bf16.msra.mxu0 %v822
    %1188 = vmatpush.bf16.msra.mxu0 %v816
    %1189 = vmatmul.bf16.gmra.mxu0 %v909
    %v1190 = vpop.f32.mrf.mxu0
    %v1191 = vadd.f32 %v1162, %v1190
    %v1192 = vpop.f32.mrf.mxu0
    %v1193 = vadd.f32 %v1164, %v1192
    %1194 = vmatmul.bf16.gmra.mxu0 %v912
    %v1195 = vpop.f32.mrf.mxu0
    %v1196 = vadd.f32 %v1167, %v1195
    %v1197 = vpop.f32.mrf.mxu0
    %v1198 = vadd.f32 %v1169, %v1197
    %1199 = vmatmul.bf16.gmra.mxu0 %v915
    %v1200 = vpop.f32.mrf.mxu0
    %v1201 = vadd.f32 %v1172, %v1200
    %v1202 = vpop.f32.mrf.mxu0
    %v1203 = vadd.f32 %v1174, %v1202
    %1204 = vmatmul.bf16.gmra.mxu0 %v918
    %v1205 = vpop.f32.mrf.mxu0
    %v1206 = vadd.f32 %v1177, %v1205
    %v1207 = vpop.f32.mrf.mxu0
    %v1208 = vadd.f32 %v1179, %v1207
    %1209 = vdwg.mxu0
    %1210 = vmatpush.bf16.msra.mxu0 %v811
    %1211 = vmatpush.bf16.msra.mxu0 %v805
    %1212 = vmatpush.bf16.msra.mxu0 %v799
    %1213 = vmatpush.bf16.msra.mxu0 %v793
    %1214 = vmatpush.bf16.msra.mxu0 %v787
    %1215 = vmatpush.bf16.msra.mxu0 %v781
    %1216 = vmatpush.bf16.msra.mxu0 %v775
    %1217 = vmatpush.bf16.msra.mxu0 %v769
    %1218 = vmatmul.bf16.gmra.mxu0 %v454
    %v1219 = vpop.f32.mrf.mxu0
    %v1220 = vadd.f32 %v541, %v1219
    %v1221 = vpop.f32.mrf.mxu0
    %v1222 = vadd.f32 %v541, %v1221
    %1223 = vmatmul.bf16.gmra.mxu0 %v456
    %v1224 = vpop.f32.mrf.mxu0
    %v1225 = vadd.f32 %v541, %v1224
    %v1226 = vpop.f32.mrf.mxu0
    %v1227 = vadd.f32 %v541, %v1226
    %1228 = vmatmul.bf16.gmra.mxu0 %v458
    %v1229 = vpop.f32.mrf.mxu0
    %v1230 = vadd.f32 %v541, %v1229
    %v1231 = vpop.f32.mrf.mxu0
    %v1232 = vadd.f32 %v541, %v1231
    %1233 = vmatmul.bf16.gmra.mxu0 %v460
    %v1234 = vpop.f32.mrf.mxu0
    %v1235 = vadd.f32 %v541, %v1234
    %v1236 = vpop.f32.mrf.mxu0
    %v1237 = vadd.f32 %v541, %v1236
    %1238 = vdwg.mxu0
    %1239 = vmatpush.bf16.msra.mxu0 0
    %1240 = vmatpush.bf16.msra.mxu0 0
    %1241 = vmatpush.bf16.msra.mxu0 0
    %1242 = vmatpush.bf16.msra.mxu0 0
    %1243 = vmatpush.bf16.msra.mxu0 %v835
    %1244 = vmatpush.bf16.msra.mxu0 %v829
    %1245 = vmatpush.bf16.msra.mxu0 %v823
    %1246 = vmatpush.bf16.msra.mxu0 %v817
    %1247 = vmatmul.bf16.gmra.mxu0 %v909
    %v1248 = vpop.f32.mrf.mxu0
    %v1249 = vadd.f32 %v1220, %v1248
    %v1250 = vpop.f32.mrf.mxu0
    %v1251 = vadd.f32 %v1222, %v1250
    %1252 = vmatmul.bf16.gmra.mxu0 %v912
    %v1253 = vpop.f32.mrf.mxu0
    %v1254 = vadd.f32 %v1225, %v1253
    %v1255 = vpop.f32.mrf.mxu0
    %v1256 = vadd.f32 %v1227, %v1255
    %1257 = vmatmul.bf16.gmra.mxu0 %v915
    %v1258 = vpop.f32.mrf.mxu0
    %v1259 = vadd.f32 %v1230, %v1258
    %v1260 = vpop.f32.mrf.mxu0
    %v1261 = vadd.f32 %v1232, %v1260
    %1262 = vmatmul.bf16.gmra.mxu0 %v918
    %v1263 = vpop.f32.mrf.mxu0
    %v1264 = vadd.f32 %v1235, %v1263
    %v1265 = vpop.f32.mrf.mxu0
    %v1266 = vadd.f32 %v1237, %v1265
    %1267 = vdwg.mxu0
    %v1268 = vpack.c.bf16 %v959, %v959
    %v1269 = vpack.c.bf16 %v961, %v961
    %v1270 = vpack.c.bf16 %v964, %v964
    %v1271 = vpack.c.bf16 %v966, %v966
    %v1272 = vpack.c.bf16 %v969, %v969
    %v1273 = vpack.c.bf16 %v971, %v971
    %v1274 = vpack.c.bf16 %v974, %v974
    %v1275 = vpack.c.bf16 %v976, %v976
    %v1276 = vpack.c.bf16 %v1075, %v1075
    %v1277 = vpack.c.bf16 %v1077, %v1077
    %v1278 = vpack.c.bf16 %v1080, %v1080
    %v1279 = vpack.c.bf16 %v1082, %v1082
    %v1280 = vpack.c.bf16 %v1085, %v1085
    %v1281 = vpack.c.bf16 %v1087, %v1087
    %v1282 = vpack.c.bf16 %v1090, %v1090
    %v1283 = vpack.c.bf16 %v1092, %v1092
    %v1284 = vpack.c.bf16 %v1191, %v1191
    %v1285 = vpack.c.bf16 %v1193, %v1193
    %v1286 = vpack.c.bf16 %v1196, %v1196
    %v1287 = vpack.c.bf16 %v1198, %v1198
    %v1288 = vpack.c.bf16 %v1201, %v1201
    %v1289 = vpack.c.bf16 %v1203, %v1203
    %v1290 = vpack.c.bf16 %v1206, %v1206
    %v1291 = vpack.c.bf16 %v1208, %v1208
    %v1293 = vsel %vm188, %v1268, 0
    %v1296 = vsel %vm188, %v1276, 0
    %1298 = vmatpush.bf16.xpose.msra.mxu0 0
    %1299 = vmatpush.bf16.xpose.msra.mxu0 0
    %1300 = vmatpush.bf16.xpose.msra.mxu0 0
    %1301 = vmatpush.bf16.xpose.msra.mxu0 0
    %1302 = vmatpush.bf16.xpose.msra.mxu0 0
    %1303 = vmatpush.bf16.xpose.msra.mxu0 0
    %1304 = vmatpush.bf16.xpose.msra.mxu0 0
    %1305 = vmatpush.bf16.xpose.msra.mxu0 %v1296
    %1306 = vmatmul.bf16.gmra.mxu0 %v1293
    %v1307 = vpop.f32.mrf.mxu0
    %v1308 = vadd.f32 0.0, %v1307
    %v1309 = vpop.f32.mrf.mxu0
    %1310 = vdwg.mxu0
    %v1312 = vsel %vm188, %v1269, 0
    %v1315 = vsel %vm188, %v1277, 0
    %1317 = vmatpush.bf16.xpose.msra.mxu0 0
    %1318 = vmatpush.bf16.xpose.msra.mxu0 0
    %1319 = vmatpush.bf16.xpose.msra.mxu0 0
    %1320 = vmatpush.bf16.xpose.msra.mxu0 0
    %1321 = vmatpush.bf16.xpose.msra.mxu0 0
    %1322 = vmatpush.bf16.xpose.msra.mxu0 0
    %1323 = vmatpush.bf16.xpose.msra.mxu0 0
    %1324 = vmatpush.bf16.xpose.msra.mxu0 %v1315
    %1325 = vmatmul.bf16.gmra.mxu0 %v1312
    %v1326 = vpop.f32.mrf.mxu0
    %v1327 = vadd.f32 0.0, %v1326
    %v1328 = vpop.f32.mrf.mxu0
    %1329 = vdwg.mxu0
    %v1331 = vsel %vm188, %v1270, 0
    %v1334 = vsel %vm188, %v1278, 0
    %1336 = vmatpush.bf16.xpose.msra.mxu0 0
    %1337 = vmatpush.bf16.xpose.msra.mxu0 0
    %1338 = vmatpush.bf16.xpose.msra.mxu0 0
    %1339 = vmatpush.bf16.xpose.msra.mxu0 0
    %1340 = vmatpush.bf16.xpose.msra.mxu0 0
    %1341 = vmatpush.bf16.xpose.msra.mxu0 0
    %1342 = vmatpush.bf16.xpose.msra.mxu0 0
    %1343 = vmatpush.bf16.xpose.msra.mxu0 %v1334
    %1344 = vmatmul.bf16.gmra.mxu0 %v1331
    %v1345 = vpop.f32.mrf.mxu0
    %v1346 = vadd.f32 0.0, %v1345
    %v1347 = vpop.f32.mrf.mxu0
    %1348 = vdwg.mxu0
    %v1350 = vsel %vm188, %v1271, 0
    %v1353 = vsel %vm188, %v1279, 0
    %1355 = vmatpush.bf16.xpose.msra.mxu0 0
    %1356 = vmatpush.bf16.xpose.msra.mxu0 0
    %1357 = vmatpush.bf16.xpose.msra.mxu0 0
    %1358 = vmatpush.bf16.xpose.msra.mxu0 0
    %1359 = vmatpush.bf16.xpose.msra.mxu0 0
    %1360 = vmatpush.bf16.xpose.msra.mxu0 0
    %1361 = vmatpush.bf16.xpose.msra.mxu0 0
    %1362 = vmatpush.bf16.xpose.msra.mxu0 %v1353
    %1363 = vmatmul.bf16.gmra.mxu0 %v1350
    %v1364 = vpop.f32.mrf.mxu0
    %v1365 = vadd.f32 0.0, %v1364
    %v1366 = vpop.f32.mrf.mxu0
    %1367 = vdwg.mxu0
    %v1369 = vsel %vm188, %v1272, 0
    %v1372 = vsel %vm188, %v1280, 0
    %1374 = vmatpush.bf16.xpose.msra.mxu0 0
    %1375 = vmatpush.bf16.xpose.msra.mxu0 0
    %1376 = vmatpush.bf16.xpose.msra.mxu0 0
    %1377 = vmatpush.bf16.xpose.msra.mxu0 0
    %1378 = vmatpush.bf16.xpose.msra.mxu0 0
    %1379 = vmatpush.bf16.xpose.msra.mxu0 0
    %1380 = vmatpush.bf16.xpose.msra.mxu0 0
    %1381 = vmatpush.bf16.xpose.msra.mxu0 %v1372
    %1382 = vmatmul.bf16.gmra.mxu0 %v1369
    %v1383 = vpop.f32.mrf.mxu0
    %v1384 = vadd.f32 0.0, %v1383
    %v1385 = vpop.f32.mrf.mxu0
    %1386 = vdwg.mxu0
    %v1388 = vsel %vm188, %v1273, 0
    %v1391 = vsel %vm188, %v1281, 0
    %1393 = vmatpush.bf16.xpose.msra.mxu0 0
    %1394 = vmatpush.bf16.xpose.msra.mxu0 0
    %1395 = vmatpush.bf16.xpose.msra.mxu0 0
    %1396 = vmatpush.bf16.xpose.msra.mxu0 0
    %1397 = vmatpush.bf16.xpose.msra.mxu0 0
    %1398 = vmatpush.bf16.xpose.msra.mxu0 0
    %1399 = vmatpush.bf16.xpose.msra.mxu0 0
    %1400 = vmatpush.bf16.xpose.msra.mxu0 %v1391
    %1401 = vmatmul.bf16.gmra.mxu0 %v1388
    %v1402 = vpop.f32.mrf.mxu0
    %v1403 = vadd.f32 0.0, %v1402
    %v1404 = vpop.f32.mrf.mxu0
    %1405 = vdwg.mxu0
    %v1407 = vsel %vm188, %v1274, 0
    %v1410 = vsel %vm188, %v1282, 0
    %1412 = vmatpush.bf16.xpose.msra.mxu0 0
    %1413 = vmatpush.bf16.xpose.msra.mxu0 0
    %1414 = vmatpush.bf16.xpose.msra.mxu0 0
    %1415 = vmatpush.bf16.xpose.msra.mxu0 0
    %1416 = vmatpush.bf16.xpose.msra.mxu0 0
    %1417 = vmatpush.bf16.xpose.msra.mxu0 0
    %1418 = vmatpush.bf16.xpose.msra.mxu0 0
    %1419 = vmatpush.bf16.xpose.msra.mxu0 %v1410
    %1420 = vmatmul.bf16.gmra.mxu0 %v1407
    %v1421 = vpop.f32.mrf.mxu0
    %v1422 = vadd.f32 0.0, %v1421
    %v1423 = vpop.f32.mrf.mxu0
    %1424 = vdwg.mxu0
    %v1426 = vsel %vm188, %v1275, 0
    %v1429 = vsel %vm188, %v1283, 0
    %1431 = vmatpush.bf16.xpose.msra.mxu0 0
    %1432 = vmatpush.bf16.xpose.msra.mxu0 0
    %1433 = vmatpush.bf16.xpose.msra.mxu0 0
    %1434 = vmatpush.bf16.xpose.msra.mxu0 0
    %1435 = vmatpush.bf16.xpose.msra.mxu0 0
    %1436 = vmatpush.bf16.xpose.msra.mxu0 0
    %1437 = vmatpush.bf16.xpose.msra.mxu0 0
    %1438 = vmatpush.bf16.xpose.msra.mxu0 %v1429
    %1439 = vmatmul.bf16.gmra.mxu0 %v1426
    %v1440 = vpop.f32.mrf.mxu0
    %v1441 = vadd.f32 0.0, %v1440
    %v1442 = vpop.f32.mrf.mxu0
    %1443 = vdwg.mxu0
    %vm1444 = vcmask 64512
    %v1445 = vsel %vm1444, %v1308, -inf
    %1446 = vmax.xlane.f32.xlu0 %v1445
    %v1447 = vpop.xlane.xlu0 %1446
    %v1448 = vsel %vm1444, %v1327, -inf
    %1449 = vmax.xlane.f32.xlu0 %v1448
    %v1450 = vpop.xlane.xlu0 %1449
    %v1451 = vsel %vm1444, %v1346, -inf
    %1452 = vmax.xlane.f32.xlu0 %v1451
    %v1453 = vpop.xlane.xlu0 %1452
    %v1454 = vsel %vm1444, %v1365, -inf
    %1455 = vmax.xlane.f32.xlu0 %v1454
    %v1456 = vpop.xlane.xlu0 %1455
    %v1457 = vsel %vm1444, %v1384, -inf
    %1458 = vmax.xlane.f32.xlu0 %v1457
    %v1459 = vpop.xlane.xlu0 %1458
    %v1460 = vsel %vm1444, %v1403, -inf
    %1461 = vmax.xlane.f32.xlu0 %v1460
    %v1462 = vpop.xlane.xlu0 %1461
    %v1463 = vsel %vm1444, %v1422, -inf
    %1464 = vmax.xlane.f32.xlu0 %v1463
    %v1465 = vpop.xlane.xlu0 %1464
    %v1466 = vsel %vm1444, %v1441, -inf
    %1467 = vmax.xlane.f32.xlu0 %v1466
    %v1468 = vpop.xlane.xlu0 %1467
    %v1469 = vsub.f32 %v1308, %v1447
    %v1470 = vsub.f32 %v1327, %v1450
    %v1471 = vsub.f32 %v1346, %v1453
    %v1472 = vsub.f32 %v1365, %v1456
    %v1473 = vsub.f32 %v1384, %v1459
    %v1474 = vsub.f32 %v1403, %v1462
    %v1475 = vsub.f32 %v1422, %v1465
    %v1476 = vsub.f32 %v1441, %v1468
    %v1477 = vmul.f32 %v1469, 1.442695
    %v1478 = vpow.pop %v1477
    %v1479 = vmul.f32 %v1470, 1.442695
    %v1480 = vpow.pop %v1479
    %v1481 = vmul.f32 %v1471, 1.442695
    %v1482 = vpow.pop %v1481
    %v1483 = vmul.f32 %v1472, 1.442695
    %v1484 = vpow.pop %v1483
    %v1485 = vmul.f32 %v1473, 1.442695
    %v1486 = vpow.pop %v1485
    %v1487 = vmul.f32 %v1474, 1.442695
    %v1488 = vpow.pop %v1487
    %v1489 = vmul.f32 %v1475, 1.442695
    %v1490 = vpow.pop %v1489
    %v1491 = vmul.f32 %v1476, 1.442695
    %v1492 = vpow.pop %v1491
    %v1493 = vsel %vm1444, %v1478, 0.0
    %1494 = vadd.xlane.f32.xlu0 %v1493
    %v1495 = vpop.xlane.xlu0 %1494
    %v1496 = vsel %vm1444, %v1480, 0.0
    %1497 = vadd.xlane.f32.xlu0 %v1496
    %v1498 = vpop.xlane.xlu0 %1497
    %v1499 = vsel %vm1444, %v1482, 0.0
    %1500 = vadd.xlane.f32.xlu0 %v1499
    %v1501 = vpop.xlane.xlu0 %1500
    %v1502 = vsel %vm1444, %v1484, 0.0
    %1503 = vadd.xlane.f32.xlu0 %v1502
    %v1504 = vpop.xlane.xlu0 %1503
    %v1505 = vsel %vm1444, %v1486, 0.0
    %1506 = vadd.xlane.f32.xlu0 %v1505
    %v1507 = vpop.xlane.xlu0 %1506
    %v1508 = vsel %vm1444, %v1488, 0.0
    %1509 = vadd.xlane.f32.xlu0 %v1508
    %v1510 = vpop.xlane.xlu0 %1509
    %v1511 = vsel %vm1444, %v1490, 0.0
    %1512 = vadd.xlane.f32.xlu0 %v1511
    %v1513 = vpop.xlane.xlu0 %1512
    %v1514 = vsel %vm1444, %v1492, 0.0
    %1515 = vadd.xlane.f32.xlu0 %v1514
    %v1516 = vpop.xlane.xlu0 %1515
    %v1517 = vrcp.pop %v1495
    %v1518 = vrcp.pop %v1498
    %v1519 = vrcp.pop %v1501
    %v1520 = vrcp.pop %v1504
    %v1521 = vrcp.pop %v1507
    %v1522 = vrcp.pop %v1510
    %v1523 = vrcp.pop %v1513
    %v1524 = vrcp.pop %v1516
    %v1525 = vmul.f32 %v1478, %v1517
    %v1526 = vmul.f32 %v1480, %v1518
    %v1527 = vmul.f32 %v1482, %v1519
    %v1528 = vmul.f32 %v1484, %v1520
    %v1529 = vmul.f32 %v1486, %v1521
    %v1530 = vmul.f32 %v1488, %v1522
    %v1531 = vmul.f32 %v1490, %v1523
    %v1532 = vmul.f32 %v1492, %v1524
    %v1533 = vpack.c.bf16 %v1525, %v1525
    %v1534 = vpack.c.bf16 %v1526, %v1526
    %v1535 = vpack.c.bf16 %v1527, %v1527
    %v1536 = vpack.c.bf16 %v1528, %v1528
    %v1537 = vpack.c.bf16 %v1529, %v1529
    %v1538 = vpack.c.bf16 %v1530, %v1530
    %v1539 = vpack.c.bf16 %v1531, %v1531
    %v1540 = vpack.c.bf16 %v1532, %v1532
    %v1542 = vsel %vm1444, %v1533, 0
    %vm1544 = vcmask 1043456
    %v1546 = vsel %vm1544, %v1284, 0
    %1548 = vmatpush.bf16.msra.mxu0 0
    %1549 = vmatpush.bf16.msra.mxu0 0
    %1550 = vmatpush.bf16.msra.mxu0 0
    %1551 = vmatpush.bf16.msra.mxu0 0
    %1552 = vmatpush.bf16.msra.mxu0 0
    %1553 = vmatpush.bf16.msra.mxu0 0
    %1554 = vmatpush.bf16.msra.mxu0 0
    %1555 = vmatpush.bf16.msra.mxu0 %v1546
    %1556 = vmatmul.bf16.gmra.mxu0 %v1542
    %v1557 = vpop.f32.mrf.mxu0
    %v1558 = vadd.f32 0.0, %v1557
    %v1559 = vpop.f32.mrf.mxu0
    %1560 = vdwg.mxu0
    %v1562 = vsel %vm1444, %v1534, 0
    %v1565 = vsel %vm1544, %v1285, 0
    %1567 = vmatpush.bf16.msra.mxu0 0
    %1568 = vmatpush.bf16.msra.mxu0 0
    %1569 = vmatpush.bf16.msra.mxu0 0
    %1570 = vmatpush.bf16.msra.mxu0 0
    %1571 = vmatpush.bf16.msra.mxu0 0
    %1572 = vmatpush.bf16.msra.mxu0 0
    %1573 = vmatpush.bf16.msra.mxu0 0
    %1574 = vmatpush.bf16.msra.mxu0 %v1565
    %1575 = vmatmul.bf16.gmra.mxu0 %v1562
    %v1576 = vpop.f32.mrf.mxu0
    %v1577 = vadd.f32 0.0, %v1576
    %v1578 = vpop.f32.mrf.mxu0
    %1579 = vdwg.mxu0
    %v1581 = vsel %vm1444, %v1535, 0
    %v1584 = vsel %vm1544, %v1286, 0
    %1586 = vmatpush.bf16.msra.mxu0 0
    %1587 = vmatpush.bf16.msra.mxu0 0
    %1588 = vmatpush.bf16.msra.mxu0 0
    %1589 = vmatpush.bf16.msra.mxu0 0
    %1590 = vmatpush.bf16.msra.mxu0 0
    %1591 = vmatpush.bf16.msra.mxu0 0
    %1592 = vmatpush.bf16.msra.mxu0 0
    %1593 = vmatpush.bf16.msra.mxu0 %v1584
    %1594 = vmatmul.bf16.gmra.mxu0 %v1581
    %v1595 = vpop.f32.mrf.mxu0
    %v1596 = vadd.f32 0.0, %v1595
    %v1597 = vpop.f32.mrf.mxu0
    %1598 = vdwg.mxu0
    %v1600 = vsel %vm1444, %v1536, 0
    %v1603 = vsel %vm1544, %v1287, 0
    %1605 = vmatpush.bf16.msra.mxu0 0
    %1606 = vmatpush.bf16.msra.mxu0 0
    %1607 = vmatpush.bf16.msra.mxu0 0
    %1608 = vmatpush.bf16.msra.mxu0 0
    %1609 = vmatpush.bf16.msra.mxu0 0
    %1610 = vmatpush.bf16.msra.mxu0 0
    %1611 = vmatpush.bf16.msra.mxu0 0
    %1612 = vmatpush.bf16.msra.mxu0 %v1603
    %1613 = vmatmul.bf16.gmra.mxu0 %v1600
    %v1614 = vpop.f32.mrf.mxu0
    %v1615 = vadd.f32 0.0, %v1614
    %v1616 = vpop.f32.mrf.mxu0
    %1617 = vdwg.mxu0
    %v1619 = vsel %vm1444, %v1537, 0
    %v1622 = vsel %vm1544, %v1288, 0
    %1624 = vmatpush.bf16.msra.mxu0 0
    %1625 = vmatpush.bf16.msra.mxu0 0
    %1626 = vmatpush.bf16.msra.mxu0 0
    %1627 = vmatpush.bf16.msra.mxu0 0
    %1628 = vmatpush.bf16.msra.mxu0 0
    %1629 = vmatpush.bf16.msra.mxu0 0
    %1630 = vmatpush.bf16.msra.mxu0 0
    %1631 = vmatpush.bf16.msra.mxu0 %v1622
    %1632 = vmatmul.bf16.gmra.mxu0 %v1619
    %v1633 = vpop.f32.mrf.mxu0
    %v1634 = vadd.f32 0.0, %v1633
    %v1635 = vpop.f32.mrf.mxu0
    %1636 = vdwg.mxu0
    %v1638 = vsel %vm1444, %v1538, 0
    %v1641 = vsel %vm1544, %v1289, 0
    %1643 = vmatpush.bf16.msra.mxu0 0
    %1644 = vmatpush.bf16.msra.mxu0 0
    %1645 = vmatpush.bf16.msra.mxu0 0
    %1646 = vmatpush.bf16.msra.mxu0 0
    %1647 = vmatpush.bf16.msra.mxu0 0
    %1648 = vmatpush.bf16.msra.mxu0 0
    %1649 = vmatpush.bf16.msra.mxu0 0
    %1650 = vmatpush.bf16.msra.mxu0 %v1641
    %1651 = vmatmul.bf16.gmra.mxu0 %v1638
    %v1652 = vpop.f32.mrf.mxu0
    %v1653 = vadd.f32 0.0, %v1652
    %v1654 = vpop.f32.mrf.mxu0
    %1655 = vdwg.mxu0
    %v1657 = vsel %vm1444, %v1539, 0
    %v1660 = vsel %vm1544, %v1290, 0
    %1662 = vmatpush.bf16.msra.mxu0 0
    %1663 = vmatpush.bf16.msra.mxu0 0
    %1664 = vmatpush.bf16.msra.mxu0 0
    %1665 = vmatpush.bf16.msra.mxu0 0
    %1666 = vmatpush.bf16.msra.mxu0 0
    %1667 = vmatpush.bf16.msra.mxu0 0
    %1668 = vmatpush.bf16.msra.mxu0 0
    %1669 = vmatpush.bf16.msra.mxu0 %v1660
    %1670 = vmatmul.bf16.gmra.mxu0 %v1657
    %v1671 = vpop.f32.mrf.mxu0
    %v1672 = vadd.f32 0.0, %v1671
    %v1673 = vpop.f32.mrf.mxu0
    %1674 = vdwg.mxu0
    %v1676 = vsel %vm1444, %v1540, 0
    %v1679 = vsel %vm1544, %v1291, 0
    %1681 = vmatpush.bf16.msra.mxu0 0
    %1682 = vmatpush.bf16.msra.mxu0 0
    %1683 = vmatpush.bf16.msra.mxu0 0
    %1684 = vmatpush.bf16.msra.mxu0 0
    %1685 = vmatpush.bf16.msra.mxu0 0
    %1686 = vmatpush.bf16.msra.mxu0 0
    %1687 = vmatpush.bf16.msra.mxu0 0
    %1688 = vmatpush.bf16.msra.mxu0 %v1679
    %1689 = vmatmul.bf16.gmra.mxu0 %v1676
    %v1690 = vpop.f32.mrf.mxu0
    %v1691 = vadd.f32 0.0, %v1690
    %v1692 = vpop.f32.mrf.mxu0
    %1693 = vdwg.mxu0
    %v1694 = vpack.c.bf16 %v1558, %v1558
    %v1695 = vpack.c.bf16 %v1577, %v1577
    %v1696 = vpack.c.bf16 %v1596, %v1596
    %v1697 = vpack.c.bf16 %v1615, %v1615
    %v1698 = vpack.c.bf16 %v1634, %v1634
    %v1699 = vpack.c.bf16 %v1653, %v1653
    %v1700 = vpack.c.bf16 %v1672, %v1672
    %v1701 = vpack.c.bf16 %v1691, %v1691
    %v1703 = vunpack.c.l.b16 %v1268
    %v1704 = vpack.c.b16 %v1703, %v1703
    %1705 = vrot.lane.b32.xlu0 %v1704, 64
    %v1706 = vpop.permute.xlu0 %1705
    %v1708 = vunpack.c.l.b16 %v1276
    %v1709 = vpack.c.b16 %v1708, %v1708
    %1710 = vrot.lane.b32.xlu0 %v1709, 64
    %v1711 = vpop.permute.xlu0 %1710
    %v1713 = vsel %vm188, %v1706, 0
    %v1716 = vsel %vm188, %v1711, 0
    %1718 = vmatpush.bf16.xpose.msra.mxu0 0
    %1719 = vmatpush.bf16.xpose.msra.mxu0 0
    %1720 = vmatpush.bf16.xpose.msra.mxu0 0
    %1721 = vmatpush.bf16.xpose.msra.mxu0 0
    %1722 = vmatpush.bf16.xpose.msra.mxu0 0
    %1723 = vmatpush.bf16.xpose.msra.mxu0 0
    %1724 = vmatpush.bf16.xpose.msra.mxu0 0
    %1725 = vmatpush.bf16.xpose.msra.mxu0 %v1716
    %1726 = vmatmul.bf16.gmra.mxu0 %v1713
    %v1727 = vpop.f32.mrf.mxu0
    %v1728 = vadd.f32 0.0, %v1727
    %v1729 = vpop.f32.mrf.mxu0
    %1730 = vdwg.mxu0
    %v1732 = vunpack.c.l.b16 %v1269
    %v1733 = vpack.c.b16 %v1732, %v1732
    %1734 = vrot.lane.b32.xlu0 %v1733, 64
    %v1735 = vpop.permute.xlu0 %1734
    %v1737 = vunpack.c.l.b16 %v1277
    %v1738 = vpack.c.b16 %v1737, %v1737
    %1739 = vrot.lane.b32.xlu0 %v1738, 64
    %v1740 = vpop.permute.xlu0 %1739
    %v1742 = vsel %vm188, %v1735, 0
    %v1745 = vsel %vm188, %v1740, 0
    %1747 = vmatpush.bf16.xpose.msra.mxu0 0
    %1748 = vmatpush.bf16.xpose.msra.mxu0 0
    %1749 = vmatpush.bf16.xpose.msra.mxu0 0
    %1750 = vmatpush.bf16.xpose.msra.mxu0 0
    %1751 = vmatpush.bf16.xpose.msra.mxu0 0
    %1752 = vmatpush.bf16.xpose.msra.mxu0 0
    %1753 = vmatpush.bf16.xpose.msra.mxu0 0
    %1754 = vmatpush.bf16.xpose.msra.mxu0 %v1745
    %1755 = vmatmul.bf16.gmra.mxu0 %v1742
    %v1756 = vpop.f32.mrf.mxu0
    %v1757 = vadd.f32 0.0, %v1756
    %v1758 = vpop.f32.mrf.mxu0
    %1759 = vdwg.mxu0
    %v1761 = vunpack.c.l.b16 %v1270
    %v1762 = vpack.c.b16 %v1761, %v1761
    %1763 = vrot.lane.b32.xlu0 %v1762, 64
    %v1764 = vpop.permute.xlu0 %1763
    %v1766 = vunpack.c.l.b16 %v1278
    %v1767 = vpack.c.b16 %v1766, %v1766
    %1768 = vrot.lane.b32.xlu0 %v1767, 64
    %v1769 = vpop.permute.xlu0 %1768
    %v1771 = vsel %vm188, %v1764, 0
    %v1774 = vsel %vm188, %v1769, 0
    %1776 = vmatpush.bf16.xpose.msra.mxu0 0
    %1777 = vmatpush.bf16.xpose.msra.mxu0 0
    %1778 = vmatpush.bf16.xpose.msra.mxu0 0
    %1779 = vmatpush.bf16.xpose.msra.mxu0 0
    %1780 = vmatpush.bf16.xpose.msra.mxu0 0
    %1781 = vmatpush.bf16.xpose.msra.mxu0 0
    %1782 = vmatpush.bf16.xpose.msra.mxu0 0
    %1783 = vmatpush.bf16.xpose.msra.mxu0 %v1774
    %1784 = vmatmul.bf16.gmra.mxu0 %v1771
    %v1785 = vpop.f32.mrf.mxu0
    %v1786 = vadd.f32 0.0, %v1785
    %v1787 = vpop.f32.mrf.mxu0
    %1788 = vdwg.mxu0
    %v1790 = vunpack.c.l.b16 %v1271
    %v1791 = vpack.c.b16 %v1790, %v1790
    %1792 = vrot.lane.b32.xlu0 %v1791, 64
    %v1793 = vpop.permute.xlu0 %1792
    %v1795 = vunpack.c.l.b16 %v1279
    %v1796 = vpack.c.b16 %v1795, %v1795
    %1797 = vrot.lane.b32.xlu0 %v1796, 64
    %v1798 = vpop.permute.xlu0 %1797
    %v1800 = vsel %vm188, %v1793, 0
    %v1803 = vsel %vm188, %v1798, 0
    %1805 = vmatpush.bf16.xpose.msra.mxu0 0
    %1806 = vmatpush.bf16.xpose.msra.mxu0 0
    %1807 = vmatpush.bf16.xpose.msra.mxu0 0
    %1808 = vmatpush.bf16.xpose.msra.mxu0 0
    %1809 = vmatpush.bf16.xpose.msra.mxu0 0
    %1810 = vmatpush.bf16.xpose.msra.mxu0 0
    %1811 = vmatpush.bf16.xpose.msra.mxu0 0
    %1812 = vmatpush.bf16.xpose.msra.mxu0 %v1803
    %1813 = vmatmul.bf16.gmra.mxu0 %v1800
    %v1814 = vpop.f32.mrf.mxu0
    %v1815 = vadd.f32 0.0, %v1814
    %v1816 = vpop.f32.mrf.mxu0
    %1817 = vdwg.mxu0
    %v1819 = vunpack.c.l.b16 %v1272
    %v1820 = vpack.c.b16 %v1819, %v1819
    %1821 = vrot.lane.b32.xlu0 %v1820, 64
    %v1822 = vpop.permute.xlu0 %1821
    %v1824 = vunpack.c.l.b16 %v1280
    %v1825 = vpack.c.b16 %v1824, %v1824
    %1826 = vrot.lane.b32.xlu0 %v1825, 64
    %v1827 = vpop.permute.xlu0 %1826
    %v1829 = vsel %vm188, %v1822, 0
    %v1832 = vsel %vm188, %v1827, 0
    %1834 = vmatpush.bf16.xpose.msra.mxu0 0
    %1835 = vmatpush.bf16.xpose.msra.mxu0 0
    %1836 = vmatpush.bf16.xpose.msra.mxu0 0
    %1837 = vmatpush.bf16.xpose.msra.mxu0 0
    %1838 = vmatpush.bf16.xpose.msra.mxu0 0
    %1839 = vmatpush.bf16.xpose.msra.mxu0 0
    %1840 = vmatpush.bf16.xpose.msra.mxu0 0
    %1841 = vmatpush.bf16.xpose.msra.mxu0 %v1832
    %1842 = vmatmul.bf16.gmra.mxu0 %v1829
    %v1843 = vpop.f32.mrf.mxu0
    %v1844 = vadd.f32 0.0, %v1843
    %v1845 = vpop.f32.mrf.mxu0
    %1846 = vdwg.mxu0
    %v1848 = vunpack.c.l.b16 %v1273
    %v1849 = vpack.c.b16 %v1848, %v1848
    %1850 = vrot.lane.b32.xlu0 %v1849, 64
    %v1851 = vpop.permute.xlu0 %1850
    %v1853 = vunpack.c.l.b16 %v1281
    %v1854 = vpack.c.b16 %v1853, %v1853
    %1855 = vrot.lane.b32.xlu0 %v1854, 64
    %v1856 = vpop.permute.xlu0 %1855
    %v1858 = vsel %vm188, %v1851, 0
    %v1861 = vsel %vm188, %v1856, 0
    %1863 = vmatpush.bf16.xpose.msra.mxu0 0
    %1864 = vmatpush.bf16.xpose.msra.mxu0 0
    %1865 = vmatpush.bf16.xpose.msra.mxu0 0
    %1866 = vmatpush.bf16.xpose.msra.mxu0 0
    %1867 = vmatpush.bf16.xpose.msra.mxu0 0
    %1868 = vmatpush.bf16.xpose.msra.mxu0 0
    %1869 = vmatpush.bf16.xpose.msra.mxu0 0
    %1870 = vmatpush.bf16.xpose.msra.mxu0 %v1861
    %1871 = vmatmul.bf16.gmra.mxu0 %v1858
    %v1872 = vpop.f32.mrf.mxu0
    %v1873 = vadd.f32 0.0, %v1872
    %v1874 = vpop.f32.mrf.mxu0
    %1875 = vdwg.mxu0
    %v1877 = vunpack.c.l.b16 %v1274
    %v1878 = vpack.c.b16 %v1877, %v1877
    %1879 = vrot.lane.b32.xlu0 %v1878, 64
    %v1880 = vpop.permute.xlu0 %1879
    %v1882 = vunpack.c.l.b16 %v1282
    %v1883 = vpack.c.b16 %v1882, %v1882
    %1884 = vrot.lane.b32.xlu0 %v1883, 64
    %v1885 = vpop.permute.xlu0 %1884
    %v1887 = vsel %vm188, %v1880, 0
    %v1890 = vsel %vm188, %v1885, 0
    %1892 = vmatpush.bf16.xpose.msra.mxu0 0
    %1893 = vmatpush.bf16.xpose.msra.mxu0 0
    %1894 = vmatpush.bf16.xpose.msra.mxu0 0
    %1895 = vmatpush.bf16.xpose.msra.mxu0 0
    %1896 = vmatpush.bf16.xpose.msra.mxu0 0
    %1897 = vmatpush.bf16.xpose.msra.mxu0 0
    %1898 = vmatpush.bf16.xpose.msra.mxu0 0
    %1899 = vmatpush.bf16.xpose.msra.mxu0 %v1890
    %1900 = vmatmul.bf16.gmra.mxu0 %v1887
    %v1901 = vpop.f32.mrf.mxu0
    %v1902 = vadd.f32 0.0, %v1901
    %v1903 = vpop.f32.mrf.mxu0
    %1904 = vdwg.mxu0
    %v1906 = vunpack.c.l.b16 %v1275
    %v1907 = vpack.c.b16 %v1906, %v1906
    %1908 = vrot.lane.b32.xlu0 %v1907, 64
    %v1909 = vpop.permute.xlu0 %1908
    %v1911 = vunpack.c.l.b16 %v1283
    %v1912 = vpack.c.b16 %v1911, %v1911
    %1913 = vrot.lane.b32.xlu0 %v1912, 64
    %v1914 = vpop.permute.xlu0 %1913
    %v1916 = vsel %vm188, %v1909, 0
    %v1919 = vsel %vm188, %v1914, 0
    %1921 = vmatpush.bf16.xpose.msra.mxu0 0
    %1922 = vmatpush.bf16.xpose.msra.mxu0 0
    %1923 = vmatpush.bf16.xpose.msra.mxu0 0
    %1924 = vmatpush.bf16.xpose.msra.mxu0 0
    %1925 = vmatpush.bf16.xpose.msra.mxu0 0
    %1926 = vmatpush.bf16.xpose.msra.mxu0 0
    %1927 = vmatpush.bf16.xpose.msra.mxu0 0
    %1928 = vmatpush.bf16.xpose.msra.mxu0 %v1919
    %1929 = vmatmul.bf16.gmra.mxu0 %v1916
    %v1930 = vpop.f32.mrf.mxu0
    %v1931 = vadd.f32 0.0, %v1930
    %v1932 = vpop.f32.mrf.mxu0
    %1933 = vdwg.mxu0
    %v1934 = vsel %vm1444, %v1728, -inf
    %1935 = vmax.xlane.f32.xlu0 %v1934
    %v1936 = vpop.xlane.xlu0 %1935
    %v1937 = vsel %vm1444, %v1757, -inf
    %1938 = vmax.xlane.f32.xlu0 %v1937
    %v1939 = vpop.xlane.xlu0 %1938
    %v1940 = vsel %vm1444, %v1786, -inf
    %1941 = vmax.xlane.f32.xlu0 %v1940
    %v1942 = vpop.xlane.xlu0 %1941
    %v1943 = vsel %vm1444, %v1815, -inf
    %1944 = vmax.xlane.f32.xlu0 %v1943
    %v1945 = vpop.xlane.xlu0 %1944
    %v1946 = vsel %vm1444, %v1844, -inf
    %1947 = vmax.xlane.f32.xlu0 %v1946
    %v1948 = vpop.xlane.xlu0 %1947
    %v1949 = vsel %vm1444, %v1873, -inf
    %1950 = vmax.xlane.f32.xlu0 %v1949
    %v1951 = vpop.xlane.xlu0 %1950
    %v1952 = vsel %vm1444, %v1902, -inf
    %1953 = vmax.xlane.f32.xlu0 %v1952
    %v1954 = vpop.xlane.xlu0 %1953
    %v1955 = vsel %vm1444, %v1931, -inf
    %1956 = vmax.xlane.f32.xlu0 %v1955
    %v1957 = vpop.xlane.xlu0 %1956
    %v1958 = vsub.f32 %v1728, %v1936
    %v1959 = vsub.f32 %v1757, %v1939
    %v1960 = vsub.f32 %v1786, %v1942
    %v1961 = vsub.f32 %v1815, %v1945
    %v1962 = vsub.f32 %v1844, %v1948
    %v1963 = vsub.f32 %v1873, %v1951
    %v1964 = vsub.f32 %v1902, %v1954
    %v1965 = vsub.f32 %v1931, %v1957
    %v1966 = vmul.f32 %v1958, 1.442695
    %v1967 = vpow.pop %v1966
    %v1968 = vmul.f32 %v1959, 1.442695
    %v1969 = vpow.pop %v1968
    %v1970 = vmul.f32 %v1960, 1.442695
    %v1971 = vpow.pop %v1970
    %v1972 = vmul.f32 %v1961, 1.442695
    %v1973 = vpow.pop %v1972
    %v1974 = vmul.f32 %v1962, 1.442695
    %v1975 = vpow.pop %v1974
    %v1976 = vmul.f32 %v1963, 1.442695
    %v1977 = vpow.pop %v1976
    %v1978 = vmul.f32 %v1964, 1.442695
    %v1979 = vpow.pop %v1978
    %v1980 = vmul.f32 %v1965, 1.442695
    %v1981 = vpow.pop %v1980
    %v1982 = vsel %vm1444, %v1967, 0.0
    %1983 = vadd.xlane.f32.xlu0 %v1982
    %v1984 = vpop.xlane.xlu0 %1983
    %v1985 = vsel %vm1444, %v1969, 0.0
    %1986 = vadd.xlane.f32.xlu0 %v1985
    %v1987 = vpop.xlane.xlu0 %1986
    %v1988 = vsel %vm1444, %v1971, 0.0
    %1989 = vadd.xlane.f32.xlu0 %v1988
    %v1990 = vpop.xlane.xlu0 %1989
    %v1991 = vsel %vm1444, %v1973, 0.0
    %1992 = vadd.xlane.f32.xlu0 %v1991
    %v1993 = vpop.xlane.xlu0 %1992
    %v1994 = vsel %vm1444, %v1975, 0.0
    %1995 = vadd.xlane.f32.xlu0 %v1994
    %v1996 = vpop.xlane.xlu0 %1995
    %v1997 = vsel %vm1444, %v1977, 0.0
    %1998 = vadd.xlane.f32.xlu0 %v1997
    %v1999 = vpop.xlane.xlu0 %1998
    %v2000 = vsel %vm1444, %v1979, 0.0
    %2001 = vadd.xlane.f32.xlu0 %v2000
    %v2002 = vpop.xlane.xlu0 %2001
    %v2003 = vsel %vm1444, %v1981, 0.0
    %2004 = vadd.xlane.f32.xlu0 %v2003
    %v2005 = vpop.xlane.xlu0 %2004
    %v2006 = vrcp.pop %v1984
    %v2007 = vrcp.pop %v1987
    %v2008 = vrcp.pop %v1990
    %v2009 = vrcp.pop %v1993
    %v2010 = vrcp.pop %v1996
    %v2011 = vrcp.pop %v1999
    %v2012 = vrcp.pop %v2002
    %v2013 = vrcp.pop %v2005
    %v2014 = vmul.f32 %v1967, %v2006
    %v2015 = vmul.f32 %v1969, %v2007
    %v2016 = vmul.f32 %v1971, %v2008
    %v2017 = vmul.f32 %v1973, %v2009
    %v2018 = vmul.f32 %v1975, %v2010
    %v2019 = vmul.f32 %v1977, %v2011
    %v2020 = vmul.f32 %v1979, %v2012
    %v2021 = vmul.f32 %v1981, %v2013
    %v2022 = vpack.c.bf16 %v2014, %v2014
    %v2023 = vpack.c.bf16 %v2015, %v2015
    %v2024 = vpack.c.bf16 %v2016, %v2016
    %v2025 = vpack.c.bf16 %v2017, %v2017
    %v2026 = vpack.c.bf16 %v2018, %v2018
    %v2027 = vpack.c.bf16 %v2019, %v2019
    %v2028 = vpack.c.bf16 %v2020, %v2020
    %v2029 = vpack.c.bf16 %v2021, %v2021
    %v2031 = vunpack.c.l.b16 %v1284
    %v2032 = vpack.c.b16 %v2031, %v2031
    %2033 = vrot.lane.b32.xlu0 %v2032, 64
    %v2034 = vpop.permute.xlu0 %2033
    %v2036 = vsel %vm1444, %v2022, 0
    %v2039 = vsel %vm1544, %v2034, 0
    %2041 = vmatpush.bf16.msra.mxu0 0
    %2042 = vmatpush.bf16.msra.mxu0 0
    %2043 = vmatpush.bf16.msra.mxu0 0
    %2044 = vmatpush.bf16.msra.mxu0 0
    %2045 = vmatpush.bf16.msra.mxu0 0
    %2046 = vmatpush.bf16.msra.mxu0 0
    %2047 = vmatpush.bf16.msra.mxu0 0
    %2048 = vmatpush.bf16.msra.mxu0 %v2039
    %2049 = vmatmul.bf16.gmra.mxu0 %v2036
    %v2050 = vpop.f32.mrf.mxu0
    %v2051 = vadd.f32 0.0, %v2050
    %v2052 = vpop.f32.mrf.mxu0
    %2053 = vdwg.mxu0
    %v2055 = vunpack.c.l.b16 %v1285
    %v2056 = vpack.c.b16 %v2055, %v2055
    %2057 = vrot.lane.b32.xlu0 %v2056, 64
    %v2058 = vpop.permute.xlu0 %2057
    %v2060 = vsel %vm1444, %v2023, 0
    %v2063 = vsel %vm1544, %v2058, 0
    %2065 = vmatpush.bf16.msra.mxu0 0
    %2066 = vmatpush.bf16.msra.mxu0 0
    %2067 = vmatpush.bf16.msra.mxu0 0
    %2068 = vmatpush.bf16.msra.mxu0 0
    %2069 = vmatpush.bf16.msra.mxu0 0
    %2070 = vmatpush.bf16.msra.mxu0 0
    %2071 = vmatpush.bf16.msra.mxu0 0
    %2072 = vmatpush.bf16.msra.mxu0 %v2063
    %2073 = vmatmul.bf16.gmra.mxu0 %v2060
    %v2074 = vpop.f32.mrf.mxu0
    %v2075 = vadd.f32 0.0, %v2074
    %v2076 = vpop.f32.mrf.mxu0
    %2077 = vdwg.mxu0
    %v2079 = vunpack.c.l.b16 %v1286
    %v2080 = vpack.c.b16 %v2079, %v2079
    %2081 = vrot.lane.b32.xlu0 %v2080, 64
    %v2082 = vpop.permute.xlu0 %2081
    %v2084 = vsel %vm1444, %v2024, 0
    %v2087 = vsel %vm1544, %v2082, 0
    %2089 = vmatpush.bf16.msra.mxu0 0
    %2090 = vmatpush.bf16.msra.mxu0 0
    %2091 = vmatpush.bf16.msra.mxu0 0
    %2092 = vmatpush.bf16.msra.mxu0 0
    %2093 = vmatpush.bf16.msra.mxu0 0
    %2094 = vmatpush.bf16.msra.mxu0 0
    %2095 = vmatpush.bf16.msra.mxu0 0
    %2096 = vmatpush.bf16.msra.mxu0 %v2087
    %2097 = vmatmul.bf16.gmra.mxu0 %v2084
    %v2098 = vpop.f32.mrf.mxu0
    %v2099 = vadd.f32 0.0, %v2098
    %v2100 = vpop.f32.mrf.mxu0
    %2101 = vdwg.mxu0
    %v2103 = vunpack.c.l.b16 %v1287
    %v2104 = vpack.c.b16 %v2103, %v2103
    %2105 = vrot.lane.b32.xlu0 %v2104, 64
    %v2106 = vpop.permute.xlu0 %2105
    %v2108 = vsel %vm1444, %v2025, 0
    %v2111 = vsel %vm1544, %v2106, 0
    %2113 = vmatpush.bf16.msra.mxu0 0
    %2114 = vmatpush.bf16.msra.mxu0 0
    %2115 = vmatpush.bf16.msra.mxu0 0
    %2116 = vmatpush.bf16.msra.mxu0 0
    %2117 = vmatpush.bf16.msra.mxu0 0
    %2118 = vmatpush.bf16.msra.mxu0 0
    %2119 = vmatpush.bf16.msra.mxu0 0
    %2120 = vmatpush.bf16.msra.mxu0 %v2111
    %2121 = vmatmul.bf16.gmra.mxu0 %v2108
    %v2122 = vpop.f32.mrf.mxu0
    %v2123 = vadd.f32 0.0, %v2122
    %v2124 = vpop.f32.mrf.mxu0
    %2125 = vdwg.mxu0
    %v2127 = vunpack.c.l.b16 %v1288
    %v2128 = vpack.c.b16 %v2127, %v2127
    %2129 = vrot.lane.b32.xlu0 %v2128, 64
    %v2130 = vpop.permute.xlu0 %2129
    %v2132 = vsel %vm1444, %v2026, 0
    %v2135 = vsel %vm1544, %v2130, 0
    %2137 = vmatpush.bf16.msra.mxu0 0
    %2138 = vmatpush.bf16.msra.mxu0 0
    %2139 = vmatpush.bf16.msra.mxu0 0
    %2140 = vmatpush.bf16.msra.mxu0 0
    %2141 = vmatpush.bf16.msra.mxu0 0
    %2142 = vmatpush.bf16.msra.mxu0 0
    %2143 = vmatpush.bf16.msra.mxu0 0
    %2144 = vmatpush.bf16.msra.mxu0 %v2135
    %2145 = vmatmul.bf16.gmra.mxu0 %v2132
    %v2146 = vpop.f32.mrf.mxu0
    %v2147 = vadd.f32 0.0, %v2146
    %v2148 = vpop.f32.mrf.mxu0
    %2149 = vdwg.mxu0
    %v2151 = vunpack.c.l.b16 %v1289
    %v2152 = vpack.c.b16 %v2151, %v2151
    %2153 = vrot.lane.b32.xlu0 %v2152, 64
    %v2154 = vpop.permute.xlu0 %2153
    %v2156 = vsel %vm1444, %v2027, 0
    %v2159 = vsel %vm1544, %v2154, 0
    %2161 = vmatpush.bf16.msra.mxu0 0
    %2162 = vmatpush.bf16.msra.mxu0 0
    %2163 = vmatpush.bf16.msra.mxu0 0
    %2164 = vmatpush.bf16.msra.mxu0 0
    %2165 = vmatpush.bf16.msra.mxu0 0
    %2166 = vmatpush.bf16.msra.mxu0 0
    %2167 = vmatpush.bf16.msra.mxu0 0
    %2168 = vmatpush.bf16.msra.mxu0 %v2159
    %2169 = vmatmul.bf16.gmra.mxu0 %v2156
    %v2170 = vpop.f32.mrf.mxu0
    %v2171 = vadd.f32 0.0, %v2170
    %v2172 = vpop.f32.mrf.mxu0
    %2173 = vdwg.mxu0
    %v2175 = vunpack.c.l.b16 %v1290
    %v2176 = vpack.c.b16 %v2175, %v2175
    %2177 = vrot.lane.b32.xlu0 %v2176, 64
    %v2178 = vpop.permute.xlu0 %2177
    %v2180 = vsel %vm1444, %v2028, 0
    %v2183 = vsel %vm1544, %v2178, 0
    %2185 = vmatpush.bf16.msra.mxu0 0
    %2186 = vmatpush.bf16.msra.mxu0 0
    %2187 = vmatpush.bf16.msra.mxu0 0
    %2188 = vmatpush.bf16.msra.mxu0 0
    %2189 = vmatpush.bf16.msra.mxu0 0
    %2190 = vmatpush.bf16.msra.mxu0 0
    %2191 = vmatpush.bf16.msra.mxu0 0
    %2192 = vmatpush.bf16.msra.mxu0 %v2183
    %2193 = vmatmul.bf16.gmra.mxu0 %v2180
    %v2194 = vpop.f32.mrf.mxu0
    %v2195 = vadd.f32 0.0, %v2194
    %v2196 = vpop.f32.mrf.mxu0
    %2197 = vdwg.mxu0
    %v2199 = vunpack.c.l.b16 %v1291
    %v2200 = vpack.c.b16 %v2199, %v2199
    %2201 = vrot.lane.b32.xlu0 %v2200, 64
    %v2202 = vpop.permute.xlu0 %2201
    %v2204 = vsel %vm1444, %v2029, 0
    %v2207 = vsel %vm1544, %v2202, 0
    %2209 = vmatpush.bf16.msra.mxu0 0
    %2210 = vmatpush.bf16.msra.mxu0 0
    %2211 = vmatpush.bf16.msra.mxu0 0
    %2212 = vmatpush.bf16.msra.mxu0 0
    %2213 = vmatpush.bf16.msra.mxu0 0
    %2214 = vmatpush.bf16.msra.mxu0 0
    %2215 = vmatpush.bf16.msra.mxu0 0
    %2216 = vmatpush.bf16.msra.mxu0 %v2207
    %2217 = vmatmul.bf16.gmra.mxu0 %v2204
    %v2218 = vpop.f32.mrf.mxu0
    %v2219 = vadd.f32 0.0, %v2218
    %v2220 = vpop.f32.mrf.mxu0
    %2221 = vdwg.mxu0
    %v2222 = vpack.c.bf16 %v2051, %v2051
    %v2223 = vpack.c.bf16 %v2075, %v2075
    %v2224 = vpack.c.bf16 %v2099, %v2099
    %v2225 = vpack.c.bf16 %v2123, %v2123
    %v2226 = vpack.c.bf16 %v2147, %v2147
    %v2227 = vpack.c.bf16 %v2171, %v2171
    %v2228 = vpack.c.bf16 %v2195, %v2195
    %v2229 = vpack.c.bf16 %v2219, %v2219
    %v2230 = vpack.c.bf16 %v1017, %v1017
    %v2231 = vpack.c.bf16 %v1019, %v1019
    %v2232 = vpack.c.bf16 %v1022, %v1022
    %v2233 = vpack.c.bf16 %v1024, %v1024
    %v2234 = vpack.c.bf16 %v1027, %v1027
    %v2235 = vpack.c.bf16 %v1029, %v1029
    %v2236 = vpack.c.bf16 %v1032, %v1032
    %v2237 = vpack.c.bf16 %v1034, %v1034
    %v2238 = vpack.c.bf16 %v1133, %v1133
    %v2239 = vpack.c.bf16 %v1135, %v1135
    %v2240 = vpack.c.bf16 %v1138, %v1138
    %v2241 = vpack.c.bf16 %v1140, %v1140
    %v2242 = vpack.c.bf16 %v1143, %v1143
    %v2243 = vpack.c.bf16 %v1145, %v1145
    %v2244 = vpack.c.bf16 %v1148, %v1148
    %v2245 = vpack.c.bf16 %v1150, %v1150
    %v2246 = vpack.c.bf16 %v1249, %v1249
    %v2247 = vpack.c.bf16 %v1251, %v1251
    %v2248 = vpack.c.bf16 %v1254, %v1254
    %v2249 = vpack.c.bf16 %v1256, %v1256
    %v2250 = vpack.c.bf16 %v1259, %v1259
    %v2251 = vpack.c.bf16 %v1261, %v1261
    %v2252 = vpack.c.bf16 %v1264, %v1264
    %v2253 = vpack.c.bf16 %v1266, %v1266
    %v2255 = vsel %vm188, %v2230, 0
    %v2258 = vsel %vm188, %v2238, 0
    %2260 = vmatpush.bf16.xpose.msra.mxu0 0
    %2261 = vmatpush.bf16.xpose.msra.mxu0 0
    %2262 = vmatpush.bf16.xpose.msra.mxu0 0
    %2263 = vmatpush.bf16.xpose.msra.mxu0 0
    %2264 = vmatpush.bf16.xpose.msra.mxu0 0
    %2265 = vmatpush.bf16.xpose.msra.mxu0 0
    %2266 = vmatpush.bf16.xpose.msra.mxu0 0
    %2267 = vmatpush.bf16.xpose.msra.mxu0 %v2258
    %2268 = vmatmul.bf16.gmra.mxu0 %v2255
    %v2269 = vpop.f32.mrf.mxu0
    %v2270 = vadd.f32 0.0, %v2269
    %v2271 = vpop.f32.mrf.mxu0
    %2272 = vdwg.mxu0
    %v2274 = vsel %vm188, %v2231, 0
    %v2277 = vsel %vm188, %v2239, 0
    %2279 = vmatpush.bf16.xpose.msra.mxu0 0
    %2280 = vmatpush.bf16.xpose.msra.mxu0 0
    %2281 = vmatpush.bf16.xpose.msra.mxu0 0
    %2282 = vmatpush.bf16.xpose.msra.mxu0 0
    %2283 = vmatpush.bf16.xpose.msra.mxu0 0
    %2284 = vmatpush.bf16.xpose.msra.mxu0 0
    %2285 = vmatpush.bf16.xpose.msra.mxu0 0
    %2286 = vmatpush.bf16.xpose.msra.mxu0 %v2277
    %2287 = vmatmul.bf16.gmra.mxu0 %v2274
    %v2288 = vpop.f32.mrf.mxu0
    %v2289 = vadd.f32 0.0, %v2288
    %v2290 = vpop.f32.mrf.mxu0
    %2291 = vdwg.mxu0
    %v2293 = vsel %vm188, %v2232, 0
    %v2296 = vsel %vm188, %v2240, 0
    %2298 = vmatpush.bf16.xpose.msra.mxu0 0
    %2299 = vmatpush.bf16.xpose.msra.mxu0 0
    %2300 = vmatpush.bf16.xpose.msra.mxu0 0
    %2301 = vmatpush.bf16.xpose.msra.mxu0 0
    %2302 = vmatpush.bf16.xpose.msra.mxu0 0
    %2303 = vmatpush.bf16.xpose.msra.mxu0 0
    %2304 = vmatpush.bf16.xpose.msra.mxu0 0
    %2305 = vmatpush.bf16.xpose.msra.mxu0 %v2296
    %2306 = vmatmul.bf16.gmra.mxu0 %v2293
    %v2307 = vpop.f32.mrf.mxu0
    %v2308 = vadd.f32 0.0, %v2307
    %v2309 = vpop.f32.mrf.mxu0
    %2310 = vdwg.mxu0
    %v2312 = vsel %vm188, %v2233, 0
    %v2315 = vsel %vm188, %v2241, 0
    %2317 = vmatpush.bf16.xpose.msra.mxu0 0
    %2318 = vmatpush.bf16.xpose.msra.mxu0 0
    %2319 = vmatpush.bf16.xpose.msra.mxu0 0
    %2320 = vmatpush.bf16.xpose.msra.mxu0 0
    %2321 = vmatpush.bf16.xpose.msra.mxu0 0
    %2322 = vmatpush.bf16.xpose.msra.mxu0 0
    %2323 = vmatpush.bf16.xpose.msra.mxu0 0
    %2324 = vmatpush.bf16.xpose.msra.mxu0 %v2315
    %2325 = vmatmul.bf16.gmra.mxu0 %v2312
    %v2326 = vpop.f32.mrf.mxu0
    %v2327 = vadd.f32 0.0, %v2326
    %v2328 = vpop.f32.mrf.mxu0
    %2329 = vdwg.mxu0
    %v2331 = vsel %vm188, %v2234, 0
    %v2334 = vsel %vm188, %v2242, 0
    %2336 = vmatpush.bf16.xpose.msra.mxu0 0
    %2337 = vmatpush.bf16.xpose.msra.mxu0 0
    %2338 = vmatpush.bf16.xpose.msra.mxu0 0
    %2339 = vmatpush.bf16.xpose.msra.mxu0 0
    %2340 = vmatpush.bf16.xpose.msra.mxu0 0
    %2341 = vmatpush.bf16.xpose.msra.mxu0 0
    %2342 = vmatpush.bf16.xpose.msra.mxu0 0
    %2343 = vmatpush.bf16.xpose.msra.mxu0 %v2334
    %2344 = vmatmul.bf16.gmra.mxu0 %v2331
    %v2345 = vpop.f32.mrf.mxu0
    %v2346 = vadd.f32 0.0, %v2345
    %v2347 = vpop.f32.mrf.mxu0
    %2348 = vdwg.mxu0
    %v2350 = vsel %vm188, %v2235, 0
    %v2353 = vsel %vm188, %v2243, 0
    %2355 = vmatpush.bf16.xpose.msra.mxu0 0
    %2356 = vmatpush.bf16.xpose.msra.mxu0 0
    %2357 = vmatpush.bf16.xpose.msra.mxu0 0
    %2358 = vmatpush.bf16.xpose.msra.mxu0 0
    %2359 = vmatpush.bf16.xpose.msra.mxu0 0
    %2360 = vmatpush.bf16.xpose.msra.mxu0 0
    %2361 = vmatpush.bf16.xpose.msra.mxu0 0
    %2362 = vmatpush.bf16.xpose.msra.mxu0 %v2353
    %2363 = vmatmul.bf16.gmra.mxu0 %v2350
    %v2364 = vpop.f32.mrf.mxu0
    %v2365 = vadd.f32 0.0, %v2364
    %v2366 = vpop.f32.mrf.mxu0
    %2367 = vdwg.mxu0
    %v2369 = vsel %vm188, %v2236, 0
    %v2372 = vsel %vm188, %v2244, 0
    %2374 = vmatpush.bf16.xpose.msra.mxu0 0
    %2375 = vmatpush.bf16.xpose.msra.mxu0 0
    %2376 = vmatpush.bf16.xpose.msra.mxu0 0
    %2377 = vmatpush.bf16.xpose.msra.mxu0 0
    %2378 = vmatpush.bf16.xpose.msra.mxu0 0
    %2379 = vmatpush.bf16.xpose.msra.mxu0 0
    %2380 = vmatpush.bf16.xpose.msra.mxu0 0
    %2381 = vmatpush.bf16.xpose.msra.mxu0 %v2372
    %2382 = vmatmul.bf16.gmra.mxu0 %v2369
    %v2383 = vpop.f32.mrf.mxu0
    %v2384 = vadd.f32 0.0, %v2383
    %v2385 = vpop.f32.mrf.mxu0
    %2386 = vdwg.mxu0
    %v2388 = vsel %vm188, %v2237, 0
    %v2391 = vsel %vm188, %v2245, 0
    %2393 = vmatpush.bf16.xpose.msra.mxu0 0
    %2394 = vmatpush.bf16.xpose.msra.mxu0 0
    %2395 = vmatpush.bf16.xpose.msra.mxu0 0
    %2396 = vmatpush.bf16.xpose.msra.mxu0 0
    %2397 = vmatpush.bf16.xpose.msra.mxu0 0
    %2398 = vmatpush.bf16.xpose.msra.mxu0 0
    %2399 = vmatpush.bf16.xpose.msra.mxu0 0
    %2400 = vmatpush.bf16.xpose.msra.mxu0 %v2391
    %2401 = vmatmul.bf16.gmra.mxu0 %v2388
    %v2402 = vpop.f32.mrf.mxu0
    %v2403 = vadd.f32 0.0, %v2402
    %v2404 = vpop.f32.mrf.mxu0
    %2405 = vdwg.mxu0
    %v2406 = vsel %vm1444, %v2270, -inf
    %2407 = vmax.xlane.f32.xlu0 %v2406
    %v2408 = vpop.xlane.xlu0 %2407
    %v2409 = vsel %vm1444, %v2289, -inf
    %2410 = vmax.xlane.f32.xlu0 %v2409
    %v2411 = vpop.xlane.xlu0 %2410
    %v2412 = vsel %vm1444, %v2308, -inf
    %2413 = vmax.xlane.f32.xlu0 %v2412
    %v2414 = vpop.xlane.xlu0 %2413
    %v2415 = vsel %vm1444, %v2327, -inf
    %2416 = vmax.xlane.f32.xlu0 %v2415
    %v2417 = vpop.xlane.xlu0 %2416
    %v2418 = vsel %vm1444, %v2346, -inf
    %2419 = vmax.xlane.f32.xlu0 %v2418
    %v2420 = vpop.xlane.xlu0 %2419
    %v2421 = vsel %vm1444, %v2365, -inf
    %2422 = vmax.xlane.f32.xlu0 %v2421
    %v2423 = vpop.xlane.xlu0 %2422
    %v2424 = vsel %vm1444, %v2384, -inf
    %2425 = vmax.xlane.f32.xlu0 %v2424
    %v2426 = vpop.xlane.xlu0 %2425
    %v2427 = vsel %vm1444, %v2403, -inf
    %2428 = vmax.xlane.f32.xlu0 %v2427
    %v2429 = vpop.xlane.xlu0 %2428
    %v2430 = vsub.f32 %v2270, %v2408
    %v2431 = vsub.f32 %v2289, %v2411
    %v2432 = vsub.f32 %v2308, %v2414
    %v2433 = vsub.f32 %v2327, %v2417
    %v2434 = vsub.f32 %v2346, %v2420
    %v2435 = vsub.f32 %v2365, %v2423
    %v2436 = vsub.f32 %v2384, %v2426
    %v2437 = vsub.f32 %v2403, %v2429
    %v2438 = vmul.f32 %v2430, 1.442695
    %v2439 = vpow.pop %v2438
    %v2440 = vmul.f32 %v2431, 1.442695
    %v2441 = vpow.pop %v2440
    %v2442 = vmul.f32 %v2432, 1.442695
    %v2443 = vpow.pop %v2442
    %v2444 = vmul.f32 %v2433, 1.442695
    %v2445 = vpow.pop %v2444
    %v2446 = vmul.f32 %v2434, 1.442695
    %v2447 = vpow.pop %v2446
    %v2448 = vmul.f32 %v2435, 1.442695
    %v2449 = vpow.pop %v2448
    %v2450 = vmul.f32 %v2436, 1.442695
    %v2451 = vpow.pop %v2450
    %v2452 = vmul.f32 %v2437, 1.442695
    %v2453 = vpow.pop %v2452
    %v2454 = vsel %vm1444, %v2439, 0.0
    %2455 = vadd.xlane.f32.xlu0 %v2454
    %v2456 = vpop.xlane.xlu0 %2455
    %v2457 = vsel %vm1444, %v2441, 0.0
    %2458 = vadd.xlane.f32.xlu0 %v2457
    %v2459 = vpop.xlane.xlu0 %2458
    %v2460 = vsel %vm1444, %v2443, 0.0
    %2461 = vadd.xlane.f32.xlu0 %v2460
    %v2462 = vpop.xlane.xlu0 %2461
    %v2463 = vsel %vm1444, %v2445, 0.0
    %2464 = vadd.xlane.f32.xlu0 %v2463
    %v2465 = vpop.xlane.xlu0 %2464
    %v2466 = vsel %vm1444, %v2447, 0.0
    %2467 = vadd.xlane.f32.xlu0 %v2466
    %v2468 = vpop.xlane.xlu0 %2467
    %v2469 = vsel %vm1444, %v2449, 0.0
    %2470 = vadd.xlane.f32.xlu0 %v2469
    %v2471 = vpop.xlane.xlu0 %2470
    %v2472 = vsel %vm1444, %v2451, 0.0
    %2473 = vadd.xlane.f32.xlu0 %v2472
    %v2474 = vpop.xlane.xlu0 %2473
    %v2475 = vsel %vm1444, %v2453, 0.0
    %2476 = vadd.xlane.f32.xlu0 %v2475
    %v2477 = vpop.xlane.xlu0 %2476
    %v2478 = vrcp.pop %v2456
    %v2479 = vrcp.pop %v2459
    %v2480 = vrcp.pop %v2462
    %v2481 = vrcp.pop %v2465
    %v2482 = vrcp.pop %v2468
    %v2483 = vrcp.pop %v2471
    %v2484 = vrcp.pop %v2474
    %v2485 = vrcp.pop %v2477
    %v2486 = vmul.f32 %v2439, %v2478
    %v2487 = vmul.f32 %v2441, %v2479
    %v2488 = vmul.f32 %v2443, %v2480
    %v2489 = vmul.f32 %v2445, %v2481
    %v2490 = vmul.f32 %v2447, %v2482
    %v2491 = vmul.f32 %v2449, %v2483
    %v2492 = vmul.f32 %v2451, %v2484
    %v2493 = vmul.f32 %v2453, %v2485
    %v2494 = vpack.c.bf16 %v2486, %v2486
    %v2495 = vpack.c.bf16 %v2487, %v2487
    %v2496 = vpack.c.bf16 %v2488, %v2488
    %v2497 = vpack.c.bf16 %v2489, %v2489
    %v2498 = vpack.c.bf16 %v2490, %v2490
    %v2499 = vpack.c.bf16 %v2491, %v2491
    %v2500 = vpack.c.bf16 %v2492, %v2492
    %v2501 = vpack.c.bf16 %v2493, %v2493
    %v2503 = vsel %vm1444, %v2494, 0
    %v2506 = vsel %vm1544, %v2246, 0
    %2508 = vmatpush.bf16.msra.mxu0 0
    %2509 = vmatpush.bf16.msra.mxu0 0
    %2510 = vmatpush.bf16.msra.mxu0 0
    %2511 = vmatpush.bf16.msra.mxu0 0
    %2512 = vmatpush.bf16.msra.mxu0 0
    %2513 = vmatpush.bf16.msra.mxu0 0
    %2514 = vmatpush.bf16.msra.mxu0 0
    %2515 = vmatpush.bf16.msra.mxu0 %v2506
    %2516 = vmatmul.bf16.gmra.mxu0 %v2503
    %v2517 = vpop.f32.mrf.mxu0
    %v2518 = vadd.f32 0.0, %v2517
    %v2519 = vpop.f32.mrf.mxu0
    %2520 = vdwg.mxu0
    %v2522 = vsel %vm1444, %v2495, 0
    %v2525 = vsel %vm1544, %v2247, 0
    %2527 = vmatpush.bf16.msra.mxu0 0
    %2528 = vmatpush.bf16.msra.mxu0 0
    %2529 = vmatpush.bf16.msra.mxu0 0
    %2530 = vmatpush.bf16.msra.mxu0 0
    %2531 = vmatpush.bf16.msra.mxu0 0
    %2532 = vmatpush.bf16.msra.mxu0 0
    %2533 = vmatpush.bf16.msra.mxu0 0
    %2534 = vmatpush.bf16.msra.mxu0 %v2525
    %2535 = vmatmul.bf16.gmra.mxu0 %v2522
    %v2536 = vpop.f32.mrf.mxu0
    %v2537 = vadd.f32 0.0, %v2536
    %v2538 = vpop.f32.mrf.mxu0
    %2539 = vdwg.mxu0
    %v2541 = vsel %vm1444, %v2496, 0
    %v2544 = vsel %vm1544, %v2248, 0
    %2546 = vmatpush.bf16.msra.mxu0 0
    %2547 = vmatpush.bf16.msra.mxu0 0
    %2548 = vmatpush.bf16.msra.mxu0 0
    %2549 = vmatpush.bf16.msra.mxu0 0
    %2550 = vmatpush.bf16.msra.mxu0 0
    %2551 = vmatpush.bf16.msra.mxu0 0
    %2552 = vmatpush.bf16.msra.mxu0 0
    %2553 = vmatpush.bf16.msra.mxu0 %v2544
    %2554 = vmatmul.bf16.gmra.mxu0 %v2541
    %v2555 = vpop.f32.mrf.mxu0
    %v2556 = vadd.f32 0.0, %v2555
    %v2557 = vpop.f32.mrf.mxu0
    %2558 = vdwg.mxu0
    %v2560 = vsel %vm1444, %v2497, 0
    %v2563 = vsel %vm1544, %v2249, 0
    %2565 = vmatpush.bf16.msra.mxu0 0
    %2566 = vmatpush.bf16.msra.mxu0 0
    %2567 = vmatpush.bf16.msra.mxu0 0
    %2568 = vmatpush.bf16.msra.mxu0 0
    %2569 = vmatpush.bf16.msra.mxu0 0
    %2570 = vmatpush.bf16.msra.mxu0 0
    %2571 = vmatpush.bf16.msra.mxu0 0
    %2572 = vmatpush.bf16.msra.mxu0 %v2563
    %2573 = vmatmul.bf16.gmra.mxu0 %v2560
    %v2574 = vpop.f32.mrf.mxu0
    %v2575 = vadd.f32 0.0, %v2574
    %v2576 = vpop.f32.mrf.mxu0
    %2577 = vdwg.mxu0
    %v2579 = vsel %vm1444, %v2498, 0
    %v2582 = vsel %vm1544, %v2250, 0
    %2584 = vmatpush.bf16.msra.mxu0 0
    %2585 = vmatpush.bf16.msra.mxu0 0
    %2586 = vmatpush.bf16.msra.mxu0 0
    %2587 = vmatpush.bf16.msra.mxu0 0
    %2588 = vmatpush.bf16.msra.mxu0 0
    %2589 = vmatpush.bf16.msra.mxu0 0
    %2590 = vmatpush.bf16.msra.mxu0 0
    %2591 = vmatpush.bf16.msra.mxu0 %v2582
    %2592 = vmatmul.bf16.gmra.mxu0 %v2579
    %v2593 = vpop.f32.mrf.mxu0
    %v2594 = vadd.f32 0.0, %v2593
    %v2595 = vpop.f32.mrf.mxu0
    %2596 = vdwg.mxu0
    %v2598 = vsel %vm1444, %v2499, 0
    %v2601 = vsel %vm1544, %v2251, 0
    %2603 = vmatpush.bf16.msra.mxu0 0
    %2604 = vmatpush.bf16.msra.mxu0 0
    %2605 = vmatpush.bf16.msra.mxu0 0
    %2606 = vmatpush.bf16.msra.mxu0 0
    %2607 = vmatpush.bf16.msra.mxu0 0
    %2608 = vmatpush.bf16.msra.mxu0 0
    %2609 = vmatpush.bf16.msra.mxu0 0
    %2610 = vmatpush.bf16.msra.mxu0 %v2601
    %2611 = vmatmul.bf16.gmra.mxu0 %v2598
    %v2612 = vpop.f32.mrf.mxu0
    %v2613 = vadd.f32 0.0, %v2612
    %v2614 = vpop.f32.mrf.mxu0
    %2615 = vdwg.mxu0
    %v2617 = vsel %vm1444, %v2500, 0
    %v2620 = vsel %vm1544, %v2252, 0
    %2622 = vmatpush.bf16.msra.mxu0 0
    %2623 = vmatpush.bf16.msra.mxu0 0
    %2624 = vmatpush.bf16.msra.mxu0 0
    %2625 = vmatpush.bf16.msra.mxu0 0
    %2626 = vmatpush.bf16.msra.mxu0 0
    %2627 = vmatpush.bf16.msra.mxu0 0
    %2628 = vmatpush.bf16.msra.mxu0 0
    %2629 = vmatpush.bf16.msra.mxu0 %v2620
    %2630 = vmatmul.bf16.gmra.mxu0 %v2617
    %v2631 = vpop.f32.mrf.mxu0
    %v2632 = vadd.f32 0.0, %v2631
    %v2633 = vpop.f32.mrf.mxu0
    %2634 = vdwg.mxu0
    %v2636 = vsel %vm1444, %v2501, 0
    %v2639 = vsel %vm1544, %v2253, 0
    %2641 = vmatpush.bf16.msra.mxu0 0
    %2642 = vmatpush.bf16.msra.mxu0 0
    %2643 = vmatpush.bf16.msra.mxu0 0
    %2644 = vmatpush.bf16.msra.mxu0 0
    %2645 = vmatpush.bf16.msra.mxu0 0
    %2646 = vmatpush.bf16.msra.mxu0 0
    %2647 = vmatpush.bf16.msra.mxu0 0
    %2648 = vmatpush.bf16.msra.mxu0 %v2639
    %2649 = vmatmul.bf16.gmra.mxu0 %v2636
    %v2650 = vpop.f32.mrf.mxu0
    %v2651 = vadd.f32 0.0, %v2650
    %v2652 = vpop.f32.mrf.mxu0
    %2653 = vdwg.mxu0
    %v2654 = vpack.c.bf16 %v2518, %v2518
    %v2655 = vpack.c.bf16 %v2537, %v2537
    %v2656 = vpack.c.bf16 %v2556, %v2556
    %v2657 = vpack.c.bf16 %v2575, %v2575
    %v2658 = vpack.c.bf16 %v2594, %v2594
    %v2659 = vpack.c.bf16 %v2613, %v2613
    %v2660 = vpack.c.bf16 %v2632, %v2632
    %v2661 = vpack.c.bf16 %v2651, %v2651
    %v2670 = vunpack.c.l.b16 %v2222
    %v2671 = vunpack.c.l.b16 %v2223
    %v2672 = vunpack.c.l.b16 %v2224
    %v2673 = vunpack.c.l.b16 %v2225
    %v2674 = vunpack.c.l.b16 %v2226
    %v2675 = vunpack.c.l.b16 %v2227
    %v2676 = vunpack.c.l.b16 %v2228
    %v2677 = vunpack.c.l.b16 %v2229
    %v2678 = vpack.c.b16 %v2670, %v2670
    %v2679 = vpack.c.b16 %v2671, %v2671
    %v2680 = vpack.c.b16 %v2672, %v2672
    %v2681 = vpack.c.b16 %v2673, %v2673
    %v2682 = vpack.c.b16 %v2674, %v2674
    %v2683 = vpack.c.b16 %v2675, %v2675
    %v2684 = vpack.c.b16 %v2676, %v2676
    %v2685 = vpack.c.b16 %v2677, %v2677
    %2686 = vrot.lane.b32.xlu0 %v2678, 64
    %v2687 = vpop.permute.xlu0 %2686
    %2688 = vrot.lane.b32.xlu0 %v2679, 64
    %v2689 = vpop.permute.xlu0 %2688
    %2690 = vrot.lane.b32.xlu0 %v2680, 64
    %v2691 = vpop.permute.xlu0 %2690
    %2692 = vrot.lane.b32.xlu0 %v2681, 64
    %v2693 = vpop.permute.xlu0 %2692
    %2694 = vrot.lane.b32.xlu0 %v2682, 64
    %v2695 = vpop.permute.xlu0 %2694
    %2696 = vrot.lane.b32.xlu0 %v2683, 64
    %v2697 = vpop.permute.xlu0 %2696
    %2698 = vrot.lane.b32.xlu0 %v2684, 64
    %v2699 = vpop.permute.xlu0 %2698
    %2700 = vrot.lane.b32.xlu0 %v2685, 64
    %v2701 = vpop.permute.xlu0 %2700
    %v2704 = vsel %vm188, %v1694, %v2687
    %v2707 = vsel %vm188, %v1695, %v2689
    %v2710 = vsel %vm188, %v1696, %v2691
    %v2713 = vsel %vm188, %v1697, %v2693
    %v2716 = vsel %vm188, %v1698, %v2695
    %v2719 = vsel %vm188, %v1699, %v2697
    %v2722 = vsel %vm188, %v1700, %v2699
    %v2725 = vsel %vm188, %v1701, %v2701
    %v2742 = vunpack.c.l.b16 %v2704
    %v2743 = vunpack.c.l.b16 %v2654
    %v2744 = vunpack.c.l.b16 %v2707
    %v2745 = vunpack.c.l.b16 %v2655
    %v2746 = vunpack.c.l.b16 %v2710
    %v2747 = vunpack.c.l.b16 %v2656
    %v2748 = vunpack.c.l.b16 %v2713
    %v2749 = vunpack.c.l.b16 %v2657
    %v2750 = vunpack.c.l.b16 %v2716
    %v2751 = vunpack.c.l.b16 %v2658
    %v2752 = vunpack.c.l.b16 %v2719
    %v2753 = vunpack.c.l.b16 %v2659
    %v2754 = vunpack.c.l.b16 %v2722
    %v2755 = vunpack.c.l.b16 %v2660
    %v2756 = vunpack.c.l.b16 %v2725
    %v2757 = vunpack.c.l.b16 %v2661
    %v2758 = vld [vmem:[%s5] sm:$0xff]
    %v2759 = vld [vmem:[%s5 + $0x8] sm:$0xff]
    %v2760 = vld [vmem:[%s5 + $0x10] sm:$0xff]
    %v2761 = vld [vmem:[%s5 + $0x18] sm:$0xff]
    %v2762 = vld [vmem:[%s5 + $0x20] sm:$0xff]
    %v2763 = vld [vmem:[%s5 + $0x28] sm:$0xff]
    %v2764 = vld [vmem:[%s5 + $0x30] sm:$0xff]
    %v2765 = vld [vmem:[%s5 + $0x38] sm:$0xff]
    %v2766 = vld [vmem:[%s5 + $0x40] sm:$0xff]
    %v2767 = vld [vmem:[%s5 + $0x48] sm:$0xff]
    %v2768 = vld [vmem:[%s5 + $0x50] sm:$0xff]
    %v2769 = vld [vmem:[%s5 + $0x58] sm:$0xff]
    %v2770 = vld [vmem:[%s5 + $0x60] sm:$0xff]
    %v2771 = vld [vmem:[%s5 + $0x68] sm:$0xff]
    %v2772 = vld [vmem:[%s5 + $0x70] sm:$0xff]
    %v2773 = vld [vmem:[%s5 + $0x78] sm:$0xff]
    %v2774 = vld [vmem:[%s5 + $0x80] sm:$0xff]
    %v2775 = vld [vmem:[%s5 + $0x88] sm:$0xff]
    %v2776 = vld [vmem:[%s5 + $0x90] sm:$0xff]
    %v2777 = vld [vmem:[%s5 + $0x98] sm:$0xff]
    %v2778 = vld [vmem:[%s5 + $0xa0] sm:$0xff]
    %v2779 = vld [vmem:[%s5 + $0xa8] sm:$0xff]
    %v2780 = vld [vmem:[%s5 + $0xb0] sm:$0xff]
    %v2781 = vld [vmem:[%s5 + $0xb8] sm:$0xff]
    %v2782 = vld [vmem:[#allocation10] sm:$0x3]
    %v2784 = vperm.slane %v2782, 0
    %v2785 = vperm.slane %v2782, 1
    %v2788 = vpack.c.b16 %v2744, %v2742
    %v2789 = vpack.c.b16 %v2745, %v2743
    %v2790 = vpack.c.b16 %v2748, %v2746
    %v2791 = vpack.c.b16 %v2749, %v2747
    %v2792 = vpack.c.b16 %v2752, %v2750
    %v2793 = vpack.c.b16 %v2753, %v2751
    %v2794 = vpack.c.b16 %v2756, %v2754
    %v2795 = vpack.c.b16 %v2757, %v2755
    %v2824 = vunpack.c.l.b16 %v2758
    %v2825 = vunpack.c.h.b16 %v2758
    %v2826 = vunpack.c.l.b16 %v2759
    %v2827 = vunpack.c.h.b16 %v2759
    %v2828 = vunpack.c.l.b16 %v2760
    %v2829 = vunpack.c.h.b16 %v2760
    %v2830 = vunpack.c.l.b16 %v2761
    %v2831 = vunpack.c.h.b16 %v2761
    %v2832 = vunpack.c.l.b16 %v2762
    %v2833 = vunpack.c.h.b16 %v2762
    %v2834 = vunpack.c.l.b16 %v2763
    %v2835 = vunpack.c.h.b16 %v2763
    %v2836 = vunpack.c.l.b16 %v2764
    %v2837 = vunpack.c.h.b16 %v2764
    %v2838 = vunpack.c.l.b16 %v2765
    %v2839 = vunpack.c.h.b16 %v2765
    %v2840 = vunpack.c.l.b16 %v2766
    %v2841 = vunpack.c.h.b16 %v2766
    %v2842 = vunpack.c.l.b16 %v2767
    %v2843 = vunpack.c.h.b16 %v2767
    %v2844 = vunpack.c.l.b16 %v2768
    %v2845 = vunpack.c.h.b16 %v2768
    %v2846 = vunpack.c.l.b16 %v2769
    %v2847 = vunpack.c.h.b16 %v2769
    %v2848 = vunpack.c.l.b16 %v2770
    %v2849 = vunpack.c.h.b16 %v2770
    %v2850 = vunpack.c.l.b16 %v2771
    %v2851 = vunpack.c.h.b16 %v2771
    %v2852 = vunpack.c.l.b16 %v2772
    %v2853 = vunpack.c.h.b16 %v2772
    %v2854 = vunpack.c.l.b16 %v2773
    %v2855 = vunpack.c.h.b16 %v2773
    %v2856 = vunpack.c.l.b16 %v2774
    %v2857 = vunpack.c.h.b16 %v2774
    %v2858 = vunpack.c.l.b16 %v2775
    %v2859 = vunpack.c.h.b16 %v2775
    %v2860 = vunpack.c.l.b16 %v2776
    %v2861 = vunpack.c.h.b16 %v2776
    %v2862 = vunpack.c.l.b16 %v2777
    %v2863 = vunpack.c.h.b16 %v2777
    %v2864 = vunpack.c.l.b16 %v2778
    %v2865 = vunpack.c.h.b16 %v2778
    %v2866 = vunpack.c.l.b16 %v2779
    %v2867 = vunpack.c.h.b16 %v2779
    %v2868 = vunpack.c.l.b16 %v2780
    %v2869 = vunpack.c.h.b16 %v2780
    %v2870 = vunpack.c.l.b16 %v2781
    %v2871 = vunpack.c.h.b16 %v2781
    %v2872 = vpack.c.b16 %v2826, %v2824
    %v2873 = vpack.c.b16 %v2827, %v2825
    %v2874 = vpack.c.b16 %v2830, %v2828
    %v2875 = vpack.c.b16 %v2831, %v2829
    %v2876 = vpack.c.b16 %v2834, %v2832
    %v2877 = vpack.c.b16 %v2835, %v2833
    %v2878 = vpack.c.b16 %v2838, %v2836
    %v2879 = vpack.c.b16 %v2839, %v2837
    %v2880 = vpack.c.b16 %v2842, %v2840
    %v2881 = vpack.c.b16 %v2843, %v2841
    %v2882 = vpack.c.b16 %v2846, %v2844
    %v2883 = vpack.c.b16 %v2847, %v2845
    %v2884 = vpack.c.b16 %v2850, %v2848
    %v2885 = vpack.c.b16 %v2851, %v2849
    %v2886 = vpack.c.b16 %v2854, %v2852
    %v2887 = vpack.c.b16 %v2855, %v2853
    %v2888 = vpack.c.b16 %v2858, %v2856
    %v2889 = vpack.c.b16 %v2859, %v2857
    %v2890 = vpack.c.b16 %v2862, %v2860
    %v2891 = vpack.c.b16 %v2863, %v2861
    %v2892 = vpack.c.b16 %v2866, %v2864
    %v2893 = vpack.c.b16 %v2867, %v2865
    %v2894 = vpack.c.b16 %v2870, %v2868
    %v2895 = vpack.c.b16 %v2871, %v2869
    %v2921 = vsel %vm188, %v2789, 0
    %v2924 = vsel %vm188, %v2791, 0
    %v2927 = vsel %vm188, %v2793, 0
    %v2930 = vsel %vm188, %v2795, 0
    %2932 = vmatpush.bf16.msra.mxu0 %v2886
    %2933 = vmatpush.bf16.msra.mxu0 %v2884
    %2934 = vmatpush.bf16.msra.mxu0 %v2882
    %2935 = vmatpush.bf16.msra.mxu0 %v2880
    %2936 = vmatpush.bf16.msra.mxu0 %v2878
    %2937 = vmatpush.bf16.msra.mxu0 %v2876
    %2938 = vmatpush.bf16.msra.mxu0 %v2874
    %2939 = vmatpush.bf16.msra.mxu0 %v2872
    %2940 = vmatmul.bf16.gmra.mxu0 %v2788
    %v2941 = vpop.f32.mrf.mxu0
    %v2942 = vadd.f32 %v2784, %v2941
    %v2943 = vpop.f32.mrf.mxu0
    %v2944 = vadd.f32 %v2784, %v2943
    %2945 = vmatmul.bf16.gmra.mxu0 %v2790
    %v2946 = vpop.f32.mrf.mxu0
    %v2947 = vadd.f32 %v2784, %v2946
    %v2948 = vpop.f32.mrf.mxu0
    %v2949 = vadd.f32 %v2784, %v2948
    %2950 = vmatmul.bf16.gmra.mxu0 %v2792
    %v2951 = vpop.f32.mrf.mxu0
    %v2952 = vadd.f32 %v2784, %v2951
    %v2953 = vpop.f32.mrf.mxu0
    %v2954 = vadd.f32 %v2784, %v2953
    %2955 = vmatmul.bf16.gmra.mxu0 %v2794
    %v2956 = vpop.f32.mrf.mxu0
    %v2957 = vadd.f32 %v2784, %v2956
    %v2958 = vpop.f32.mrf.mxu0
    %v2959 = vadd.f32 %v2784, %v2958
    %2960 = vdwg.mxu0
    %2961 = vmatpush.bf16.msra.mxu0 0
    %2962 = vmatpush.bf16.msra.mxu0 0
    %2963 = vmatpush.bf16.msra.mxu0 0
    %2964 = vmatpush.bf16.msra.mxu0 0
    %2965 = vmatpush.bf16.msra.mxu0 %v2894
    %2966 = vmatpush.bf16.msra.mxu0 %v2892
    %2967 = vmatpush.bf16.msra.mxu0 %v2890
    %2968 = vmatpush.bf16.msra.mxu0 %v2888
    %2969 = vmatmul.bf16.gmra.mxu0 %v2921
    %v2970 = vpop.f32.mrf.mxu0
    %v2971 = vadd.f32 %v2942, %v2970
    %v2972 = vpop.f32.mrf.mxu0
    %v2973 = vadd.f32 %v2944, %v2972
    %2974 = vmatmul.bf16.gmra.mxu0 %v2924
    %v2975 = vpop.f32.mrf.mxu0
    %v2976 = vadd.f32 %v2947, %v2975
    %v2977 = vpop.f32.mrf.mxu0
    %v2978 = vadd.f32 %v2949, %v2977
    %2979 = vmatmul.bf16.gmra.mxu0 %v2927
    %v2980 = vpop.f32.mrf.mxu0
    %v2981 = vadd.f32 %v2952, %v2980
    %v2982 = vpop.f32.mrf.mxu0
    %v2983 = vadd.f32 %v2954, %v2982
    %2984 = vmatmul.bf16.gmra.mxu0 %v2930
    %v2985 = vpop.f32.mrf.mxu0
    %v2986 = vadd.f32 %v2957, %v2985
    %v2987 = vpop.f32.mrf.mxu0
    %v2988 = vadd.f32 %v2959, %v2987
    %2989 = vdwg.mxu0
    %2990 = vmatpush.bf16.msra.mxu0 %v2887
    %2991 = vmatpush.bf16.msra.mxu0 %v2885
    %2992 = vmatpush.bf16.msra.mxu0 %v2883
    %2993 = vmatpush.bf16.msra.mxu0 %v2881
    %2994 = vmatpush.bf16.msra.mxu0 %v2879
    %2995 = vmatpush.bf16.msra.mxu0 %v2877
    %2996 = vmatpush.bf16.msra.mxu0 %v2875
    %2997 = vmatpush.bf16.msra.mxu0 %v2873
    %2998 = vmatmul.bf16.gmra.mxu0 %v2788
    %v2999 = vpop.f32.mrf.mxu0
    %v3000 = vadd.f32 %v2785, %v2999
    %v3001 = vpop.f32.mrf.mxu0
    %v3002 = vadd.f32 %v2785, %v3001
    %3003 = vmatmul.bf16.gmra.mxu0 %v2790
    %v3004 = vpop.f32.mrf.mxu0
    %v3005 = vadd.f32 %v2785, %v3004
    %v3006 = vpop.f32.mrf.mxu0
    %v3007 = vadd.f32 %v2785, %v3006
    %3008 = vmatmul.bf16.gmra.mxu0 %v2792
    %v3009 = vpop.f32.mrf.mxu0
    %v3010 = vadd.f32 %v2785, %v3009
    %v3011 = vpop.f32.mrf.mxu0
    %v3012 = vadd.f32 %v2785, %v3011
    %3013 = vmatmul.bf16.gmra.mxu0 %v2794
    %v3014 = vpop.f32.mrf.mxu0
    %v3015 = vadd.f32 %v2785, %v3014
    %v3016 = vpop.f32.mrf.mxu0
    %v3017 = vadd.f32 %v2785, %v3016
    %3018 = vdwg.mxu0
    %3019 = vmatpush.bf16.msra.mxu0 0
    %3020 = vmatpush.bf16.msra.mxu0 0
    %3021 = vmatpush.bf16.msra.mxu0 0
    %3022 = vmatpush.bf16.msra.mxu0 0
    %3023 = vmatpush.bf16.msra.mxu0 %v2895
    %3024 = vmatpush.bf16.msra.mxu0 %v2893
    %3025 = vmatpush.bf16.msra.mxu0 %v2891
    %3026 = vmatpush.bf16.msra.mxu0 %v2889
    %3027 = vmatmul.bf16.gmra.mxu0 %v2921
    %v3028 = vpop.f32.mrf.mxu0
    %v3029 = vadd.f32 %v3000, %v3028
    %v3030 = vpop.f32.mrf.mxu0
    %v3031 = vadd.f32 %v3002, %v3030
    %3032 = vmatmul.bf16.gmra.mxu0 %v2924
    %v3033 = vpop.f32.mrf.mxu0
    %v3034 = vadd.f32 %v3005, %v3033
    %v3035 = vpop.f32.mrf.mxu0
    %v3036 = vadd.f32 %v3007, %v3035
    %3037 = vmatmul.bf16.gmra.mxu0 %v2927
    %v3038 = vpop.f32.mrf.mxu0
    %v3039 = vadd.f32 %v3010, %v3038
    %v3040 = vpop.f32.mrf.mxu0
    %v3041 = vadd.f32 %v3012, %v3040
    %3042 = vmatmul.bf16.gmra.mxu0 %v2930
    %v3043 = vpop.f32.mrf.mxu0
    %v3044 = vadd.f32 %v3015, %v3043
    %v3045 = vpop.f32.mrf.mxu0
    %v3046 = vadd.f32 %v3017, %v3045
    %3047 = vdwg.mxu0
    %v3048 = vadd.f32 %v170, %v2971
    %v3049 = vadd.f32 %v171, %v3029
    %v3050 = vadd.f32 %v172, %v2973
    %v3051 = vadd.f32 %v173, %v3031
    %v3052 = vadd.f32 %v174, %v2976
    %v3053 = vadd.f32 %v175, %v3034
    %v3054 = vadd.f32 %v176, %v2978
    %v3055 = vadd.f32 %v177, %v3036
    %v3056 = vadd.f32 %v178, %v2981
    %v3057 = vadd.f32 %v179, %v3039
    %v3058 = vadd.f32 %v180, %v2983
    %v3059 = vadd.f32 %v181, %v3041
    %v3060 = vadd.f32 %v182, %v2986
    %v3061 = vadd.f32 %v183, %v3044
    %v3062 = vadd.f32 %v184, %v2988
    %v3063 = vadd.f32 %v185, %v3046
    %v3064 = vld [vmem:[#allocation11] sm:$0x3]
    %v3065 = vld [vmem:[#allocation13] sm:$0x3]
    %v3066 = vsel %vm188, %v3049, 0.0
    %v3067 = vadd.f32 %v3048, %v3066
    %3068 = vadd.xlane.f32.xlu0 %v3067
    %v3069 = vpop.xlane.xlu0 %3068
    %v3070 = vsel %vm188, %v3051, 0.0
    %v3071 = vadd.f32 %v3050, %v3070
    %3072 = vadd.xlane.f32.xlu0 %v3071
    %v3073 = vpop.xlane.xlu0 %3072
    %v3074 = vsel %vm188, %v3053, 0.0
    %v3075 = vadd.f32 %v3052, %v3074
    %3076 = vadd.xlane.f32.xlu0 %v3075
    %v3077 = vpop.xlane.xlu0 %3076
    %v3078 = vsel %vm188, %v3055, 0.0
    %v3079 = vadd.f32 %v3054, %v3078
    %3080 = vadd.xlane.f32.xlu0 %v3079
    %v3081 = vpop.xlane.xlu0 %3080
    %v3082 = vsel %vm188, %v3057, 0.0
    %v3083 = vadd.f32 %v3056, %v3082
    %3084 = vadd.xlane.f32.xlu0 %v3083
    %v3085 = vpop.xlane.xlu0 %3084
    %v3086 = vsel %vm188, %v3059, 0.0
    %v3087 = vadd.f32 %v3058, %v3086
    %3088 = vadd.xlane.f32.xlu0 %v3087
    %v3089 = vpop.xlane.xlu0 %3088
    %v3090 = vsel %vm188, %v3061, 0.0
    %v3091 = vadd.f32 %v3060, %v3090
    %3092 = vadd.xlane.f32.xlu0 %v3091
    %v3093 = vpop.xlane.xlu0 %3092
    %v3094 = vsel %vm188, %v3063, 0.0
    %v3095 = vadd.f32 %v3062, %v3094
    %3096 = vadd.xlane.f32.xlu0 %v3095
    %v3097 = vpop.xlane.xlu0 %3096
    %v3098 = vmul.f32 %v3069, %v227
    %v3099 = vmul.f32 %v3073, %v227
    %v3100 = vmul.f32 %v3077, %v227
    %v3101 = vmul.f32 %v3081, %v227
    %v3102 = vmul.f32 %v3085, %v227
    %v3103 = vmul.f32 %v3089, %v227
    %v3104 = vmul.f32 %v3093, %v227
    %v3105 = vmul.f32 %v3097, %v227
    %v3106 = vsub.f32 %v3048, %v3098
    %v3107 = vsub.f32 %v3049, %v3098
    %v3108 = vsub.f32 %v3050, %v3099
    %v3109 = vsub.f32 %v3051, %v3099
    %v3110 = vsub.f32 %v3052, %v3100
    %v3111 = vsub.f32 %v3053, %v3100
    %v3112 = vsub.f32 %v3054, %v3101
    %v3113 = vsub.f32 %v3055, %v3101
    %v3114 = vsub.f32 %v3056, %v3102
    %v3115 = vsub.f32 %v3057, %v3102
    %v3116 = vsub.f32 %v3058, %v3103
    %v3117 = vsub.f32 %v3059, %v3103
    %v3118 = vsub.f32 %v3060, %v3104
    %v3119 = vsub.f32 %v3061, %v3104
    %v3120 = vsub.f32 %v3062, %v3105
    %v3121 = vsub.f32 %v3063, %v3105
    %v3122 = vmul.f32 %v3106, %v3106
    %v3123 = vmul.f32 %v3107, %v3107
    %v3124 = vmul.f32 %v3108, %v3108
    %v3125 = vmul.f32 %v3109, %v3109
    %v3126 = vmul.f32 %v3110, %v3110
    %v3127 = vmul.f32 %v3111, %v3111
    %v3128 = vmul.f32 %v3112, %v3112
    %v3129 = vmul.f32 %v3113, %v3113
    %v3130 = vmul.f32 %v3114, %v3114
    %v3131 = vmul.f32 %v3115, %v3115
    %v3132 = vmul.f32 %v3116, %v3116
    %v3133 = vmul.f32 %v3117, %v3117
    %v3134 = vmul.f32 %v3118, %v3118
    %v3135 = vmul.f32 %v3119, %v3119
    %v3136 = vmul.f32 %v3120, %v3120
    %v3137 = vmul.f32 %v3121, %v3121
    %v3138 = vsel %vm188, %v3123, 0.0
    %v3139 = vadd.f32 %v3122, %v3138
    %3140 = vadd.xlane.f32.xlu0 %v3139
    %v3141 = vpop.xlane.xlu0 %3140
    %v3142 = vsel %vm188, %v3125, 0.0
    %v3143 = vadd.f32 %v3124, %v3142
    %3144 = vadd.xlane.f32.xlu0 %v3143
    %v3145 = vpop.xlane.xlu0 %3144
    %v3146 = vsel %vm188, %v3127, 0.0
    %v3147 = vadd.f32 %v3126, %v3146
    %3148 = vadd.xlane.f32.xlu0 %v3147
    %v3149 = vpop.xlane.xlu0 %3148
    %v3150 = vsel %vm188, %v3129, 0.0
    %v3151 = vadd.f32 %v3128, %v3150
    %3152 = vadd.xlane.f32.xlu0 %v3151
    %v3153 = vpop.xlane.xlu0 %3152
    %v3154 = vsel %vm188, %v3131, 0.0
    %v3155 = vadd.f32 %v3130, %v3154
    %3156 = vadd.xlane.f32.xlu0 %v3155
    %v3157 = vpop.xlane.xlu0 %3156
    %v3158 = vsel %vm188, %v3133, 0.0
    %v3159 = vadd.f32 %v3132, %v3158
    %3160 = vadd.xlane.f32.xlu0 %v3159
    %v3161 = vpop.xlane.xlu0 %3160
    %v3162 = vsel %vm188, %v3135, 0.0
    %v3163 = vadd.f32 %v3134, %v3162
    %3164 = vadd.xlane.f32.xlu0 %v3163
    %v3165 = vpop.xlane.xlu0 %3164
    %v3166 = vsel %vm188, %v3137, 0.0
    %v3167 = vadd.f32 %v3136, %v3166
    %3168 = vadd.xlane.f32.xlu0 %v3167
    %v3169 = vpop.xlane.xlu0 %3168
    %v3170 = vmul.f32 %v3141, %v227
    %v3171 = vmul.f32 %v3145, %v227
    %v3172 = vmul.f32 %v3149, %v227
    %v3173 = vmul.f32 %v3153, %v227
    %v3174 = vmul.f32 %v3157, %v227
    %v3175 = vmul.f32 %v3161, %v227
    %v3176 = vmul.f32 %v3165, %v227
    %v3177 = vmul.f32 %v3169, %v227
    %v3178 = vadd.f32 %v3170, 1e-05
    %v3179 = vadd.f32 %v3171, 1e-05
    %v3180 = vadd.f32 %v3172, 1e-05
    %v3181 = vadd.f32 %v3173, 1e-05
    %v3182 = vadd.f32 %v3174, 1e-05
    %v3183 = vadd.f32 %v3175, 1e-05
    %v3184 = vadd.f32 %v3176, 1e-05
    %v3185 = vadd.f32 %v3177, 1e-05
    %v3186 = vrsqrt.pop %v3178
    %v3187 = vmul.f32 %v3186, %v3178
    %v3188 = vmul.f32 %v3187, %v3186
    %v3189 = vmul.f32 0.5, %v3188
    %v3190 = vsub.f32 1.5, %v3189
    %v3191 = vmul.f32 %v3186, %v3190
    %vm3192 = vweird.f32 %v3178
    %vm3193 = vweird.f32 %v3186
    %vm3194 = vmor %vm3192, %vm3193
    %v3195 = vsel %vm3194, %v3186, %v3191
    %v3196 = vrsqrt.pop %v3179
    %v3197 = vmul.f32 %v3196, %v3179
    %v3198 = vmul.f32 %v3197, %v3196
    %v3199 = vmul.f32 0.5, %v3198
    %v3200 = vsub.f32 1.5, %v3199
    %v3201 = vmul.f32 %v3196, %v3200
    %vm3202 = vweird.f32 %v3179
    %vm3203 = vweird.f32 %v3196
    %vm3204 = vmor %vm3202, %vm3203
    %v3205 = vsel %vm3204, %v3196, %v3201
    %v3206 = vrsqrt.pop %v3180
    %v3207 = vmul.f32 %v3206, %v3180
    %v3208 = vmul.f32 %v3207, %v3206
    %v3209 = vmul.f32 0.5, %v3208
    %v3210 = vsub.f32 1.5, %v3209
    %v3211 = vmul.f32 %v3206, %v3210
    %vm3212 = vweird.f32 %v3180
    %vm3213 = vweird.f32 %v3206
    %vm3214 = vmor %vm3212, %vm3213
    %v3215 = vsel %vm3214, %v3206, %v3211
    %v3216 = vrsqrt.pop %v3181
    %v3217 = vmul.f32 %v3216, %v3181
    %v3218 = vmul.f32 %v3217, %v3216
    %v3219 = vmul.f32 0.5, %v3218
    %v3220 = vsub.f32 1.5, %v3219
    %v3221 = vmul.f32 %v3216, %v3220
    %vm3222 = vweird.f32 %v3181
    %vm3223 = vweird.f32 %v3216
    %vm3224 = vmor %vm3222, %vm3223
    %v3225 = vsel %vm3224, %v3216, %v3221
    %v3226 = vrsqrt.pop %v3182
    %v3227 = vmul.f32 %v3226, %v3182
    %v3228 = vmul.f32 %v3227, %v3226
    %v3229 = vmul.f32 0.5, %v3228
    %v3230 = vsub.f32 1.5, %v3229
    %v3231 = vmul.f32 %v3226, %v3230
    %vm3232 = vweird.f32 %v3182
    %vm3233 = vweird.f32 %v3226
    %vm3234 = vmor %vm3232, %vm3233
    %v3235 = vsel %vm3234, %v3226, %v3231
    %v3236 = vrsqrt.pop %v3183
    %v3237 = vmul.f32 %v3236, %v3183
    %v3238 = vmul.f32 %v3237, %v3236
    %v3239 = vmul.f32 0.5, %v3238
    %v3240 = vsub.f32 1.5, %v3239
    %v3241 = vmul.f32 %v3236, %v3240
    %vm3242 = vweird.f32 %v3183
    %vm3243 = vweird.f32 %v3236
    %vm3244 = vmor %vm3242, %vm3243
    %v3245 = vsel %vm3244, %v3236, %v3241
    %v3246 = vrsqrt.pop %v3184
    %v3247 = vmul.f32 %v3246, %v3184
    %v3248 = vmul.f32 %v3247, %v3246
    %v3249 = vmul.f32 0.5, %v3248
    %v3250 = vsub.f32 1.5, %v3249
    %v3251 = vmul.f32 %v3246, %v3250
    %vm3252 = vweird.f32 %v3184
    %vm3253 = vweird.f32 %v3246
    %vm3254 = vmor %vm3252, %vm3253
    %v3255 = vsel %vm3254, %v3246, %v3251
    %v3256 = vrsqrt.pop %v3185
    %v3257 = vmul.f32 %v3256, %v3185
    %v3258 = vmul.f32 %v3257, %v3256
    %v3259 = vmul.f32 0.5, %v3258
    %v3260 = vsub.f32 1.5, %v3259
    %v3261 = vmul.f32 %v3256, %v3260
    %vm3262 = vweird.f32 %v3185
    %vm3263 = vweird.f32 %v3256
    %vm3264 = vmor %vm3262, %vm3263
    %v3265 = vsel %vm3264, %v3256, %v3261
    %v3266 = vmul.f32 %v3106, %v3195
    %v3267 = vmul.f32 %v3107, %v3195
    %v3268 = vmul.f32 %v3108, %v3205
    %v3269 = vmul.f32 %v3109, %v3205
    %v3270 = vmul.f32 %v3110, %v3215
    %v3271 = vmul.f32 %v3111, %v3215
    %v3272 = vmul.f32 %v3112, %v3225
    %v3273 = vmul.f32 %v3113, %v3225
    %v3274 = vmul.f32 %v3114, %v3235
    %v3275 = vmul.f32 %v3115, %v3235
    %v3276 = vmul.f32 %v3116, %v3245
    %v3277 = vmul.f32 %v3117, %v3245
    %v3278 = vmul.f32 %v3118, %v3255
    %v3279 = vmul.f32 %v3119, %v3255
    %v3280 = vmul.f32 %v3120, %v3265
    %v3281 = vmul.f32 %v3121, %v3265
    %v3283 = vperm.slane %v3064, 0
    %v3284 = vperm.slane %v3064, 1
    %v3287 = vmul.f32 %v3266, %v3283
    %v3288 = vmul.f32 %v3267, %v3284
    %v3289 = vmul.f32 %v3268, %v3283
    %v3290 = vmul.f32 %v3269, %v3284
    %v3291 = vmul.f32 %v3270, %v3283
    %v3292 = vmul.f32 %v3271, %v3284
    %v3293 = vmul.f32 %v3272, %v3283
    %v3294 = vmul.f32 %v3273, %v3284
    %v3295 = vmul.f32 %v3274, %v3283
    %v3296 = vmul.f32 %v3275, %v3284
    %v3297 = vmul.f32 %v3276, %v3283
    %v3298 = vmul.f32 %v3277, %v3284
    %v3299 = vmul.f32 %v3278, %v3283
    %v3300 = vmul.f32 %v3279, %v3284
    %v3301 = vmul.f32 %v3280, %v3283
    %v3302 = vmul.f32 %v3281, %v3284
    %v3304 = vperm.slane %v3065, 0
    %v3305 = vperm.slane %v3065, 1
    %v3308 = vadd.f32 %v3287, %v3304
    %v3309 = vadd.f32 %v3288, %v3305
    %v3310 = vadd.f32 %v3289, %v3304
    %v3311 = vadd.f32 %v3290, %v3305
    %v3312 = vadd.f32 %v3291, %v3304
    %v3313 = vadd.f32 %v3292, %v3305
    %v3314 = vadd.f32 %v3293, %v3304
    %v3315 = vadd.f32 %v3294, %v3305
    %v3316 = vadd.f32 %v3295, %v3304
    %v3317 = vadd.f32 %v3296, %v3305
    %v3318 = vadd.f32 %v3297, %v3304
    %v3319 = vadd.f32 %v3298, %v3305
    %v3320 = vadd.f32 %v3299, %v3304
    %v3321 = vadd.f32 %v3300, %v3305
    %v3322 = vadd.f32 %v3301, %v3304
    %v3323 = vadd.f32 %v3302, %v3305
    %v3324 = vpack.c.bf16 %v3310, %v3308
    %v3325 = vpack.c.bf16 %v3311, %v3309
    %v3326 = vpack.c.bf16 %v3314, %v3312
    %v3327 = vpack.c.bf16 %v3315, %v3313
    %v3328 = vpack.c.bf16 %v3318, %v3316
    %v3329 = vpack.c.bf16 %v3319, %v3317
    %v3330 = vpack.c.bf16 %v3322, %v3320
    %v3331 = vpack.c.bf16 %v3323, %v3321
    %v3332 = vld [vmem:[%s9] sm:$0xff]
    %v3333 = vld [vmem:[%s9 + $0x8] sm:$0xff]
    %v3334 = vld [vmem:[%s9 + $0x10] sm:$0xff]
    %v3335 = vld [vmem:[%s9 + $0x18] sm:$0xff]
    %v3336 = vld [vmem:[%s9 + $0x20] sm:$0xff]
    %v3337 = vld [vmem:[%s9 + $0x28] sm:$0xff]
    %v3338 = vld [vmem:[%s9 + $0x30] sm:$0xff]
    %v3339 = vld [vmem:[%s9 + $0x38] sm:$0xff]
    %v3340 = vld [vmem:[%s9 + $0x40] sm:$0xff]
    %v3341 = vld [vmem:[%s9 + $0x48] sm:$0xff]
    %v3342 = vld [vmem:[%s9 + $0x50] sm:$0xff]
    %v3343 = vld [vmem:[%s9 + $0x58] sm:$0xff]
    %v3344 = vld [vmem:[%s9 + $0x60] sm:$0xff]
    %v3345 = vld [vmem:[%s9 + $0x68] sm:$0xff]
    %v3346 = vld [vmem:[%s9 + $0x70] sm:$0xff]
    %v3347 = vld [vmem:[%s9 + $0x78] sm:$0xff]
    %v3348 = vld [vmem:[%s9 + $0x80] sm:$0xff]
    %v3349 = vld [vmem:[%s9 + $0x88] sm:$0xff]
    %v3350 = vld [vmem:[%s9 + $0x90] sm:$0xff]
    %v3351 = vld [vmem:[%s9 + $0x98] sm:$0xff]
    %v3352 = vld [vmem:[%s9 + $0xa0] sm:$0xff]
    %v3353 = vld [vmem:[%s9 + $0xa8] sm:$0xff]
    %v3354 = vld [vmem:[%s9 + $0xb0] sm:$0xff]
    %v3355 = vld [vmem:[%s9 + $0xb8] sm:$0xff]
    %v3356 = vld [vmem:[%s9 + $0xc0] sm:$0xff]
    %v3357 = vld [vmem:[%s9 + $0xc8] sm:$0xff]
    %v3358 = vld [vmem:[%s9 + $0xd0] sm:$0xff]
    %v3359 = vld [vmem:[%s9 + $0xd8] sm:$0xff]
    %v3360 = vld [vmem:[%s9 + $0xe0] sm:$0xff]
    %v3361 = vld [vmem:[%s9 + $0xe8] sm:$0xff]
    %v3362 = vld [vmem:[%s9 + $0xf0] sm:$0xff]
    %v3363 = vld [vmem:[%s9 + $0xf8] sm:$0xff]
    %v3364 = vld [vmem:[%s9 + $0x100] sm:$0xff]
    %v3365 = vld [vmem:[%s9 + $0x108] sm:$0xff]
    %v3366 = vld [vmem:[%s9 + $0x110] sm:$0xff]
    %v3367 = vld [vmem:[%s9 + $0x118] sm:$0xff]
    %v3368 = vld [vmem:[%s9 + $0x120] sm:$0xff]
    %v3369 = vld [vmem:[%s9 + $0x128] sm:$0xff]
    %v3370 = vld [vmem:[%s9 + $0x130] sm:$0xff]
    %v3371 = vld [vmem:[%s9 + $0x138] sm:$0xff]
    %v3372 = vld [vmem:[%s9 + $0x140] sm:$0xff]
    %v3373 = vld [vmem:[%s9 + $0x148] sm:$0xff]
    %v3374 = vld [vmem:[%s9 + $0x150] sm:$0xff]
    %v3375 = vld [vmem:[%s9 + $0x158] sm:$0xff]
    %v3376 = vld [vmem:[%s9 + $0x160] sm:$0xff]
    %v3377 = vld [vmem:[%s9 + $0x168] sm:$0xff]
    %v3378 = vld [vmem:[%s9 + $0x170] sm:$0xff]
    %v3379 = vld [vmem:[%s9 + $0x178] sm:$0xff]
    %v3380 = vld [vmem:[%s9 + $0x180] sm:$0xff]
    %v3381 = vld [vmem:[%s9 + $0x188] sm:$0xff]
    %v3382 = vld [vmem:[%s9 + $0x190] sm:$0xff]
    %v3383 = vld [vmem:[%s9 + $0x198] sm:$0xff]
    %v3384 = vld [vmem:[%s9 + $0x1a0] sm:$0xff]
    %v3385 = vld [vmem:[%s9 + $0x1a8] sm:$0xff]
    %v3386 = vld [vmem:[%s9 + $0x1b0] sm:$0xff]
    %v3387 = vld [vmem:[%s9 + $0x1b8] sm:$0xff]
    %v3388 = vld [vmem:[%s9 + $0x1c0] sm:$0xff]
    %v3389 = vld [vmem:[%s9 + $0x1c8] sm:$0xff]
    %v3390 = vld [vmem:[%s9 + $0x1d0] sm:$0xff]
    %v3391 = vld [vmem:[%s9 + $0x1d8] sm:$0xff]
    %v3392 = vld [vmem:[%s9 + $0x1e0] sm:$0xff]
    %v3393 = vld [vmem:[%s9 + $0x1e8] sm:$0xff]
    %v3394 = vld [vmem:[%s9 + $0x1f0] sm:$0xff]
    %v3395 = vld [vmem:[%s9 + $0x1f8] sm:$0xff]
    %v3396 = vld [vmem:[%s9 + $0x200] sm:$0xff]
    %v3397 = vld [vmem:[%s9 + $0x208] sm:$0xff]
    %v3398 = vld [vmem:[%s9 + $0x210] sm:$0xff]
    %v3399 = vld [vmem:[%s9 + $0x218] sm:$0xff]
    %v3400 = vld [vmem:[%s9 + $0x220] sm:$0xff]
    %v3401 = vld [vmem:[%s9 + $0x228] sm:$0xff]
    %v3402 = vld [vmem:[%s9 + $0x230] sm:$0xff]
    %v3403 = vld [vmem:[%s9 + $0x238] sm:$0xff]
    %v3404 = vld [vmem:[#allocation14] sm:$0x3f]
    %v3406 = vperm.slane %v3404, 0
    %v3407 = vperm.slane %v3404, 1
    %v3408 = vperm.slane %v3404, 2
    %v3409 = vperm.slane %v3404, 3
    %v3410 = vperm.slane %v3404, 4
    %v3411 = vperm.slane %v3404, 5
    %v3490 = vunpack.c.l.b16 %v3332
    %v3491 = vunpack.c.h.b16 %v3332
    %v3492 = vunpack.c.l.b16 %v3333
    %v3493 = vunpack.c.h.b16 %v3333
    %v3494 = vunpack.c.l.b16 %v3334
    %v3495 = vunpack.c.h.b16 %v3334
    %v3496 = vunpack.c.l.b16 %v3335
    %v3497 = vunpack.c.h.b16 %v3335
    %v3498 = vunpack.c.l.b16 %v3336
    %v3499 = vunpack.c.h.b16 %v3336
    %v3500 = vunpack.c.l.b16 %v3337
    %v3501 = vunpack.c.h.b16 %v3337
    %v3502 = vunpack.c.l.b16 %v3338
    %v3503 = vunpack.c.h.b16 %v3338
    %v3504 = vunpack.c.l.b16 %v3339
    %v3505 = vunpack.c.h.b16 %v3339
    %v3506 = vunpack.c.l.b16 %v3340
    %v3507 = vunpack.c.h.b16 %v3340
    %v3508 = vunpack.c.l.b16 %v3341
    %v3509 = vunpack.c.h.b16 %v3341
    %v3510 = vunpack.c.l.b16 %v3342
    %v3511 = vunpack.c.h.b16 %v3342
    %v3512 = vunpack.c.l.b16 %v3343
    %v3513 = vunpack.c.h.b16 %v3343
    %v3514 = vunpack.c.l.b16 %v3344
    %v3515 = vunpack.c.h.b16 %v3344
    %v3516 = vunpack.c.l.b16 %v3345
    %v3517 = vunpack.c.h.b16 %v3345
    %v3518 = vunpack.c.l.b16 %v3346
    %v3519 = vunpack.c.h.b16 %v3346
    %v3520 = vunpack.c.l.b16 %v3347
    %v3521 = vunpack.c.h.b16 %v3347
    %v3522 = vunpack.c.l.b16 %v3348
    %v3523 = vunpack.c.h.b16 %v3348
    %v3524 = vunpack.c.l.b16 %v3349
    %v3525 = vunpack.c.h.b16 %v3349
    %v3526 = vunpack.c.l.b16 %v3350
    %v3527 = vunpack.c.h.b16 %v3350
    %v3528 = vunpack.c.l.b16 %v3351
    %v3529 = vunpack.c.h.b16 %v3351
    %v3530 = vunpack.c.l.b16 %v3352
    %v3531 = vunpack.c.h.b16 %v3352
    %v3532 = vunpack.c.l.b16 %v3353
    %v3533 = vunpack.c.h.b16 %v3353
    %v3534 = vunpack.c.l.b16 %v3354
    %v3535 = vunpack.c.h.b16 %v3354
    %v3536 = vunpack.c.l.b16 %v3355
    %v3537 = vunpack.c.h.b16 %v3355
    %v3538 = vunpack.c.l.b16 %v3356
    %v3539 = vunpack.c.h.b16 %v3356
    %v3540 = vunpack.c.l.b16 %v3357
    %v3541 = vunpack.c.h.b16 %v3357
    %v3542 = vunpack.c.l.b16 %v3358
    %v3543 = vunpack.c.h.b16 %v3358
    %v3544 = vunpack.c.l.b16 %v3359
    %v3545 = vunpack.c.h.b16 %v3359
    %v3546 = vunpack.c.l.b16 %v3360
    %v3547 = vunpack.c.h.b16 %v3360
    %v3548 = vunpack.c.l.b16 %v3361
    %v3549 = vunpack.c.h.b16 %v3361
    %v3550 = vunpack.c.l.b16 %v3362
    %v3551 = vunpack.c.h.b16 %v3362
    %v3552 = vunpack.c.l.b16 %v3363
    %v3553 = vunpack.c.h.b16 %v3363
    %v3554 = vunpack.c.l.b16 %v3364
    %v3555 = vunpack.c.h.b16 %v3364
    %v3556 = vunpack.c.l.b16 %v3365
    %v3557 = vunpack.c.h.b16 %v3365
    %v3558 = vunpack.c.l.b16 %v3366
    %v3559 = vunpack.c.h.b16 %v3366
    %v3560 = vunpack.c.l.b16 %v3367
    %v3561 = vunpack.c.h.b16 %v3367
    %v3562 = vunpack.c.l.b16 %v3368
    %v3563 = vunpack.c.h.b16 %v3368
    %v3564 = vunpack.c.l.b16 %v3369
    %v3565 = vunpack.c.h.b16 %v3369
    %v3566 = vunpack.c.l.b16 %v3370
    %v3567 = vunpack.c.h.b16 %v3370
    %v3568 = vunpack.c.l.b16 %v3371
    %v3569 = vunpack.c.h.b16 %v3371
    %v3570 = vunpack.c.l.b16 %v3372
    %v3571 = vunpack.c.h.b16 %v3372
    %v3572 = vunpack.c.l.b16 %v3373
    %v3573 = vunpack.c.h.b16 %v3373
    %v3574 = vunpack.c.l.b16 %v3374
    %v3575 = vunpack.c.h.b16 %v3374
    %v3576 = vunpack.c.l.b16 %v3375
    %v3577 = vunpack.c.h.b16 %v3375
    %v3578 = vunpack.c.l.b16 %v3376
    %v3579 = vunpack.c.h.b16 %v3376
    %v3580 = vunpack.c.l.b16 %v3377
    %v3581 = vunpack.c.h.b16 %v3377
    %v3582 = vunpack.c.l.b16 %v3378
    %v3583 = vunpack.c.h.b16 %v3378
    %v3584 = vunpack.c.l.b16 %v3379
    %v3585 = vunpack.c.h.b16 %v3379
    %v3586 = vunpack.c.l.b16 %v3380
    %v3587 = vunpack.c.h.b16 %v3380
    %v3588 = vunpack.c.l.b16 %v3381
    %v3589 = vunpack.c.h.b16 %v3381
    %v3590 = vunpack.c.l.b16 %v3382
    %v3591 = vunpack.c.h.b16 %v3382
    %v3592 = vunpack.c.l.b16 %v3383
    %v3593 = vunpack.c.h.b16 %v3383
    %v3594 = vunpack.c.l.b16 %v3384
    %v3595 = vunpack.c.h.b16 %v3384
    %v3596 = vunpack.c.l.b16 %v3385
    %v3597 = vunpack.c.h.b16 %v3385
    %v3598 = vunpack.c.l.b16 %v3386
    %v3599 = vunpack.c.h.b16 %v3386
    %v3600 = vunpack.c.l.b16 %v3387
    %v3601 = vunpack.c.h.b16 %v3387
    %v3602 = vunpack.c.l.b16 %v3388
    %v3603 = vunpack.c.h.b16 %v3388
    %v3604 = vunpack.c.l.b16 %v3389
    %v3605 = vunpack.c.h.b16 %v3389
    %v3606 = vunpack.c.l.b16 %v3390
    %v3607 = vunpack.c.h.b16 %v3390
    %v3608 = vunpack.c.l.b16 %v3391
    %v3609 = vunpack.c.h.b16 %v3391
    %v3610 = vunpack.c.l.b16 %v3392
    %v3611 = vunpack.c.h.b16 %v3392
    %v3612 = vunpack.c.l.b16 %v3393
    %v3613 = vunpack.c.h.b16 %v3393
    %v3614 = vunpack.c.l.b16 %v3394
    %v3615 = vunpack.c.h.b16 %v3394
    %v3616 = vunpack.c.l.b16 %v3395
    %v3617 = vunpack.c.h.b16 %v3395
    %v3618 = vunpack.c.l.b16 %v3396
    %v3619 = vunpack.c.h.b16 %v3396
    %v3620 = vunpack.c.l.b16 %v3397
    %v3621 = vunpack.c.h.b16 %v3397
    %v3622 = vunpack.c.l.b16 %v3398
    %v3623 = vunpack.c.h.b16 %v3398
    %v3624 = vunpack.c.l.b16 %v3399
    %v3625 = vunpack.c.h.b16 %v3399
    %v3626 = vunpack.c.l.b16 %v3400
    %v3627 = vunpack.c.h.b16 %v3400
    %v3628 = vunpack.c.l.b16 %v3401
    %v3629 = vunpack.c.h.b16 %v3401
    %v3630 = vunpack.c.l.b16 %v3402
    %v3631 = vunpack.c.h.b16 %v3402
    %v3632 = vunpack.c.l.b16 %v3403
    %v3633 = vunpack.c.h.b16 %v3403
    %v3634 = vpack.c.b16 %v3496, %v3490
    %v3635 = vpack.c.b16 %v3497, %v3491
    %v3636 = vpack.c.b16 %v3498, %v3492
    %v3637 = vpack.c.b16 %v3499, %v3493
    %v3638 = vpack.c.b16 %v3500, %v3494
    %v3639 = vpack.c.b16 %v3501, %v3495
    %v3640 = vpack.c.b16 %v3508, %v3502
    %v3641 = vpack.c.b16 %v3509, %v3503
    %v3642 = vpack.c.b16 %v3510, %v3504
    %v3643 = vpack.c.b16 %v3511, %v3505
    %v3644 = vpack.c.b16 %v3512, %v3506
    %v3645 = vpack.c.b16 %v3513, %v3507
    %v3646 = vpack.c.b16 %v3520, %v3514
    %v3647 = vpack.c.b16 %v3521, %v3515
    %v3648 = vpack.c.b16 %v3522, %v3516
    %v3649 = vpack.c.b16 %v3523, %v3517
    %v3650 = vpack.c.b16 %v3524, %v3518
    %v3651 = vpack.c.b16 %v3525, %v3519
    %v3652 = vpack.c.b16 %v3532, %v3526
    %v3653 = vpack.c.b16 %v3533, %v3527
    %v3654 = vpack.c.b16 %v3534, %v3528
    %v3655 = vpack.c.b16 %v3535, %v3529
    %v3656 = vpack.c.b16 %v3536, %v3530
    %v3657 = vpack.c.b16 %v3537, %v3531
    %v3658 = vpack.c.b16 %v3544, %v3538
    %v3659 = vpack.c.b16 %v3545, %v3539
    %v3660 = vpack.c.b16 %v3546, %v3540
    %v3661 = vpack.c.b16 %v3547, %v3541
    %v3662 = vpack.c.b16 %v3548, %v3542
    %v3663 = vpack.c.b16 %v3549, %v3543
    %v3664 = vpack.c.b16 %v3556, %v3550
    %v3665 = vpack.c.b16 %v3557, %v3551
    %v3666 = vpack.c.b16 %v3558, %v3552
    %v3667 = vpack.c.b16 %v3559, %v3553
    %v3668 = vpack.c.b16 %v3560, %v3554
    %v3669 = vpack.c.b16 %v3561, %v3555
    %v3670 = vpack.c.b16 %v3568, %v3562
    %v3671 = vpack.c.b16 %v3569, %v3563
    %v3672 = vpack.c.b16 %v3570, %v3564
    %v3673 = vpack.c.b16 %v3571, %v3565
    %v3674 = vpack.c.b16 %v3572, %v3566
    %v3675 = vpack.c.b16 %v3573, %v3567
    %v3676 = vpack.c.b16 %v3580, %v3574
    %v3677 = vpack.c.b16 %v3581, %v3575
    %v3678 = vpack.c.b16 %v3582, %v3576
    %v3679 = vpack.c.b16 %v3583, %v3577
    %v3680 = vpack.c.b16 %v3584, %v3578
    %v3681 = vpack.c.b16 %v3585, %v3579
    %v3682 = vpack.c.b16 %v3592, %v3586
    %v3683 = vpack.c.b16 %v3593, %v3587
    %v3684 = vpack.c.b16 %v3594, %v3588
    %v3685 = vpack.c.b16 %v3595, %v3589
    %v3686 = vpack.c.b16 %v3596, %v3590
    %v3687 = vpack.c.b16 %v3597, %v3591
    %v3688 = vpack.c.b16 %v3604, %v3598
    %v3689 = vpack.c.b16 %v3605, %v3599
    %v3690 = vpack.c.b16 %v3606, %v3600
    %v3691 = vpack.c.b16 %v3607, %v3601
    %v3692 = vpack.c.b16 %v3608, %v3602
    %v3693 = vpack.c.b16 %v3609, %v3603
    %v3694 = vpack.c.b16 %v3616, %v3610
    %v3695 = vpack.c.b16 %v3617, %v3611
    %v3696 = vpack.c.b16 %v3618, %v3612
    %v3697 = vpack.c.b16 %v3619, %v3613
    %v3698 = vpack.c.b16 %v3620, %v3614
    %v3699 = vpack.c.b16 %v3621, %v3615
    %v3700 = vpack.c.b16 %v3628, %v3622
    %v3701 = vpack.c.b16 %v3629, %v3623
    %v3702 = vpack.c.b16 %v3630, %v3624
    %v3703 = vpack.c.b16 %v3631, %v3625
    %v3704 = vpack.c.b16 %v3632, %v3626
    %v3705 = vpack.c.b16 %v3633, %v3627
    %v3779 = vsel %vm188, %v3325, 0
    %v3782 = vsel %vm188, %v3327, 0
    %v3785 = vsel %vm188, %v3329, 0
    %v3788 = vsel %vm188, %v3331, 0
    %3790 = vmatpush.bf16.msra.mxu0 %v3676
    %3791 = vmatpush.bf16.msra.mxu0 %v3670
    %3792 = vmatpush.bf16.msra.mxu0 %v3664
    %3793 = vmatpush.bf16.msra.mxu0 %v3658
    %3794 = vmatpush.bf16.msra.mxu0 %v3652
    %3795 = vmatpush.bf16.msra.mxu0 %v3646
    %3796 = vmatpush.bf16.msra.mxu0 %v3640
    %3797 = vmatpush.bf16.msra.mxu0 %v3634
    %3798 = vmatmul.bf16.gmra.mxu0 %v3324
    %v3799 = vpop.f32.mrf.mxu0
    %v3800 = vadd.f32 %v3406, %v3799
    %v3801 = vpop.f32.mrf.mxu0
    %v3802 = vadd.f32 %v3406, %v3801
    %3803 = vmatmul.bf16.gmra.mxu0 %v3326
    %v3804 = vpop.f32.mrf.mxu0
    %v3805 = vadd.f32 %v3406, %v3804
    %v3806 = vpop.f32.mrf.mxu0
    %v3807 = vadd.f32 %v3406, %v3806
    %3808 = vmatmul.bf16.gmra.mxu0 %v3328
    %v3809 = vpop.f32.mrf.mxu0
    %v3810 = vadd.f32 %v3406, %v3809
    %v3811 = vpop.f32.mrf.mxu0
    %v3812 = vadd.f32 %v3406, %v3811
    %3813 = vmatmul.bf16.gmra.mxu0 %v3330
    %v3814 = vpop.f32.mrf.mxu0
    %v3815 = vadd.f32 %v3406, %v3814
    %v3816 = vpop.f32.mrf.mxu0
    %v3817 = vadd.f32 %v3406, %v3816
    %3818 = vdwg.mxu0
    %3819 = vmatpush.bf16.msra.mxu0 0
    %3820 = vmatpush.bf16.msra.mxu0 0
    %3821 = vmatpush.bf16.msra.mxu0 0
    %3822 = vmatpush.bf16.msra.mxu0 0
    %3823 = vmatpush.bf16.msra.mxu0 %v3700
    %3824 = vmatpush.bf16.msra.mxu0 %v3694
    %3825 = vmatpush.bf16.msra.mxu0 %v3688
    %3826 = vmatpush.bf16.msra.mxu0 %v3682
    %3827 = vmatmul.bf16.gmra.mxu0 %v3779
    %v3828 = vpop.f32.mrf.mxu0
    %v3829 = vadd.f32 %v3800, %v3828
    %v3830 = vpop.f32.mrf.mxu0
    %v3831 = vadd.f32 %v3802, %v3830
    %3832 = vmatmul.bf16.gmra.mxu0 %v3782
    %v3833 = vpop.f32.mrf.mxu0
    %v3834 = vadd.f32 %v3805, %v3833
    %v3835 = vpop.f32.mrf.mxu0
    %v3836 = vadd.f32 %v3807, %v3835
    %3837 = vmatmul.bf16.gmra.mxu0 %v3785
    %v3838 = vpop.f32.mrf.mxu0
    %v3839 = vadd.f32 %v3810, %v3838
    %v3840 = vpop.f32.mrf.mxu0
    %v3841 = vadd.f32 %v3812, %v3840
    %3842 = vmatmul.bf16.gmra.mxu0 %v3788
    %v3843 = vpop.f32.mrf.mxu0
    %v3844 = vadd.f32 %v3815, %v3843
    %v3845 = vpop.f32.mrf.mxu0
    %v3846 = vadd.f32 %v3817, %v3845
    %3847 = vdwg.mxu0
    %3848 = vmatpush.bf16.msra.mxu0 %v3677
    %3849 = vmatpush.bf16.msra.mxu0 %v3671
    %3850 = vmatpush.bf16.msra.mxu0 %v3665
    %3851 = vmatpush.bf16.msra.mxu0 %v3659
    %3852 = vmatpush.bf16.msra.mxu0 %v3653
    %3853 = vmatpush.bf16.msra.mxu0 %v3647
    %3854 = vmatpush.bf16.msra.mxu0 %v3641
    %3855 = vmatpush.bf16.msra.mxu0 %v3635
    %3856 = vmatmul.bf16.gmra.mxu0 %v3324
    %v3857 = vpop.f32.mrf.mxu0
    %v3858 = vadd.f32 %v3407, %v3857
    %v3859 = vpop.f32.mrf.mxu0
    %v3860 = vadd.f32 %v3407, %v3859
    %3861 = vmatmul.bf16.gmra.mxu0 %v3326
    %v3862 = vpop.f32.mrf.mxu0
    %v3863 = vadd.f32 %v3407, %v3862
    %v3864 = vpop.f32.mrf.mxu0
    %v3865 = vadd.f32 %v3407, %v3864
    %3866 = vmatmul.bf16.gmra.mxu0 %v3328
    %v3867 = vpop.f32.mrf.mxu0
    %v3868 = vadd.f32 %v3407, %v3867
    %v3869 = vpop.f32.mrf.mxu0
    %v3870 = vadd.f32 %v3407, %v3869
    %3871 = vmatmul.bf16.gmra.mxu0 %v3330
    %v3872 = vpop.f32.mrf.mxu0
    %v3873 = vadd.f32 %v3407, %v3872
    %v3874 = vpop.f32.mrf.mxu0
    %v3875 = vadd.f32 %v3407, %v3874
    %3876 = vdwg.mxu0
    %3877 = vmatpush.bf16.msra.mxu0 0
    %3878 = vmatpush.bf16.msra.mxu0 0
    %3879 = vmatpush.bf16.msra.mxu0 0
    %3880 = vmatpush.bf16.msra.mxu0 0
    %3881 = vmatpush.bf16.msra.mxu0 %v3701
    %3882 = vmatpush.bf16.msra.mxu0 %v3695
    %3883 = vmatpush.bf16.msra.mxu0 %v3689
    %3884 = vmatpush.bf16.msra.mxu0 %v3683
    %3885 = vmatmul.bf16.gmra.mxu0 %v3779
    %v3886 = vpop.f32.mrf.mxu0
    %v3887 = vadd.f32 %v3858, %v3886
    %v3888 = vpop.f32.mrf.mxu0
    %v3889 = vadd.f32 %v3860, %v3888
    %3890 = vmatmul.bf16.gmra.mxu0 %v3782
    %v3891 = vpop.f32.mrf.mxu0
    %v3892 = vadd.f32 %v3863, %v3891
    %v3893 = vpop.f32.mrf.mxu0
    %v3894 = vadd.f32 %v3865, %v3893
    %3895 = vmatmul.bf16.gmra.mxu0 %v3785
    %v3896 = vpop.f32.mrf.mxu0
    %v3897 = vadd.f32 %v3868, %v3896
    %v3898 = vpop.f32.mrf.mxu0
    %v3899 = vadd.f32 %v3870, %v3898
    %3900 = vmatmul.bf16.gmra.mxu0 %v3788
    %v3901 = vpop.f32.mrf.mxu0
    %v3902 = vadd.f32 %v3873, %v3901
    %v3903 = vpop.f32.mrf.mxu0
    %v3904 = vadd.f32 %v3875, %v3903
    %3905 = vdwg.mxu0
    %3906 = vmatpush.bf16.msra.mxu0 %v3678
    %3907 = vmatpush.bf16.msra.mxu0 %v3672
    %3908 = vmatpush.bf16.msra.mxu0 %v3666
    %3909 = vmatpush.bf16.msra.mxu0 %v3660
    %3910 = vmatpush.bf16.msra.mxu0 %v3654
    %3911 = vmatpush.bf16.msra.mxu0 %v3648
    %3912 = vmatpush.bf16.msra.mxu0 %v3642
    %3913 = vmatpush.bf16.msra.mxu0 %v3636
    %3914 = vmatmul.bf16.gmra.mxu0 %v3324
    %v3915 = vpop.f32.mrf.mxu0
    %v3916 = vadd.f32 %v3408, %v3915
    %v3917 = vpop.f32.mrf.mxu0
    %v3918 = vadd.f32 %v3408, %v3917
    %3919 = vmatmul.bf16.gmra.mxu0 %v3326
    %v3920 = vpop.f32.mrf.mxu0
    %v3921 = vadd.f32 %v3408, %v3920
    %v3922 = vpop.f32.mrf.mxu0
    %v3923 = vadd.f32 %v3408, %v3922
    %3924 = vmatmul.bf16.gmra.mxu0 %v3328
    %v3925 = vpop.f32.mrf.mxu0
    %v3926 = vadd.f32 %v3408, %v3925
    %v3927 = vpop.f32.mrf.mxu0
    %v3928 = vadd.f32 %v3408, %v3927
    %3929 = vmatmul.bf16.gmra.mxu0 %v3330
    %v3930 = vpop.f32.mrf.mxu0
    %v3931 = vadd.f32 %v3408, %v3930
    %v3932 = vpop.f32.mrf.mxu0
    %v3933 = vadd.f32 %v3408, %v3932
    %3934 = vdwg.mxu0
    %3935 = vmatpush.bf16.msra.mxu0 0
    %3936 = vmatpush.bf16.msra.mxu0 0
    %3937 = vmatpush.bf16.msra.mxu0 0
    %3938 = vmatpush.bf16.msra.mxu0 0
    %3939 = vmatpush.bf16.msra.mxu0 %v3702
    %3940 = vmatpush.bf16.msra.mxu0 %v3696
    %3941 = vmatpush.bf16.msra.mxu0 %v3690
    %3942 = vmatpush.bf16.msra.mxu0 %v3684
    %3943 = vmatmul.bf16.gmra.mxu0 %v3779
    %v3944 = vpop.f32.mrf.mxu0
    %v3945 = vadd.f32 %v3916, %v3944
    %v3946 = vpop.f32.mrf.mxu0
    %v3947 = vadd.f32 %v3918, %v3946
    %3948 = vmatmul.bf16.gmra.mxu0 %v3782
    %v3949 = vpop.f32.mrf.mxu0
    %v3950 = vadd.f32 %v3921, %v3949
    %v3951 = vpop.f32.mrf.mxu0
    %v3952 = vadd.f32 %v3923, %v3951
    %3953 = vmatmul.bf16.gmra.mxu0 %v3785
    %v3954 = vpop.f32.mrf.mxu0
    %v3955 = vadd.f32 %v3926, %v3954
    %v3956 = vpop.f32.mrf.mxu0
    %v3957 = vadd.f32 %v3928, %v3956
    %3958 = vmatmul.bf16.gmra.mxu0 %v3788
    %v3959 = vpop.f32.mrf.mxu0
    %v3960 = vadd.f32 %v3931, %v3959
    %v3961 = vpop.f32.mrf.mxu0
    %v3962 = vadd.f32 %v3933, %v3961
    %3963 = vdwg.mxu0
    %3964 = vmatpush.bf16.msra.mxu0 %v3679
    %3965 = vmatpush.bf16.msra.mxu0 %v3673
    %3966 = vmatpush.bf16.msra.mxu0 %v3667
    %3967 = vmatpush.bf16.msra.mxu0 %v3661
    %3968 = vmatpush.bf16.msra.mxu0 %v3655
    %3969 = vmatpush.bf16.msra.mxu0 %v3649
    %3970 = vmatpush.bf16.msra.mxu0 %v3643
    %3971 = vmatpush.bf16.msra.mxu0 %v3637
    %3972 = vmatmul.bf16.gmra.mxu0 %v3324
    %v3973 = vpop.f32.mrf.mxu0
    %v3974 = vadd.f32 %v3409, %v3973
    %v3975 = vpop.f32.mrf.mxu0
    %v3976 = vadd.f32 %v3409, %v3975
    %3977 = vmatmul.bf16.gmra.mxu0 %v3326
    %v3978 = vpop.f32.mrf.mxu0
    %v3979 = vadd.f32 %v3409, %v3978
    %v3980 = vpop.f32.mrf.mxu0
    %v3981 = vadd.f32 %v3409, %v3980
    %3982 = vmatmul.bf16.gmra.mxu0 %v3328
    %v3983 = vpop.f32.mrf.mxu0
    %v3984 = vadd.f32 %v3409, %v3983
    %v3985 = vpop.f32.mrf.mxu0
    %v3986 = vadd.f32 %v3409, %v3985
    %3987 = vmatmul.bf16.gmra.mxu0 %v3330
    %v3988 = vpop.f32.mrf.mxu0
    %v3989 = vadd.f32 %v3409, %v3988
    %v3990 = vpop.f32.mrf.mxu0
    %v3991 = vadd.f32 %v3409, %v3990
    %3992 = vdwg.mxu0
    %3993 = vmatpush.bf16.msra.mxu0 0
    %3994 = vmatpush.bf16.msra.mxu0 0
    %3995 = vmatpush.bf16.msra.mxu0 0
    %3996 = vmatpush.bf16.msra.mxu0 0
    %3997 = vmatpush.bf16.msra.mxu0 %v3703
    %3998 = vmatpush.bf16.msra.mxu0 %v3697
    %3999 = vmatpush.bf16.msra.mxu0 %v3691
    %4000 = vmatpush.bf16.msra.mxu0 %v3685
    %4001 = vmatmul.bf16.gmra.mxu0 %v3779
    %v4002 = vpop.f32.mrf.mxu0
    %v4003 = vadd.f32 %v3974, %v4002
    %v4004 = vpop.f32.mrf.mxu0
    %v4005 = vadd.f32 %v3976, %v4004
    %4006 = vmatmul.bf16.gmra.mxu0 %v3782
    %v4007 = vpop.f32.mrf.mxu0
    %v4008 = vadd.f32 %v3979, %v4007
    %v4009 = vpop.f32.mrf.mxu0
    %v4010 = vadd.f32 %v3981, %v4009
    %4011 = vmatmul.bf16.gmra.mxu0 %v3785
    %v4012 = vpop.f32.mrf.mxu0
    %v4013 = vadd.f32 %v3984, %v4012
    %v4014 = vpop.f32.mrf.mxu0
    %v4015 = vadd.f32 %v3986, %v4014
    %4016 = vmatmul.bf16.gmra.mxu0 %v3788
    %v4017 = vpop.f32.mrf.mxu0
    %v4018 = vadd.f32 %v3989, %v4017
    %v4019 = vpop.f32.mrf.mxu0
    %v4020 = vadd.f32 %v3991, %v4019
    %4021 = vdwg.mxu0
    %4022 = vmatpush.bf16.msra.mxu0 %v3680
    %4023 = vmatpush.bf16.msra.mxu0 %v3674
    %4024 = vmatpush.bf16.msra.mxu0 %v3668
    %4025 = vmatpush.bf16.msra.mxu0 %v3662
    %4026 = vmatpush.bf16.msra.mxu0 %v3656
    %4027 = vmatpush.bf16.msra.mxu0 %v3650
    %4028 = vmatpush.bf16.msra.mxu0 %v3644
    %4029 = vmatpush.bf16.msra.mxu0 %v3638
    %4030 = vmatmul.bf16.gmra.mxu0 %v3324
    %v4031 = vpop.f32.mrf.mxu0
    %v4032 = vadd.f32 %v3410, %v4031
    %v4033 = vpop.f32.mrf.mxu0
    %v4034 = vadd.f32 %v3410, %v4033
    %4035 = vmatmul.bf16.gmra.mxu0 %v3326
    %v4036 = vpop.f32.mrf.mxu0
    %v4037 = vadd.f32 %v3410, %v4036
    %v4038 = vpop.f32.mrf.mxu0
    %v4039 = vadd.f32 %v3410, %v4038
    %4040 = vmatmul.bf16.gmra.mxu0 %v3328
    %v4041 = vpop.f32.mrf.mxu0
    %v4042 = vadd.f32 %v3410, %v4041
    %v4043 = vpop.f32.mrf.mxu0
    %v4044 = vadd.f32 %v3410, %v4043
    %4045 = vmatmul.bf16.gmra.mxu0 %v3330
    %v4046 = vpop.f32.mrf.mxu0
    %v4047 = vadd.f32 %v3410, %v4046
    %v4048 = vpop.f32.mrf.mxu0
    %v4049 = vadd.f32 %v3410, %v4048
    %4050 = vdwg.mxu0
    %4051 = vmatpush.bf16.msra.mxu0 0
    %4052 = vmatpush.bf16.msra.mxu0 0
    %4053 = vmatpush.bf16.msra.mxu0 0
    %4054 = vmatpush.bf16.msra.mxu0 0
    %4055 = vmatpush.bf16.msra.mxu0 %v3704
    %4056 = vmatpush.bf16.msra.mxu0 %v3698
    %4057 = vmatpush.bf16.msra.mxu0 %v3692
    %4058 = vmatpush.bf16.msra.mxu0 %v3686
    %4059 = vmatmul.bf16.gmra.mxu0 %v3779
    %v4060 = vpop.f32.mrf.mxu0
    %v4061 = vadd.f32 %v4032, %v4060
    %v4062 = vpop.f32.mrf.mxu0
    %v4063 = vadd.f32 %v4034, %v4062
    %4064 = vmatmul.bf16.gmra.mxu0 %v3782
    %v4065 = vpop.f32.mrf.mxu0
    %v4066 = vadd.f32 %v4037, %v4065
    %v4067 = vpop.f32.mrf.mxu0
    %v4068 = vadd.f32 %v4039, %v4067
    %4069 = vmatmul.bf16.gmra.mxu0 %v3785
    %v4070 = vpop.f32.mrf.mxu0
    %v4071 = vadd.f32 %v4042, %v4070
    %v4072 = vpop.f32.mrf.mxu0
    %v4073 = vadd.f32 %v4044, %v4072
    %4074 = vmatmul.bf16.gmra.mxu0 %v3788
    %v4075 = vpop.f32.mrf.mxu0
    %v4076 = vadd.f32 %v4047, %v4075
    %v4077 = vpop.f32.mrf.mxu0
    %v4078 = vadd.f32 %v4049, %v4077
    %4079 = vdwg.mxu0
    %4080 = vmatpush.bf16.msra.mxu0 %v3681
    %4081 = vmatpush.bf16.msra.mxu0 %v3675
    %4082 = vmatpush.bf16.msra.mxu0 %v3669
    %4083 = vmatpush.bf16.msra.mxu0 %v3663
    %4084 = vmatpush.bf16.msra.mxu0 %v3657
    %4085 = vmatpush.bf16.msra.mxu0 %v3651
    %4086 = vmatpush.bf16.msra.mxu0 %v3645
    %4087 = vmatpush.bf16.msra.mxu0 %v3639
    %4088 = vmatmul.bf16.gmra.mxu0 %v3324
    %v4089 = vpop.f32.mrf.mxu0
    %v4090 = vadd.f32 %v3411, %v4089
    %v4091 = vpop.f32.mrf.mxu0
    %v4092 = vadd.f32 %v3411, %v4091
    %4093 = vmatmul.bf16.gmra.mxu0 %v3326
    %v4094 = vpop.f32.mrf.mxu0
    %v4095 = vadd.f32 %v3411, %v4094
    %v4096 = vpop.f32.mrf.mxu0
    %v4097 = vadd.f32 %v3411, %v4096
    %4098 = vmatmul.bf16.gmra.mxu0 %v3328
    %v4099 = vpop.f32.mrf.mxu0
    %v4100 = vadd.f32 %v3411, %v4099
    %v4101 = vpop.f32.mrf.mxu0
    %v4102 = vadd.f32 %v3411, %v4101
    %4103 = vmatmul.bf16.gmra.mxu0 %v3330
    %v4104 = vpop.f32.mrf.mxu0
    %v4105 = vadd.f32 %v3411, %v4104
    %v4106 = vpop.f32.mrf.mxu0
    %v4107 = vadd.f32 %v3411, %v4106
    %4108 = vdwg.mxu0
    %4109 = vmatpush.bf16.msra.mxu0 0
    %4110 = vmatpush.bf16.msra.mxu0 0
    %4111 = vmatpush.bf16.msra.mxu0 0
    %4112 = vmatpush.bf16.msra.mxu0 0
    %4113 = vmatpush.bf16.msra.mxu0 %v3705
    %4114 = vmatpush.bf16.msra.mxu0 %v3699
    %4115 = vmatpush.bf16.msra.mxu0 %v3693
    %4116 = vmatpush.bf16.msra.mxu0 %v3687
    %4117 = vmatmul.bf16.gmra.mxu0 %v3779
    %v4118 = vpop.f32.mrf.mxu0
    %v4119 = vadd.f32 %v4090, %v4118
    %v4120 = vpop.f32.mrf.mxu0
    %v4121 = vadd.f32 %v4092, %v4120
    %4122 = vmatmul.bf16.gmra.mxu0 %v3782
    %v4123 = vpop.f32.mrf.mxu0
    %v4124 = vadd.f32 %v4095, %v4123
    %v4125 = vpop.f32.mrf.mxu0
    %v4126 = vadd.f32 %v4097, %v4125
    %4127 = vmatmul.bf16.gmra.mxu0 %v3785
    %v4128 = vpop.f32.mrf.mxu0
    %v4129 = vadd.f32 %v4100, %v4128
    %v4130 = vpop.f32.mrf.mxu0
    %v4131 = vadd.f32 %v4102, %v4130
    %4132 = vmatmul.bf16.gmra.mxu0 %v3788
    %v4133 = vpop.f32.mrf.mxu0
    %v4134 = vadd.f32 %v4105, %v4133
    %v4135 = vpop.f32.mrf.mxu0
    %v4136 = vadd.f32 %v4107, %v4135
    %4137 = vdwg.mxu0
    %v4138 = vmul.f32 %v3829, 0.5
    %v4139 = vmul.f32 %v3887, 0.5
    %v4140 = vmul.f32 %v3945, 0.5
    %v4141 = vmul.f32 %v4003, 0.5
    %v4142 = vmul.f32 %v4061, 0.5
    %v4143 = vmul.f32 %v4119, 0.5
    %v4144 = vmul.f32 %v3831, 0.5
    %v4145 = vmul.f32 %v3889, 0.5
    %v4146 = vmul.f32 %v3947, 0.5
    %v4147 = vmul.f32 %v4005, 0.5
    %v4148 = vmul.f32 %v4063, 0.5
    %v4149 = vmul.f32 %v4121, 0.5
    %v4150 = vmul.f32 %v3834, 0.5
    %v4151 = vmul.f32 %v3892, 0.5
    %v4152 = vmul.f32 %v3950, 0.5
    %v4153 = vmul.f32 %v4008, 0.5
    %v4154 = vmul.f32 %v4066, 0.5
    %v4155 = vmul.f32 %v4124, 0.5
    %v4156 = vmul.f32 %v3836, 0.5
    %v4157 = vmul.f32 %v3894, 0.5
    %v4158 = vmul.f32 %v3952, 0.5
    %v4159 = vmul.f32 %v4010, 0.5
    %v4160 = vmul.f32 %v4068, 0.5
    %v4161 = vmul.f32 %v4126, 0.5
    %v4162 = vmul.f32 %v3839, 0.5
    %v4163 = vmul.f32 %v3897, 0.5
    %v4164 = vmul.f32 %v3955, 0.5
    %v4165 = vmul.f32 %v4013, 0.5
    %v4166 = vmul.f32 %v4071, 0.5
    %v4167 = vmul.f32 %v4129, 0.5
    %v4168 = vmul.f32 %v3841, 0.5
    %v4169 = vmul.f32 %v3899, 0.5
    %v4170 = vmul.f32 %v3957, 0.5
    %v4171 = vmul.f32 %v4015, 0.5
    %v4172 = vmul.f32 %v4073, 0.5
    %v4173 = vmul.f32 %v4131, 0.5
    %v4174 = vmul.f32 %v3844, 0.5
    %v4175 = vmul.f32 %v3902, 0.5
    %v4176 = vmul.f32 %v3960, 0.5
    %v4177 = vmul.f32 %v4018, 0.5
    %v4178 = vmul.f32 %v4076, 0.5
    %v4179 = vmul.f32 %v4134, 0.5
    %v4180 = vmul.f32 %v3846, 0.5
    %v4181 = vmul.f32 %v3904, 0.5
    %v4182 = vmul.f32 %v3962, 0.5
    %v4183 = vmul.f32 %v4020, 0.5
    %v4184 = vmul.f32 %v4078, 0.5
    %v4185 = vmul.f32 %v4136, 0.5
    %v4186 = vmul.f32 %v3829, 0.044715
    %v4187 = vmul.f32 %v3887, 0.044715
    %v4188 = vmul.f32 %v3945, 0.044715
    %v4189 = vmul.f32 %v4003, 0.044715
    %v4190 = vmul.f32 %v4061, 0.044715
    %v4191 = vmul.f32 %v4119, 0.044715
    %v4192 = vmul.f32 %v3831, 0.044715
    %v4193 = vmul.f32 %v3889, 0.044715
    %v4194 = vmul.f32 %v3947, 0.044715
    %v4195 = vmul.f32 %v4005, 0.044715
    %v4196 = vmul.f32 %v4063, 0.044715
    %v4197 = vmul.f32 %v4121, 0.044715
    %v4198 = vmul.f32 %v3834, 0.044715
    %v4199 = vmul.f32 %v3892, 0.044715
    %v4200 = vmul.f32 %v3950, 0.044715
    %v4201 = vmul.f32 %v4008, 0.044715
    %v4202 = vmul.f32 %v4066, 0.044715
    %v4203 = vmul.f32 %v4124, 0.044715
    %v4204 = vmul.f32 %v3836, 0.044715
    %v4205 = vmul.f32 %v3894, 0.044715
    %v4206 = vmul.f32 %v3952, 0.044715
    %v4207 = vmul.f32 %v4010, 0.044715
    %v4208 = vmul.f32 %v4068, 0.044715
    %v4209 = vmul.f32 %v4126, 0.044715
    %v4210 = vmul.f32 %v3839, 0.044715
    %v4211 = vmul.f32 %v3897, 0.044715
    %v4212 = vmul.f32 %v3955, 0.044715
    %v4213 = vmul.f32 %v4013, 0.044715
    %v4214 = vmul.f32 %v4071, 0.044715
    %v4215 = vmul.f32 %v4129, 0.044715
    %v4216 = vmul.f32 %v3841, 0.044715
    %v4217 = vmul.f32 %v3899, 0.044715
    %v4218 = vmul.f32 %v3957, 0.044715
    %v4219 = vmul.f32 %v4015, 0.044715
    %v4220 = vmul.f32 %v4073, 0.044715
    %v4221 = vmul.f32 %v4131, 0.044715
    %v4222 = vmul.f32 %v3844, 0.044715
    %v4223 = vmul.f32 %v3902, 0.044715
    %v4224 = vmul.f32 %v3960, 0.044715
    %v4225 = vmul.f32 %v4018, 0.044715
    %v4226 = vmul.f32 %v4076, 0.044715
    %v4227 = vmul.f32 %v4134, 0.044715
    %v4228 = vmul.f32 %v3846, 0.044715
    %v4229 = vmul.f32 %v3904, 0.044715
    %v4230 = vmul.f32 %v3962, 0.044715
    %v4231 = vmul.f32 %v4020, 0.044715
    %v4232 = vmul.f32 %v4078, 0.044715
    %v4233 = vmul.f32 %v4136, 0.044715
    %v4234 = vmul.f32 %v4186, %v3829
    %v4235 = vmul.f32 %v4187, %v3887
    %v4236 = vmul.f32 %v4188, %v3945
    %v4237 = vmul.f32 %v4189, %v4003
    %v4238 = vmul.f32 %v4190, %v4061
    %v4239 = vmul.f32 %v4191, %v4119
    %v4240 = vmul.f32 %v4192, %v3831
    %v4241 = vmul.f32 %v4193, %v3889
    %v4242 = vmul.f32 %v4194, %v3947
    %v4243 = vmul.f32 %v4195, %v4005
    %v4244 = vmul.f32 %v4196, %v4063
    %v4245 = vmul.f32 %v4197, %v4121
    %v4246 = vmul.f32 %v4198, %v3834
    %v4247 = vmul.f32 %v4199, %v3892
    %v4248 = vmul.f32 %v4200, %v3950
    %v4249 = vmul.f32 %v4201, %v4008
    %v4250 = vmul.f32 %v4202, %v4066
    %v4251 = vmul.f32 %v4203, %v4124
    %v4252 = vmul.f32 %v4204, %v3836
    %v4253 = vmul.f32 %v4205, %v3894
    %v4254 = vmul.f32 %v4206, %v3952
    %v4255 = vmul.f32 %v4207, %v4010
    %v4256 = vmul.f32 %v4208, %v4068
    %v4257 = vmul.f32 %v4209, %v4126
    %v4258 = vmul.f32 %v4210, %v3839
    %v4259 = vmul.f32 %v4211, %v3897
    %v4260 = vmul.f32 %v4212, %v3955
    %v4261 = vmul.f32 %v4213, %v4013
    %v4262 = vmul.f32 %v4214, %v4071
    %v4263 = vmul.f32 %v4215, %v4129
    %v4264 = vmul.f32 %v4216, %v3841
    %v4265 = vmul.f32 %v4217, %v3899
    %v4266 = vmul.f32 %v4218, %v3957
    %v4267 = vmul.f32 %v4219, %v4015
    %v4268 = vmul.f32 %v4220, %v4073
    %v4269 = vmul.f32 %v4221, %v4131
    %v4270 = vmul.f32 %v4222, %v3844
    %v4271 = vmul.f32 %v4223, %v3902
    %v4272 = vmul.f32 %v4224, %v3960
    %v4273 = vmul.f32 %v4225, %v4018
    %v4274 = vmul.f32 %v4226, %v4076
    %v4275 = vmul.f32 %v4227, %v4134
    %v4276 = vmul.f32 %v4228, %v3846
    %v4277 = vmul.f32 %v4229, %v3904
    %v4278 = vmul.f32 %v4230, %v3962
    %v4279 = vmul.f32 %v4231, %v4020
    %v4280 = vmul.f32 %v4232, %v4078
    %v4281 = vmul.f32 %v4233, %v4136
    %v4282 = vmul.f32 %v4234, %v3829
    %v4283 = vmul.f32 %v4235, %v3887
    %v4284 = vmul.f32 %v4236, %v3945
    %v4285 = vmul.f32 %v4237, %v4003
    %v4286 = vmul.f32 %v4238, %v4061
    %v4287 = vmul.f32 %v4239, %v4119
    %v4288 = vmul.f32 %v4240, %v3831
    %v4289 = vmul.f32 %v4241, %v3889
    %v4290 = vmul.f32 %v4242, %v3947
    %v4291 = vmul.f32 %v4243, %v4005
    %v4292 = vmul.f32 %v4244, %v4063
    %v4293 = vmul.f32 %v4245, %v4121
    %v4294 = vmul.f32 %v4246, %v3834
    %v4295 = vmul.f32 %v4247, %v3892
    %v4296 = vmul.f32 %v4248, %v3950
    %v4297 = vmul.f32 %v4249, %v4008
    %v4298 = vmul.f32 %v4250, %v4066
    %v4299 = vmul.f32 %v4251, %v4124
    %v4300 = vmul.f32 %v4252, %v3836
    %v4301 = vmul.f32 %v4253, %v3894
    %v4302 = vmul.f32 %v4254, %v3952
    %v4303 = vmul.f32 %v4255, %v4010
    %v4304 = vmul.f32 %v4256, %v4068
    %v4305 = vmul.f32 %v4257, %v4126
    %v4306 = vmul.f32 %v4258, %v3839
    %v4307 = vmul.f32 %v4259, %v3897
    %v4308 = vmul.f32 %v4260, %v3955
    %v4309 = vmul.f32 %v4261, %v4013
    %v4310 = vmul.f32 %v4262, %v4071
    %v4311 = vmul.f32 %v4263, %v4129
    %v4312 = vmul.f32 %v4264, %v3841
    %v4313 = vmul.f32 %v4265, %v3899
    %v4314 = vmul.f32 %v4266, %v3957
    %v4315 = vmul.f32 %v4267, %v4015
    %v4316 = vmul.f32 %v4268, %v4073
    %v4317 = vmul.f32 %v4269, %v4131
    %v4318 = vmul.f32 %v4270, %v3844
    %v4319 = vmul.f32 %v4271, %v3902
    %v4320 = vmul.f32 %v4272, %v3960
    %v4321 = vmul.f32 %v4273, %v4018
    %v4322 = vmul.f32 %v4274, %v4076
    %v4323 = vmul.f32 %v4275, %v4134
    %v4324 = vmul.f32 %v4276, %v3846
    %v4325 = vmul.f32 %v4277, %v3904
    %v4326 = vmul.f32 %v4278, %v3962
    %v4327 = vmul.f32 %v4279, %v4020
    %v4328 = vmul.f32 %v4280, %v4078
    %v4329 = vmul.f32 %v4281, %v4136
    %v4330 = vadd.f32 %v3829, %v4282
    %v4331 = vadd.f32 %v3887, %v4283
    %v4332 = vadd.f32 %v3945, %v4284
    %v4333 = vadd.f32 %v4003, %v4285
    %v4334 = vadd.f32 %v4061, %v4286
    %v4335 = vadd.f32 %v4119, %v4287
    %v4336 = vadd.f32 %v3831, %v4288
    %v4337 = vadd.f32 %v3889, %v4289
    %v4338 = vadd.f32 %v3947, %v4290
    %v4339 = vadd.f32 %v4005, %v4291
    %v4340 = vadd.f32 %v4063, %v4292
    %v4341 = vadd.f32 %v4121, %v4293
    %v4342 = vadd.f32 %v3834, %v4294
    %v4343 = vadd.f32 %v3892, %v4295
    %v4344 = vadd.f32 %v3950, %v4296
    %v4345 = vadd.f32 %v4008, %v4297
    %v4346 = vadd.f32 %v4066, %v4298
    %v4347 = vadd.f32 %v4124, %v4299
    %v4348 = vadd.f32 %v3836, %v4300
    %v4349 = vadd.f32 %v3894, %v4301
    %v4350 = vadd.f32 %v3952, %v4302
    %v4351 = vadd.f32 %v4010, %v4303
    %v4352 = vadd.f32 %v4068, %v4304
    %v4353 = vadd.f32 %v4126, %v4305
    %v4354 = vadd.f32 %v3839, %v4306
    %v4355 = vadd.f32 %v3897, %v4307
    %v4356 = vadd.f32 %v3955, %v4308
    %v4357 = vadd.f32 %v4013, %v4309
    %v4358 = vadd.f32 %v4071, %v4310
    %v4359 = vadd.f32 %v4129, %v4311
    %v4360 = vadd.f32 %v3841, %v4312
    %v4361 = vadd.f32 %v3899, %v4313
    %v4362 = vadd.f32 %v3957, %v4314
    %v4363 = vadd.f32 %v4015, %v4315
    %v4364 = vadd.f32 %v4073, %v4316
    %v4365 = vadd.f32 %v4131, %v4317
    %v4366 = vadd.f32 %v3844, %v4318
    %v4367 = vadd.f32 %v3902, %v4319
    %v4368 = vadd.f32 %v3960, %v4320
    %v4369 = vadd.f32 %v4018, %v4321
    %v4370 = vadd.f32 %v4076, %v4322
    %v4371 = vadd.f32 %v4134, %v4323
    %v4372 = vadd.f32 %v3846, %v4324
    %v4373 = vadd.f32 %v3904, %v4325
    %v4374 = vadd.f32 %v3962, %v4326
    %v4375 = vadd.f32 %v4020, %v4327
    %v4376 = vadd.f32 %v4078, %v4328
    %v4377 = vadd.f32 %v4136, %v4329
    %v4378 = vmul.f32 %v4330, 0.7978846
    %v4379 = vmul.f32 %v4331, 0.7978846
    %v4380 = vmul.f32 %v4332, 0.7978846
    %v4381 = vmul.f32 %v4333, 0.7978846
    %v4382 = vmul.f32 %v4334, 0.7978846
    %v4383 = vmul.f32 %v4335, 0.7978846
    %v4384 = vmul.f32 %v4336, 0.7978846
    %v4385 = vmul.f32 %v4337, 0.7978846
    %v4386 = vmul.f32 %v4338, 0.7978846
    %v4387 = vmul.f32 %v4339, 0.7978846
    %v4388 = vmul.f32 %v4340, 0.7978846
    %v4389 = vmul.f32 %v4341, 0.7978846
    %v4390 = vmul.f32 %v4342, 0.7978846
    %v4391 = vmul.f32 %v4343, 0.7978846
    %v4392 = vmul.f32 %v4344, 0.7978846
    %v4393 = vmul.f32 %v4345, 0.7978846
    %v4394 = vmul.f32 %v4346, 0.7978846
    %v4395 = vmul.f32 %v4347, 0.7978846
    %v4396 = vmul.f32 %v4348, 0.7978846
    %v4397 = vmul.f32 %v4349, 0.7978846
    %v4398 = vmul.f32 %v4350, 0.7978846
    %v4399 = vmul.f32 %v4351, 0.7978846
    %v4400 = vmul.f32 %v4352, 0.7978846
    %v4401 = vmul.f32 %v4353, 0.7978846
    %v4402 = vmul.f32 %v4354, 0.7978846
    %v4403 = vmul.f32 %v4355, 0.7978846
    %v4404 = vmul.f32 %v4356, 0.7978846
    %v4405 = vmul.f32 %v4357, 0.7978846
    %v4406 = vmul.f32 %v4358, 0.7978846
    %v4407 = vmul.f32 %v4359, 0.7978846
    %v4408 = vmul.f32 %v4360, 0.7978846
    %v4409 = vmul.f32 %v4361, 0.7978846
    %v4410 = vmul.f32 %v4362, 0.7978846
    %v4411 = vmul.f32 %v4363, 0.7978846
    %v4412 = vmul.f32 %v4364, 0.7978846
    %v4413 = vmul.f32 %v4365, 0.7978846
    %v4414 = vmul.f32 %v4366, 0.7978846
    %v4415 = vmul.f32 %v4367, 0.7978846
    %v4416 = vmul.f32 %v4368, 0.7978846
    %v4417 = vmul.f32 %v4369, 0.7978846
    %v4418 = vmul.f32 %v4370, 0.7978846
    %v4419 = vmul.f32 %v4371, 0.7978846
    %v4420 = vmul.f32 %v4372, 0.7978846
    %v4421 = vmul.f32 %v4373, 0.7978846
    %v4422 = vmul.f32 %v4374, 0.7978846
    %v4423 = vmul.f32 %v4375, 0.7978846
    %v4424 = vmul.f32 %v4376, 0.7978846
    %v4425 = vmul.f32 %v4377, 0.7978846
    %v4426 = vtanh.pop %v4378
    %v4427 = vtanh.pop %v4379
    %v4428 = vtanh.pop %v4380
    %v4429 = vtanh.pop %v4381
    %v4430 = vtanh.pop %v4382
    %v4431 = vtanh.pop %v4383
    %v4432 = vtanh.pop %v4384
    %v4433 = vtanh.pop %v4385
    %v4434 = vtanh.pop %v4386
    %v4435 = vtanh.pop %v4387
    %v4436 = vtanh.pop %v4388
    %v4437 = vtanh.pop %v4389
    %v4438 = vtanh.pop %v4390
    %v4439 = vtanh.pop %v4391
    %v4440 = vtanh.pop %v4392
    %v4441 = vtanh.pop %v4393
    %v4442 = vtanh.pop %v4394
    %v4443 = vtanh.pop %v4395
    %v4444 = vtanh.pop %v4396
    %v4445 = vtanh.pop %v4397
    %v4446 = vtanh.pop %v4398
    %v4447 = vtanh.pop %v4399
    %v4448 = vtanh.pop %v4400
    %v4449 = vtanh.pop %v4401
    %v4450 = vtanh.pop %v4402
    %v4451 = vtanh.pop %v4403
    %v4452 = vtanh.pop %v4404
    %v4453 = vtanh.pop %v4405
    %v4454 = vtanh.pop %v4406
    %v4455 = vtanh.pop %v4407
    %v4456 = vtanh.pop %v4408
    %v4457 = vtanh.pop %v4409
    %v4458 = vtanh.pop %v4410
    %v4459 = vtanh.pop %v4411
    %v4460 = vtanh.pop %v4412
    %v4461 = vtanh.pop %v4413
    %v4462 = vtanh.pop %v4414
    %v4463 = vtanh.pop %v4415
    %v4464 = vtanh.pop %v4416
    %v4465 = vtanh.pop %v4417
    %v4466 = vtanh.pop %v4418
    %v4467 = vtanh.pop %v4419
    %v4468 = vtanh.pop %v4420
    %v4469 = vtanh.pop %v4421
    %v4470 = vtanh.pop %v4422
    %v4471 = vtanh.pop %v4423
    %v4472 = vtanh.pop %v4424
    %v4473 = vtanh.pop %v4425
    %v4474 = vadd.f32 %v4426, 1.0
    %v4475 = vadd.f32 %v4427, 1.0
    %v4476 = vadd.f32 %v4428, 1.0
    %v4477 = vadd.f32 %v4429, 1.0
    %v4478 = vadd.f32 %v4430, 1.0
    %v4479 = vadd.f32 %v4431, 1.0
    %v4480 = vadd.f32 %v4432, 1.0
    %v4481 = vadd.f32 %v4433, 1.0
    %v4482 = vadd.f32 %v4434, 1.0
    %v4483 = vadd.f32 %v4435, 1.0
    %v4484 = vadd.f32 %v4436, 1.0
    %v4485 = vadd.f32 %v4437, 1.0
    %v4486 = vadd.f32 %v4438, 1.0
    %v4487 = vadd.f32 %v4439, 1.0
    %v4488 = vadd.f32 %v4440, 1.0
    %v4489 = vadd.f32 %v4441, 1.0
    %v4490 = vadd.f32 %v4442, 1.0
    %v4491 = vadd.f32 %v4443, 1.0
    %v4492 = vadd.f32 %v4444, 1.0
    %v4493 = vadd.f32 %v4445, 1.0
    %v4494 = vadd.f32 %v4446, 1.0
    %v4495 = vadd.f32 %v4447, 1.0
    %v4496 = vadd.f32 %v4448, 1.0
    %v4497 = vadd.f32 %v4449, 1.0
    %v4498 = vadd.f32 %v4450, 1.0
    %v4499 = vadd.f32 %v4451, 1.0
    %v4500 = vadd.f32 %v4452, 1.0
    %v4501 = vadd.f32 %v4453, 1.0
    %v4502 = vadd.f32 %v4454, 1.0
    %v4503 = vadd.f32 %v4455, 1.0
    %v4504 = vadd.f32 %v4456, 1.0
    %v4505 = vadd.f32 %v4457, 1.0
    %v4506 = vadd.f32 %v4458, 1.0
    %v4507 = vadd.f32 %v4459, 1.0
    %v4508 = vadd.f32 %v4460, 1.0
    %v4509 = vadd.f32 %v4461, 1.0
    %v4510 = vadd.f32 %v4462, 1.0
    %v4511 = vadd.f32 %v4463, 1.0
    %v4512 = vadd.f32 %v4464, 1.0
    %v4513 = vadd.f32 %v4465, 1.0
    %v4514 = vadd.f32 %v4466, 1.0
    %v4515 = vadd.f32 %v4467, 1.0
    %v4516 = vadd.f32 %v4468, 1.0
    %v4517 = vadd.f32 %v4469, 1.0
    %v4518 = vadd.f32 %v4470, 1.0
    %v4519 = vadd.f32 %v4471, 1.0
    %v4520 = vadd.f32 %v4472, 1.0
    %v4521 = vadd.f32 %v4473, 1.0
    %v4522 = vmul.f32 %v4138, %v4474
    %v4523 = vmul.f32 %v4139, %v4475
    %v4524 = vmul.f32 %v4140, %v4476
    %v4525 = vmul.f32 %v4141, %v4477
    %v4526 = vmul.f32 %v4142, %v4478
    %v4527 = vmul.f32 %v4143, %v4479
    %v4528 = vmul.f32 %v4144, %v4480
    %v4529 = vmul.f32 %v4145, %v4481
    %v4530 = vmul.f32 %v4146, %v4482
    %v4531 = vmul.f32 %v4147, %v4483
    %v4532 = vmul.f32 %v4148, %v4484
    %v4533 = vmul.f32 %v4149, %v4485
    %v4534 = vmul.f32 %v4150, %v4486
    %v4535 = vmul.f32 %v4151, %v4487
    %v4536 = vmul.f32 %v4152, %v4488
    %v4537 = vmul.f32 %v4153, %v4489
    %v4538 = vmul.f32 %v4154, %v4490
    %v4539 = vmul.f32 %v4155, %v4491
    %v4540 = vmul.f32 %v4156, %v4492
    %v4541 = vmul.f32 %v4157, %v4493
    %v4542 = vmul.f32 %v4158, %v4494
    %v4543 = vmul.f32 %v4159, %v4495
    %v4544 = vmul.f32 %v4160, %v4496
    %v4545 = vmul.f32 %v4161, %v4497
    %v4546 = vmul.f32 %v4162, %v4498
    %v4547 = vmul.f32 %v4163, %v4499
    %v4548 = vmul.f32 %v4164, %v4500
    %v4549 = vmul.f32 %v4165, %v4501
    %v4550 = vmul.f32 %v4166, %v4502
    %v4551 = vmul.f32 %v4167, %v4503
    %v4552 = vmul.f32 %v4168, %v4504
    %v4553 = vmul.f32 %v4169, %v4505
    %v4554 = vmul.f32 %v4170, %v4506
    %v4555 = vmul.f32 %v4171, %v4507
    %v4556 = vmul.f32 %v4172, %v4508
    %v4557 = vmul.f32 %v4173, %v4509
    %v4558 = vmul.f32 %v4174, %v4510
    %v4559 = vmul.f32 %v4175, %v4511
    %v4560 = vmul.f32 %v4176, %v4512
    %v4561 = vmul.f32 %v4177, %v4513
    %v4562 = vmul.f32 %v4178, %v4514
    %v4563 = vmul.f32 %v4179, %v4515
    %v4564 = vmul.f32 %v4180, %v4516
    %v4565 = vmul.f32 %v4181, %v4517
    %v4566 = vmul.f32 %v4182, %v4518
    %v4567 = vmul.f32 %v4183, %v4519
    %v4568 = vmul.f32 %v4184, %v4520
    %v4569 = vmul.f32 %v4185, %v4521
    %v4570 = vpack.c.bf16 %v4528, %v4522
    %v4571 = vpack.c.bf16 %v4529, %v4523
    %v4572 = vpack.c.bf16 %v4530, %v4524
    %v4573 = vpack.c.bf16 %v4531, %v4525
    %v4574 = vpack.c.bf16 %v4532, %v4526
    %v4575 = vpack.c.bf16 %v4533, %v4527
    %v4576 = vpack.c.bf16 %v4540, %v4534
    %v4577 = vpack.c.bf16 %v4541, %v4535
    %v4578 = vpack.c.bf16 %v4542, %v4536
    %v4579 = vpack.c.bf16 %v4543, %v4537
    %v4580 = vpack.c.bf16 %v4544, %v4538
    %v4581 = vpack.c.bf16 %v4545, %v4539
    %v4582 = vpack.c.bf16 %v4552, %v4546
    %v4583 = vpack.c.bf16 %v4553, %v4547
    %v4584 = vpack.c.bf16 %v4554, %v4548
    %v4585 = vpack.c.bf16 %v4555, %v4549
    %v4586 = vpack.c.bf16 %v4556, %v4550
    %v4587 = vpack.c.bf16 %v4557, %v4551
    %v4588 = vpack.c.bf16 %v4564, %v4558
    %v4589 = vpack.c.bf16 %v4565, %v4559
    %v4590 = vpack.c.bf16 %v4566, %v4560
    %v4591 = vpack.c.bf16 %v4567, %v4561
    %v4592 = vpack.c.bf16 %v4568, %v4562
    %v4593 = vpack.c.bf16 %v4569, %v4563
    %v4594 = vld [vmem:[%s11] sm:$0xff]
    %v4595 = vld [vmem:[%s11 + $0x8] sm:$0xff]
    %v4596 = vld [vmem:[%s11 + $0x10] sm:$0xff]
    %v4597 = vld [vmem:[%s11 + $0x18] sm:$0xff]
    %v4598 = vld [vmem:[%s11 + $0x20] sm:$0xff]
    %v4599 = vld [vmem:[%s11 + $0x28] sm:$0xff]
    %v4600 = vld [vmem:[%s11 + $0x30] sm:$0xff]
    %v4601 = vld [vmem:[%s11 + $0x38] sm:$0xff]
    %v4602 = vld [vmem:[%s11 + $0x40] sm:$0xff]
    %v4603 = vld [vmem:[%s11 + $0x48] sm:$0xff]
    %v4604 = vld [vmem:[%s11 + $0x50] sm:$0xff]
    %v4605 = vld [vmem:[%s11 + $0x58] sm:$0xff]
    %v4606 = vld [vmem:[%s11 + $0x60] sm:$0xff]
    %v4607 = vld [vmem:[%s11 + $0x68] sm:$0xff]
    %v4608 = vld [vmem:[%s11 + $0x70] sm:$0xff]
    %v4609 = vld [vmem:[%s11 + $0x78] sm:$0xff]
    %v4610 = vld [vmem:[%s11 + $0x80] sm:$0xff]
    %v4611 = vld [vmem:[%s11 + $0x88] sm:$0xff]
    %v4612 = vld [vmem:[%s11 + $0x90] sm:$0xff]
    %v4613 = vld [vmem:[%s11 + $0x98] sm:$0xff]
    %v4614 = vld [vmem:[%s11 + $0xa0] sm:$0xff]
    %v4615 = vld [vmem:[%s11 + $0xa8] sm:$0xff]
    %v4616 = vld [vmem:[%s11 + $0xb0] sm:$0xff]
    %v4617 = vld [vmem:[%s11 + $0xb8] sm:$0xff]
    %v4618 = vld [vmem:[%s11 + $0xc0] sm:$0xff]
    %v4619 = vld [vmem:[%s11 + $0xc8] sm:$0xff]
    %v4620 = vld [vmem:[%s11 + $0xd0] sm:$0xff]
    %v4621 = vld [vmem:[%s11 + $0xd8] sm:$0xff]
    %v4622 = vld [vmem:[%s11 + $0xe0] sm:$0xff]
    %v4623 = vld [vmem:[%s11 + $0xe8] sm:$0xff]
    %v4624 = vld [vmem:[%s11 + $0xf0] sm:$0xff]
    %v4625 = vld [vmem:[%s11 + $0xf8] sm:$0xff]
    %v4626 = vld [vmem:[%s11 + $0x100] sm:$0xff]
    %v4627 = vld [vmem:[%s11 + $0x108] sm:$0xff]
    %v4628 = vld [vmem:[%s11 + $0x110] sm:$0xff]
    %v4629 = vld [vmem:[%s11 + $0x118] sm:$0xff]
    %v4630 = vld [vmem:[%s11 + $0x120] sm:$0xff]
    %v4631 = vld [vmem:[%s11 + $0x128] sm:$0xff]
    %v4632 = vld [vmem:[%s11 + $0x130] sm:$0xff]
    %v4633 = vld [vmem:[%s11 + $0x138] sm:$0xff]
    %v4634 = vld [vmem:[%s11 + $0x140] sm:$0xff]
    %v4635 = vld [vmem:[%s11 + $0x148] sm:$0xff]
    %v4636 = vld [vmem:[%s11 + $0x150] sm:$0xff]
    %v4637 = vld [vmem:[%s11 + $0x158] sm:$0xff]
    %v4638 = vld [vmem:[%s11 + $0x160] sm:$0xff]
    %v4639 = vld [vmem:[%s11 + $0x168] sm:$0xff]
    %v4640 = vld [vmem:[%s11 + $0x170] sm:$0xff]
    %v4641 = vld [vmem:[%s11 + $0x178] sm:$0xff]
    %v4642 = vld [vmem:[%s11 + $0x180] sm:$0xff]
    %v4643 = vld [vmem:[%s11 + $0x188] sm:$0xff]
    %v4644 = vld [vmem:[%s11 + $0x190] sm:$0xff]
    %v4645 = vld [vmem:[%s11 + $0x198] sm:$0xff]
    %v4646 = vld [vmem:[%s11 + $0x1a0] sm:$0xff]
    %v4647 = vld [vmem:[%s11 + $0x1a8] sm:$0xff]
    %v4648 = vld [vmem:[%s11 + $0x1b0] sm:$0xff]
    %v4649 = vld [vmem:[%s11 + $0x1b8] sm:$0xff]
    %v4650 = vld [vmem:[%s11 + $0x1c0] sm:$0xff]
    %v4651 = vld [vmem:[%s11 + $0x1c8] sm:$0xff]
    %v4652 = vld [vmem:[%s11 + $0x1d0] sm:$0xff]
    %v4653 = vld [vmem:[%s11 + $0x1d8] sm:$0xff]
    %v4654 = vld [vmem:[%s11 + $0x1e0] sm:$0xff]
    %v4655 = vld [vmem:[%s11 + $0x1e8] sm:$0xff]
    %v4656 = vld [vmem:[%s11 + $0x1f0] sm:$0xff]
    %v4657 = vld [vmem:[%s11 + $0x1f8] sm:$0xff]
    %v4658 = vld [vmem:[%s11 + $0x200] sm:$0xff]
    %v4659 = vld [vmem:[%s11 + $0x208] sm:$0xff]
    %v4660 = vld [vmem:[%s11 + $0x210] sm:$0xff]
    %v4661 = vld [vmem:[%s11 + $0x218] sm:$0xff]
    %v4662 = vld [vmem:[%s11 + $0x220] sm:$0xff]
    %v4663 = vld [vmem:[%s11 + $0x228] sm:$0xff]
    %v4664 = vld [vmem:[%s11 + $0x230] sm:$0xff]
    %v4665 = vld [vmem:[%s11 + $0x238] sm:$0xff]
    %v4666 = vld [vmem:[%s11 + $0x240] sm:$0xff]
    %v4667 = vld [vmem:[%s11 + $0x248] sm:$0xff]
    %v4668 = vld [vmem:[%s11 + $0x250] sm:$0xff]
    %v4669 = vld [vmem:[%s11 + $0x258] sm:$0xff]
    %v4670 = vld [vmem:[%s11 + $0x260] sm:$0xff]
    %v4671 = vld [vmem:[%s11 + $0x268] sm:$0xff]
    %v4672 = vld [vmem:[%s11 + $0x270] sm:$0xff]
    %v4673 = vld [vmem:[%s11 + $0x278] sm:$0xff]
    %v4674 = vld [vmem:[%s11 + $0x280] sm:$0xff]
    %v4675 = vld [vmem:[%s11 + $0x288] sm:$0xff]
    %v4676 = vld [vmem:[%s11 + $0x290] sm:$0xff]
    %v4677 = vld [vmem:[%s11 + $0x298] sm:$0xff]
    %v4678 = vld [vmem:[%s11 + $0x2a0] sm:$0xff]
    %v4679 = vld [vmem:[%s11 + $0x2a8] sm:$0xff]
    %v4680 = vld [vmem:[%s11 + $0x2b0] sm:$0xff]
    %v4681 = vld [vmem:[%s11 + $0x2b8] sm:$0xff]
    %v4682 = vld [vmem:[%s11 + $0x2c0] sm:$0xff]
    %v4683 = vld [vmem:[%s11 + $0x2c8] sm:$0xff]
    %v4684 = vld [vmem:[%s11 + $0x2d0] sm:$0xff]
    %v4685 = vld [vmem:[%s11 + $0x2d8] sm:$0xff]
    %v4686 = vld [vmem:[%s11 + $0x2e0] sm:$0xff]
    %v4687 = vld [vmem:[%s11 + $0x2e8] sm:$0xff]
    %v4688 = vld [vmem:[%s11 + $0x2f0] sm:$0xff]
    %v4689 = vld [vmem:[%s11 + $0x2f8] sm:$0xff]
    %v4690 = vld [vmem:[#allocation16] sm:$0x3]
    %v4692 = vperm.slane %v4690, 0
    %v4693 = vperm.slane %v4690, 1
    %v4792 = vunpack.c.l.b16 %v4594
    %v4793 = vunpack.c.h.b16 %v4594
    %v4794 = vunpack.c.l.b16 %v4595
    %v4795 = vunpack.c.h.b16 %v4595
    %v4796 = vunpack.c.l.b16 %v4596
    %v4797 = vunpack.c.h.b16 %v4596
    %v4798 = vunpack.c.l.b16 %v4597
    %v4799 = vunpack.c.h.b16 %v4597
    %v4800 = vunpack.c.l.b16 %v4598
    %v4801 = vunpack.c.h.b16 %v4598
    %v4802 = vunpack.c.l.b16 %v4599
    %v4803 = vunpack.c.h.b16 %v4599
    %v4804 = vunpack.c.l.b16 %v4600
    %v4805 = vunpack.c.h.b16 %v4600
    %v4806 = vunpack.c.l.b16 %v4601
    %v4807 = vunpack.c.h.b16 %v4601
    %v4808 = vunpack.c.l.b16 %v4602
    %v4809 = vunpack.c.h.b16 %v4602
    %v4810 = vunpack.c.l.b16 %v4603
    %v4811 = vunpack.c.h.b16 %v4603
    %v4812 = vunpack.c.l.b16 %v4604
    %v4813 = vunpack.c.h.b16 %v4604
    %v4814 = vunpack.c.l.b16 %v4605
    %v4815 = vunpack.c.h.b16 %v4605
    %v4816 = vunpack.c.l.b16 %v4606
    %v4817 = vunpack.c.h.b16 %v4606
    %v4818 = vunpack.c.l.b16 %v4607
    %v4819 = vunpack.c.h.b16 %v4607
    %v4820 = vunpack.c.l.b16 %v4608
    %v4821 = vunpack.c.h.b16 %v4608
    %v4822 = vunpack.c.l.b16 %v4609
    %v4823 = vunpack.c.h.b16 %v4609
    %v4824 = vunpack.c.l.b16 %v4610
    %v4825 = vunpack.c.h.b16 %v4610
    %v4826 = vunpack.c.l.b16 %v4611
    %v4827 = vunpack.c.h.b16 %v4611
    %v4828 = vunpack.c.l.b16 %v4612
    %v4829 = vunpack.c.h.b16 %v4612
    %v4830 = vunpack.c.l.b16 %v4613
    %v4831 = vunpack.c.h.b16 %v4613
    %v4832 = vunpack.c.l.b16 %v4614
    %v4833 = vunpack.c.h.b16 %v4614
    %v4834 = vunpack.c.l.b16 %v4615
    %v4835 = vunpack.c.h.b16 %v4615
    %v4836 = vunpack.c.l.b16 %v4616
    %v4837 = vunpack.c.h.b16 %v4616
    %v4838 = vunpack.c.l.b16 %v4617
    %v4839 = vunpack.c.h.b16 %v4617
    %v4840 = vunpack.c.l.b16 %v4618
    %v4841 = vunpack.c.h.b16 %v4618
    %v4842 = vunpack.c.l.b16 %v4619
    %v4843 = vunpack.c.h.b16 %v4619
    %v4844 = vunpack.c.l.b16 %v4620
    %v4845 = vunpack.c.h.b16 %v4620
    %v4846 = vunpack.c.l.b16 %v4621
    %v4847 = vunpack.c.h.b16 %v4621
    %v4848 = vunpack.c.l.b16 %v4622
    %v4849 = vunpack.c.h.b16 %v4622
    %v4850 = vunpack.c.l.b16 %v4623
    %v4851 = vunpack.c.h.b16 %v4623
    %v4852 = vunpack.c.l.b16 %v4624
    %v4853 = vunpack.c.h.b16 %v4624
    %v4854 = vunpack.c.l.b16 %v4625
    %v4855 = vunpack.c.h.b16 %v4625
    %v4856 = vunpack.c.l.b16 %v4626
    %v4857 = vunpack.c.h.b16 %v4626
    %v4858 = vunpack.c.l.b16 %v4627
    %v4859 = vunpack.c.h.b16 %v4627
    %v4860 = vunpack.c.l.b16 %v4628
    %v4861 = vunpack.c.h.b16 %v4628
    %v4862 = vunpack.c.l.b16 %v4629
    %v4863 = vunpack.c.h.b16 %v4629
    %v4864 = vunpack.c.l.b16 %v4630
    %v4865 = vunpack.c.h.b16 %v4630
    %v4866 = vunpack.c.l.b16 %v4631
    %v4867 = vunpack.c.h.b16 %v4631
    %v4868 = vunpack.c.l.b16 %v4632
    %v4869 = vunpack.c.h.b16 %v4632
    %v4870 = vunpack.c.l.b16 %v4633
    %v4871 = vunpack.c.h.b16 %v4633
    %v4872 = vunpack.c.l.b16 %v4634
    %v4873 = vunpack.c.h.b16 %v4634
    %v4874 = vunpack.c.l.b16 %v4635
    %v4875 = vunpack.c.h.b16 %v4635
    %v4876 = vunpack.c.l.b16 %v4636
    %v4877 = vunpack.c.h.b16 %v4636
    %v4878 = vunpack.c.l.b16 %v4637
    %v4879 = vunpack.c.h.b16 %v4637
    %v4880 = vunpack.c.l.b16 %v4638
    %v4881 = vunpack.c.h.b16 %v4638
    %v4882 = vunpack.c.l.b16 %v4639
    %v4883 = vunpack.c.h.b16 %v4639
    %v4884 = vunpack.c.l.b16 %v4640
    %v4885 = vunpack.c.h.b16 %v4640
    %v4886 = vunpack.c.l.b16 %v4641
    %v4887 = vunpack.c.h.b16 %v4641
    %v4888 = vunpack.c.l.b16 %v4642
    %v4889 = vunpack.c.h.b16 %v4642
    %v4890 = vunpack.c.l.b16 %v4643
    %v4891 = vunpack.c.h.b16 %v4643
    %v4892 = vunpack.c.l.b16 %v4644
    %v4893 = vunpack.c.h.b16 %v4644
    %v4894 = vunpack.c.l.b16 %v4645
    %v4895 = vunpack.c.h.b16 %v4645
    %v4896 = vunpack.c.l.b16 %v4646
    %v4897 = vunpack.c.h.b16 %v4646
    %v4898 = vunpack.c.l.b16 %v4647
    %v4899 = vunpack.c.h.b16 %v4647
    %v4900 = vunpack.c.l.b16 %v4648
    %v4901 = vunpack.c.h.b16 %v4648
    %v4902 = vunpack.c.l.b16 %v4649
    %v4903 = vunpack.c.h.b16 %v4649
    %v4904 = vunpack.c.l.b16 %v4650
    %v4905 = vunpack.c.h.b16 %v4650
    %v4906 = vunpack.c.l.b16 %v4651
    %v4907 = vunpack.c.h.b16 %v4651
    %v4908 = vunpack.c.l.b16 %v4652
    %v4909 = vunpack.c.h.b16 %v4652
    %v4910 = vunpack.c.l.b16 %v4653
    %v4911 = vunpack.c.h.b16 %v4653
    %v4912 = vunpack.c.l.b16 %v4654
    %v4913 = vunpack.c.h.b16 %v4654
    %v4914 = vunpack.c.l.b16 %v4655
    %v4915 = vunpack.c.h.b16 %v4655
    %v4916 = vunpack.c.l.b16 %v4656
    %v4917 = vunpack.c.h.b16 %v4656
    %v4918 = vunpack.c.l.b16 %v4657
    %v4919 = vunpack.c.h.b16 %v4657
    %v4920 = vunpack.c.l.b16 %v4658
    %v4921 = vunpack.c.h.b16 %v4658
    %v4922 = vunpack.c.l.b16 %v4659
    %v4923 = vunpack.c.h.b16 %v4659
    %v4924 = vunpack.c.l.b16 %v4660
    %v4925 = vunpack.c.h.b16 %v4660
    %v4926 = vunpack.c.l.b16 %v4661
    %v4927 = vunpack.c.h.b16 %v4661
    %v4928 = vunpack.c.l.b16 %v4662
    %v4929 = vunpack.c.h.b16 %v4662
    %v4930 = vunpack.c.l.b16 %v4663
    %v4931 = vunpack.c.h.b16 %v4663
    %v4932 = vunpack.c.l.b16 %v4664
    %v4933 = vunpack.c.h.b16 %v4664
    %v4934 = vunpack.c.l.b16 %v4665
    %v4935 = vunpack.c.h.b16 %v4665
    %v4936 = vunpack.c.l.b16 %v4666
    %v4937 = vunpack.c.h.b16 %v4666
    %v4938 = vunpack.c.l.b16 %v4667
    %v4939 = vunpack.c.h.b16 %v4667
    %v4940 = vunpack.c.l.b16 %v4668
    %v4941 = vunpack.c.h.b16 %v4668
    %v4942 = vunpack.c.l.b16 %v4669
    %v4943 = vunpack.c.h.b16 %v4669
    %v4944 = vunpack.c.l.b16 %v4670
    %v4945 = vunpack.c.h.b16 %v4670
    %v4946 = vunpack.c.l.b16 %v4671
    %v4947 = vunpack.c.h.b16 %v4671
    %v4948 = vunpack.c.l.b16 %v4672
    %v4949 = vunpack.c.h.b16 %v4672
    %v4950 = vunpack.c.l.b16 %v4673
    %v4951 = vunpack.c.h.b16 %v4673
    %v4952 = vunpack.c.l.b16 %v4674
    %v4953 = vunpack.c.h.b16 %v4674
    %v4954 = vunpack.c.l.b16 %v4675
    %v4955 = vunpack.c.h.b16 %v4675
    %v4956 = vunpack.c.l.b16 %v4676
    %v4957 = vunpack.c.h.b16 %v4676
    %v4958 = vunpack.c.l.b16 %v4677
    %v4959 = vunpack.c.h.b16 %v4677
    %v4960 = vunpack.c.l.b16 %v4678
    %v4961 = vunpack.c.h.b16 %v4678
    %v4962 = vunpack.c.l.b16 %v4679
    %v4963 = vunpack.c.h.b16 %v4679
    %v4964 = vunpack.c.l.b16 %v4680
    %v4965 = vunpack.c.h.b16 %v4680
    %v4966 = vunpack.c.l.b16 %v4681
    %v4967 = vunpack.c.h.b16 %v4681
    %v4968 = vunpack.c.l.b16 %v4682
    %v4969 = vunpack.c.h.b16 %v4682
    %v4970 = vunpack.c.l.b16 %v4683
    %v4971 = vunpack.c.h.b16 %v4683
    %v4972 = vunpack.c.l.b16 %v4684
    %v4973 = vunpack.c.h.b16 %v4684
    %v4974 = vunpack.c.l.b16 %v4685
    %v4975 = vunpack.c.h.b16 %v4685
    %v4976 = vunpack.c.l.b16 %v4686
    %v4977 = vunpack.c.h.b16 %v4686
    %v4978 = vunpack.c.l.b16 %v4687
    %v4979 = vunpack.c.h.b16 %v4687
    %v4980 = vunpack.c.l.b16 %v4688
    %v4981 = vunpack.c.h.b16 %v4688
    %v4982 = vunpack.c.l.b16 %v4689
    %v4983 = vunpack.c.h.b16 %v4689
    %v4984 = vpack.c.b16 %v4794, %v4792
    %v4985 = vpack.c.b16 %v4795, %v4793
    %v4986 = vpack.c.b16 %v4798, %v4796
    %v4987 = vpack.c.b16 %v4799, %v4797
    %v4988 = vpack.c.b16 %v4802, %v4800
    %v4989 = vpack.c.b16 %v4803, %v4801
    %v4990 = vpack.c.b16 %v4806, %v4804
    %v4991 = vpack.c.b16 %v4807, %v4805
    %v4992 = vpack.c.b16 %v4810, %v4808
    %v4993 = vpack.c.b16 %v4811, %v4809
    %v4994 = vpack.c.b16 %v4814, %v4812
    %v4995 = vpack.c.b16 %v4815, %v4813
    %v4996 = vpack.c.b16 %v4818, %v4816
    %v4997 = vpack.c.b16 %v4819, %v4817
    %v4998 = vpack.c.b16 %v4822, %v4820
    %v4999 = vpack.c.b16 %v4823, %v4821
    %v5000 = vpack.c.b16 %v4826, %v4824
    %v5001 = vpack.c.b16 %v4827, %v4825
    %v5002 = vpack.c.b16 %v4830, %v4828
    %v5003 = vpack.c.b16 %v4831, %v4829
    %v5004 = vpack.c.b16 %v4834, %v4832
    %v5005 = vpack.c.b16 %v4835, %v4833
    %v5006 = vpack.c.b16 %v4838, %v4836
    %v5007 = vpack.c.b16 %v4839, %v4837
    %v5008 = vpack.c.b16 %v4842, %v4840
    %v5009 = vpack.c.b16 %v4843, %v4841
    %v5010 = vpack.c.b16 %v4846, %v4844
    %v5011 = vpack.c.b16 %v4847, %v4845
    %v5012 = vpack.c.b16 %v4850, %v4848
    %v5013 = vpack.c.b16 %v4851, %v4849
    %v5014 = vpack.c.b16 %v4854, %v4852
    %v5015 = vpack.c.b16 %v4855, %v4853
    %v5016 = vpack.c.b16 %v4858, %v4856
    %v5017 = vpack.c.b16 %v4859, %v4857
    %v5018 = vpack.c.b16 %v4862, %v4860
    %v5019 = vpack.c.b16 %v4863, %v4861
    %v5020 = vpack.c.b16 %v4866, %v4864
    %v5021 = vpack.c.b16 %v4867, %v4865
    %v5022 = vpack.c.b16 %v4870, %v4868
    %v5023 = vpack.c.b16 %v4871, %v4869
    %v5024 = vpack.c.b16 %v4874, %v4872
    %v5025 = vpack.c.b16 %v4875, %v4873
    %v5026 = vpack.c.b16 %v4878, %v4876
    %v5027 = vpack.c.b16 %v4879, %v4877
    %v5028 = vpack.c.b16 %v4882, %v4880
    %v5029 = vpack.c.b16 %v4883, %v4881
    %v5030 = vpack.c.b16 %v4886, %v4884
    %v5031 = vpack.c.b16 %v4887, %v4885
    %v5032 = vpack.c.b16 %v4890, %v4888
    %v5033 = vpack.c.b16 %v4891, %v4889
    %v5034 = vpack.c.b16 %v4894, %v4892
    %v5035 = vpack.c.b16 %v4895, %v4893
    %v5036 = vpack.c.b16 %v4898, %v4896
    %v5037 = vpack.c.b16 %v4899, %v4897
    %v5038 = vpack.c.b16 %v4902, %v4900
    %v5039 = vpack.c.b16 %v4903, %v4901
    %v5040 = vpack.c.b16 %v4906, %v4904
    %v5041 = vpack.c.b16 %v4907, %v4905
    %v5042 = vpack.c.b16 %v4910, %v4908
    %v5043 = vpack.c.b16 %v4911, %v4909
    %v5044 = vpack.c.b16 %v4914, %v4912
    %v5045 = vpack.c.b16 %v4915, %v4913
    %v5046 = vpack.c.b16 %v4918, %v4916
    %v5047 = vpack.c.b16 %v4919, %v4917
    %v5048 = vpack.c.b16 %v4922, %v4920
    %v5049 = vpack.c.b16 %v4923, %v4921
    %v5050 = vpack.c.b16 %v4926, %v4924
    %v5051 = vpack.c.b16 %v4927, %v4925
    %v5052 = vpack.c.b16 %v4930, %v4928
    %v5053 = vpack.c.b16 %v4931, %v4929
    %v5054 = vpack.c.b16 %v4934, %v4932
    %v5055 = vpack.c.b16 %v4935, %v4933
    %v5056 = vpack.c.b16 %v4938, %v4936
    %v5057 = vpack.c.b16 %v4939, %v4937
    %v5058 = vpack.c.b16 %v4942, %v4940
    %v5059 = vpack.c.b16 %v4943, %v4941
    %v5060 = vpack.c.b16 %v4946, %v4944
    %v5061 = vpack.c.b16 %v4947, %v4945
    %v5062 = vpack.c.b16 %v4950, %v4948
    %v5063 = vpack.c.b16 %v4951, %v4949
    %v5064 = vpack.c.b16 %v4954, %v4952
    %v5065 = vpack.c.b16 %v4955, %v4953
    %v5066 = vpack.c.b16 %v4958, %v4956
    %v5067 = vpack.c.b16 %v4959, %v4957
    %v5068 = vpack.c.b16 %v4962, %v4960
    %v5069 = vpack.c.b16 %v4963, %v4961
    %v5070 = vpack.c.b16 %v4966, %v4964
    %v5071 = vpack.c.b16 %v4967, %v4965
    %v5072 = vpack.c.b16 %v4970, %v4968
    %v5073 = vpack.c.b16 %v4971, %v4969
    %v5074 = vpack.c.b16 %v4974, %v4972
    %v5075 = vpack.c.b16 %v4975, %v4973
    %v5076 = vpack.c.b16 %v4978, %v4976
    %v5077 = vpack.c.b16 %v4979, %v4977
    %v5078 = vpack.c.b16 %v4982, %v4980
    %v5079 = vpack.c.b16 %v4983, %v4981
    %5176 = vmatpush.bf16.msra.mxu0 %v4998
    %5177 = vmatpush.bf16.msra.mxu0 %v4996
    %5178 = vmatpush.bf16.msra.mxu0 %v4994
    %5179 = vmatpush.bf16.msra.mxu0 %v4992
    %5180 = vmatpush.bf16.msra.mxu0 %v4990
    %5181 = vmatpush.bf16.msra.mxu0 %v4988
    %5182 = vmatpush.bf16.msra.mxu0 %v4986
    %5183 = vmatpush.bf16.msra.mxu0 %v4984
    %5184 = vmatmul.bf16.gmra.mxu0 %v4570
    %v5185 = vpop.f32.mrf.mxu0
    %v5186 = vadd.f32 %v4692, %v5185
    %v5187 = vpop.f32.mrf.mxu0
    %v5188 = vadd.f32 %v4692, %v5187
    %5189 = vmatmul.bf16.gmra.mxu0 %v4576
    %v5190 = vpop.f32.mrf.mxu0
    %v5191 = vadd.f32 %v4692, %v5190
    %v5192 = vpop.f32.mrf.mxu0
    %v5193 = vadd.f32 %v4692, %v5192
    %5194 = vmatmul.bf16.gmra.mxu0 %v4582
    %v5195 = vpop.f32.mrf.mxu0
    %v5196 = vadd.f32 %v4692, %v5195
    %v5197 = vpop.f32.mrf.mxu0
    %v5198 = vadd.f32 %v4692, %v5197
    %5199 = vmatmul.bf16.gmra.mxu0 %v4588
    %v5200 = vpop.f32.mrf.mxu0
    %v5201 = vadd.f32 %v4692, %v5200
    %v5202 = vpop.f32.mrf.mxu0
    %v5203 = vadd.f32 %v4692, %v5202
    %5204 = vdwg.mxu0
    %5205 = vmatpush.bf16.msra.mxu0 %v5014
    %5206 = vmatpush.bf16.msra.mxu0 %v5012
    %5207 = vmatpush.bf16.msra.mxu0 %v5010
    %5208 = vmatpush.bf16.msra.mxu0 %v5008
    %5209 = vmatpush.bf16.msra.mxu0 %v5006
    %5210 = vmatpush.bf16.msra.mxu0 %v5004
    %5211 = vmatpush.bf16.msra.mxu0 %v5002
    %5212 = vmatpush.bf16.msra.mxu0 %v5000
    %5213 = vmatmul.bf16.gmra.mxu0 %v4571
    %v5214 = vpop.f32.mrf.mxu0
    %v5215 = vadd.f32 %v5186, %v5214
    %v5216 = vpop.f32.mrf.mxu0
    %v5217 = vadd.f32 %v5188, %v5216
    %5218 = vmatmul.bf16.gmra.mxu0 %v4577
    %v5219 = vpop.f32.mrf.mxu0
    %v5220 = vadd.f32 %v5191, %v5219
    %v5221 = vpop.f32.mrf.mxu0
    %v5222 = vadd.f32 %v5193, %v5221
    %5223 = vmatmul.bf16.gmra.mxu0 %v4583
    %v5224 = vpop.f32.mrf.mxu0
    %v5225 = vadd.f32 %v5196, %v5224
    %v5226 = vpop.f32.mrf.mxu0
    %v5227 = vadd.f32 %v5198, %v5226
    %5228 = vmatmul.bf16.gmra.mxu0 %v4589
    %v5229 = vpop.f32.mrf.mxu0
    %v5230 = vadd.f32 %v5201, %v5229
    %v5231 = vpop.f32.mrf.mxu0
    %v5232 = vadd.f32 %v5203, %v5231
    %5233 = vdwg.mxu0
    %5234 = vmatpush.bf16.msra.mxu0 %v5030
    %5235 = vmatpush.bf16.msra.mxu0 %v5028
    %5236 = vmatpush.bf16.msra.mxu0 %v5026
    %5237 = vmatpush.bf16.msra.mxu0 %v5024
    %5238 = vmatpush.bf16.msra.mxu0 %v5022
    %5239 = vmatpush.bf16.msra.mxu0 %v5020
    %5240 = vmatpush.bf16.msra.mxu0 %v5018
    %5241 = vmatpush.bf16.msra.mxu0 %v5016
    %5242 = vmatmul.bf16.gmra.mxu0 %v4572
    %v5243 = vpop.f32.mrf.mxu0
    %v5244 = vadd.f32 %v5215, %v5243
    %v5245 = vpop.f32.mrf.mxu0
    %v5246 = vadd.f32 %v5217, %v5245
    %5247 = vmatmul.bf16.gmra.mxu0 %v4578
    %v5248 = vpop.f32.mrf.mxu0
    %v5249 = vadd.f32 %v5220, %v5248
    %v5250 = vpop.f32.mrf.mxu0
    %v5251 = vadd.f32 %v5222, %v5250
    %5252 = vmatmul.bf16.gmra.mxu0 %v4584
    %v5253 = vpop.f32.mrf.mxu0
    %v5254 = vadd.f32 %v5225, %v5253
    %v5255 = vpop.f32.mrf.mxu0
    %v5256 = vadd.f32 %v5227, %v5255
    %5257 = vmatmul.bf16.gmra.mxu0 %v4590
    %v5258 = vpop.f32.mrf.mxu0
    %v5259 = vadd.f32 %v5230, %v5258
    %v5260 = vpop.f32.mrf.mxu0
    %v5261 = vadd.f32 %v5232, %v5260
    %5262 = vdwg.mxu0
    %5263 = vmatpush.bf16.msra.mxu0 %v5046
    %5264 = vmatpush.bf16.msra.mxu0 %v5044
    %5265 = vmatpush.bf16.msra.mxu0 %v5042
    %5266 = vmatpush.bf16.msra.mxu0 %v5040
    %5267 = vmatpush.bf16.msra.mxu0 %v5038
    %5268 = vmatpush.bf16.msra.mxu0 %v5036
    %5269 = vmatpush.bf16.msra.mxu0 %v5034
    %5270 = vmatpush.bf16.msra.mxu0 %v5032
    %5271 = vmatmul.bf16.gmra.mxu0 %v4573
    %v5272 = vpop.f32.mrf.mxu0
    %v5273 = vadd.f32 %v5244, %v5272
    %v5274 = vpop.f32.mrf.mxu0
    %v5275 = vadd.f32 %v5246, %v5274
    %5276 = vmatmul.bf16.gmra.mxu0 %v4579
    %v5277 = vpop.f32.mrf.mxu0
    %v5278 = vadd.f32 %v5249, %v5277
    %v5279 = vpop.f32.mrf.mxu0
    %v5280 = vadd.f32 %v5251, %v5279
    %5281 = vmatmul.bf16.gmra.mxu0 %v4585
    %v5282 = vpop.f32.mrf.mxu0
    %v5283 = vadd.f32 %v5254, %v5282
    %v5284 = vpop.f32.mrf.mxu0
    %v5285 = vadd.f32 %v5256, %v5284
    %5286 = vmatmul.bf16.gmra.mxu0 %v4591
    %v5287 = vpop.f32.mrf.mxu0
    %v5288 = vadd.f32 %v5259, %v5287
    %v5289 = vpop.f32.mrf.mxu0
    %v5290 = vadd.f32 %v5261, %v5289
    %5291 = vdwg.mxu0
    %5292 = vmatpush.bf16.msra.mxu0 %v5062
    %5293 = vmatpush.bf16.msra.mxu0 %v5060
    %5294 = vmatpush.bf16.msra.mxu0 %v5058
    %5295 = vmatpush.bf16.msra.mxu0 %v5056
    %5296 = vmatpush.bf16.msra.mxu0 %v5054
    %5297 = vmatpush.bf16.msra.mxu0 %v5052
    %5298 = vmatpush.bf16.msra.mxu0 %v5050
    %5299 = vmatpush.bf16.msra.mxu0 %v5048
    %5300 = vmatmul.bf16.gmra.mxu0 %v4574
    %v5301 = vpop.f32.mrf.mxu0
    %v5302 = vadd.f32 %v5273, %v5301
    %v5303 = vpop.f32.mrf.mxu0
    %v5304 = vadd.f32 %v5275, %v5303
    %5305 = vmatmul.bf16.gmra.mxu0 %v4580
    %v5306 = vpop.f32.mrf.mxu0
    %v5307 = vadd.f32 %v5278, %v5306
    %v5308 = vpop.f32.mrf.mxu0
    %v5309 = vadd.f32 %v5280, %v5308
    %5310 = vmatmul.bf16.gmra.mxu0 %v4586
    %v5311 = vpop.f32.mrf.mxu0
    %v5312 = vadd.f32 %v5283, %v5311
    %v5313 = vpop.f32.mrf.mxu0
    %v5314 = vadd.f32 %v5285, %v5313
    %5315 = vmatmul.bf16.gmra.mxu0 %v4592
    %v5316 = vpop.f32.mrf.mxu0
    %v5317 = vadd.f32 %v5288, %v5316
    %v5318 = vpop.f32.mrf.mxu0
    %v5319 = vadd.f32 %v5290, %v5318
    %5320 = vdwg.mxu0
    %5321 = vmatpush.bf16.msra.mxu0 %v5078
    %5322 = vmatpush.bf16.msra.mxu0 %v5076
    %5323 = vmatpush.bf16.msra.mxu0 %v5074
    %5324 = vmatpush.bf16.msra.mxu0 %v5072
    %5325 = vmatpush.bf16.msra.mxu0 %v5070
    %5326 = vmatpush.bf16.msra.mxu0 %v5068
    %5327 = vmatpush.bf16.msra.mxu0 %v5066
    %5328 = vmatpush.bf16.msra.mxu0 %v5064
    %5329 = vmatmul.bf16.gmra.mxu0 %v4575
    %v5330 = vpop.f32.mrf.mxu0
    %v5331 = vadd.f32 %v5302, %v5330
    %v5332 = vpop.f32.mrf.mxu0
    %v5333 = vadd.f32 %v5304, %v5332
    %5334 = vmatmul.bf16.gmra.mxu0 %v4581
    %v5335 = vpop.f32.mrf.mxu0
    %v5336 = vadd.f32 %v5307, %v5335
    %v5337 = vpop.f32.mrf.mxu0
    %v5338 = vadd.f32 %v5309, %v5337
    %5339 = vmatmul.bf16.gmra.mxu0 %v4587
    %v5340 = vpop.f32.mrf.mxu0
    %v5341 = vadd.f32 %v5312, %v5340
    %v5342 = vpop.f32.mrf.mxu0
    %v5343 = vadd.f32 %v5314, %v5342
    %5344 = vmatmul.bf16.gmra.mxu0 %v4593
    %v5345 = vpop.f32.mrf.mxu0
    %v5346 = vadd.f32 %v5317, %v5345
    %v5347 = vpop.f32.mrf.mxu0
    %v5348 = vadd.f32 %v5319, %v5347
    %5349 = vdwg.mxu0
    %5350 = vmatpush.bf16.msra.mxu0 %v4999
    %5351 = vmatpush.bf16.msra.mxu0 %v4997
    %5352 = vmatpush.bf16.msra.mxu0 %v4995
    %5353 = vmatpush.bf16.msra.mxu0 %v4993
    %5354 = vmatpush.bf16.msra.mxu0 %v4991
    %5355 = vmatpush.bf16.msra.mxu0 %v4989
    %5356 = vmatpush.bf16.msra.mxu0 %v4987
    %5357 = vmatpush.bf16.msra.mxu0 %v4985
    %5358 = vmatmul.bf16.gmra.mxu0 %v4570
    %v5359 = vpop.f32.mrf.mxu0
    %v5360 = vadd.f32 %v4693, %v5359
    %v5361 = vpop.f32.mrf.mxu0
    %v5362 = vadd.f32 %v4693, %v5361
    %5363 = vmatmul.bf16.gmra.mxu0 %v4576
    %v5364 = vpop.f32.mrf.mxu0
    %v5365 = vadd.f32 %v4693, %v5364
    %v5366 = vpop.f32.mrf.mxu0
    %v5367 = vadd.f32 %v4693, %v5366
    %5368 = vmatmul.bf16.gmra.mxu0 %v4582
    %v5369 = vpop.f32.mrf.mxu0
    %v5370 = vadd.f32 %v4693, %v5369
    %v5371 = vpop.f32.mrf.mxu0
    %v5372 = vadd.f32 %v4693, %v5371
    %5373 = vmatmul.bf16.gmra.mxu0 %v4588
    %v5374 = vpop.f32.mrf.mxu0
    %v5375 = vadd.f32 %v4693, %v5374
    %v5376 = vpop.f32.mrf.mxu0
    %v5377 = vadd.f32 %v4693, %v5376
    %5378 = vdwg.mxu0
    %5379 = vmatpush.bf16.msra.mxu0 %v5015
    %5380 = vmatpush.bf16.msra.mxu0 %v5013
    %5381 = vmatpush.bf16.msra.mxu0 %v5011
    %5382 = vmatpush.bf16.msra.mxu0 %v5009
    %5383 = vmatpush.bf16.msra.mxu0 %v5007
    %5384 = vmatpush.bf16.msra.mxu0 %v5005
    %5385 = vmatpush.bf16.msra.mxu0 %v5003
    %5386 = vmatpush.bf16.msra.mxu0 %v5001
    %5387 = vmatmul.bf16.gmra.mxu0 %v4571
    %v5388 = vpop.f32.mrf.mxu0
    %v5389 = vadd.f32 %v5360, %v5388
    %v5390 = vpop.f32.mrf.mxu0
    %v5391 = vadd.f32 %v5362, %v5390
    %5392 = vmatmul.bf16.gmra.mxu0 %v4577
    %v5393 = vpop.f32.mrf.mxu0
    %v5394 = vadd.f32 %v5365, %v5393
    %v5395 = vpop.f32.mrf.mxu0
    %v5396 = vadd.f32 %v5367, %v5395
    %5397 = vmatmul.bf16.gmra.mxu0 %v4583
    %v5398 = vpop.f32.mrf.mxu0
    %v5399 = vadd.f32 %v5370, %v5398
    %v5400 = vpop.f32.mrf.mxu0
    %v5401 = vadd.f32 %v5372, %v5400
    %5402 = vmatmul.bf16.gmra.mxu0 %v4589
    %v5403 = vpop.f32.mrf.mxu0
    %v5404 = vadd.f32 %v5375, %v5403
    %v5405 = vpop.f32.mrf.mxu0
    %v5406 = vadd.f32 %v5377, %v5405
    %5407 = vdwg.mxu0
    %5408 = vmatpush.bf16.msra.mxu0 %v5031
    %5409 = vmatpush.bf16.msra.mxu0 %v5029
    %5410 = vmatpush.bf16.msra.mxu0 %v5027
    %5411 = vmatpush.bf16.msra.mxu0 %v5025
    %5412 = vmatpush.bf16.msra.mxu0 %v5023
    %5413 = vmatpush.bf16.msra.mxu0 %v5021
    %5414 = vmatpush.bf16.msra.mxu0 %v5019
    %5415 = vmatpush.bf16.msra.mxu0 %v5017
    %5416 = vmatmul.bf16.gmra.mxu0 %v4572
    %v5417 = vpop.f32.mrf.mxu0
    %v5418 = vadd.f32 %v5389, %v5417
    %v5419 = vpop.f32.mrf.mxu0
    %v5420 = vadd.f32 %v5391, %v5419
    %5421 = vmatmul.bf16.gmra.mxu0 %v4578
    %v5422 = vpop.f32.mrf.mxu0
    %v5423 = vadd.f32 %v5394, %v5422
    %v5424 = vpop.f32.mrf.mxu0
    %v5425 = vadd.f32 %v5396, %v5424
    %5426 = vmatmul.bf16.gmra.mxu0 %v4584
    %v5427 = vpop.f32.mrf.mxu0
    %v5428 = vadd.f32 %v5399, %v5427
    %v5429 = vpop.f32.mrf.mxu0
    %v5430 = vadd.f32 %v5401, %v5429
    %5431 = vmatmul.bf16.gmra.mxu0 %v4590
    %v5432 = vpop.f32.mrf.mxu0
    %v5433 = vadd.f32 %v5404, %v5432
    %v5434 = vpop.f32.mrf.mxu0
    %v5435 = vadd.f32 %v5406, %v5434
    %5436 = vdwg.mxu0
    %5437 = vmatpush.bf16.msra.mxu0 %v5047
    %5438 = vmatpush.bf16.msra.mxu0 %v5045
    %5439 = vmatpush.bf16.msra.mxu0 %v5043
    %5440 = vmatpush.bf16.msra.mxu0 %v5041
    %5441 = vmatpush.bf16.msra.mxu0 %v5039
    %5442 = vmatpush.bf16.msra.mxu0 %v5037
    %5443 = vmatpush.bf16.msra.mxu0 %v5035
    %5444 = vmatpush.bf16.msra.mxu0 %v5033
    %5445 = vmatmul.bf16.gmra.mxu0 %v4573
    %v5446 = vpop.f32.mrf.mxu0
    %v5447 = vadd.f32 %v5418, %v5446
    %v5448 = vpop.f32.mrf.mxu0
    %v5449 = vadd.f32 %v5420, %v5448
    %5450 = vmatmul.bf16.gmra.mxu0 %v4579
    %v5451 = vpop.f32.mrf.mxu0
    %v5452 = vadd.f32 %v5423, %v5451
    %v5453 = vpop.f32.mrf.mxu0
    %v5454 = vadd.f32 %v5425, %v5453
    %5455 = vmatmul.bf16.gmra.mxu0 %v4585
    %v5456 = vpop.f32.mrf.mxu0
    %v5457 = vadd.f32 %v5428, %v5456
    %v5458 = vpop.f32.mrf.mxu0
    %v5459 = vadd.f32 %v5430, %v5458
    %5460 = vmatmul.bf16.gmra.mxu0 %v4591
    %v5461 = vpop.f32.mrf.mxu0
    %v5462 = vadd.f32 %v5433, %v5461
    %v5463 = vpop.f32.mrf.mxu0
    %v5464 = vadd.f32 %v5435, %v5463
    %5465 = vdwg.mxu0
    %5466 = vmatpush.bf16.msra.mxu0 %v5063
    %5467 = vmatpush.bf16.msra.mxu0 %v5061
    %5468 = vmatpush.bf16.msra.mxu0 %v5059
    %5469 = vmatpush.bf16.msra.mxu0 %v5057
    %5470 = vmatpush.bf16.msra.mxu0 %v5055
    %5471 = vmatpush.bf16.msra.mxu0 %v5053
    %5472 = vmatpush.bf16.msra.mxu0 %v5051
    %5473 = vmatpush.bf16.msra.mxu0 %v5049
    %5474 = vmatmul.bf16.gmra.mxu0 %v4574
    %v5475 = vpop.f32.mrf.mxu0
    %v5476 = vadd.f32 %v5447, %v5475
    %v5477 = vpop.f32.mrf.mxu0
    %v5478 = vadd.f32 %v5449, %v5477
    %5479 = vmatmul.bf16.gmra.mxu0 %v4580
    %v5480 = vpop.f32.mrf.mxu0
    %v5481 = vadd.f32 %v5452, %v5480
    %v5482 = vpop.f32.mrf.mxu0
    %v5483 = vadd.f32 %v5454, %v5482
    %5484 = vmatmul.bf16.gmra.mxu0 %v4586
    %v5485 = vpop.f32.mrf.mxu0
    %v5486 = vadd.f32 %v5457, %v5485
    %v5487 = vpop.f32.mrf.mxu0
    %v5488 = vadd.f32 %v5459, %v5487
    %5489 = vmatmul.bf16.gmra.mxu0 %v4592
    %v5490 = vpop.f32.mrf.mxu0
    %v5491 = vadd.f32 %v5462, %v5490
    %v5492 = vpop.f32.mrf.mxu0
    %v5493 = vadd.f32 %v5464, %v5492
    %5494 = vdwg.mxu0
    %5495 = vmatpush.bf16.msra.mxu0 %v5079
    %5496 = vmatpush.bf16.msra.mxu0 %v5077
    %5497 = vmatpush.bf16.msra.mxu0 %v5075
    %5498 = vmatpush.bf16.msra.mxu0 %v5073
    %5499 = vmatpush.bf16.msra.mxu0 %v5071
    %5500 = vmatpush.bf16.msra.mxu0 %v5069
    %5501 = vmatpush.bf16.msra.mxu0 %v5067
    %5502 = vmatpush.bf16.msra.mxu0 %v5065
    %5503 = vmatmul.bf16.gmra.mxu0 %v4575
    %v5504 = vpop.f32.mrf.mxu0
    %v5505 = vadd.f32 %v5476, %v5504
    %v5506 = vpop.f32.mrf.mxu0
    %v5507 = vadd.f32 %v5478, %v5506
    %5508 = vmatmul.bf16.gmra.mxu0 %v4581
    %v5509 = vpop.f32.mrf.mxu0
    %v5510 = vadd.f32 %v5481, %v5509
    %v5511 = vpop.f32.mrf.mxu0
    %v5512 = vadd.f32 %v5483, %v5511
    %5513 = vmatmul.bf16.gmra.mxu0 %v4587
    %v5514 = vpop.f32.mrf.mxu0
    %v5515 = vadd.f32 %v5486, %v5514
    %v5516 = vpop.f32.mrf.mxu0
    %v5517 = vadd.f32 %v5488, %v5516
    %5518 = vmatmul.bf16.gmra.mxu0 %v4593
    %v5519 = vpop.f32.mrf.mxu0
    %v5520 = vadd.f32 %v5491, %v5519
    %v5521 = vpop.f32.mrf.mxu0
    %v5522 = vadd.f32 %v5493, %v5521
    %5523 = vdwg.mxu0
    %v5524 = vadd.f32 %v3048, %v5331
    %v5525 = vadd.f32 %v3049, %v5505
    %v5526 = vadd.f32 %v3050, %v5333
    %v5527 = vadd.f32 %v3051, %v5507
    %v5528 = vadd.f32 %v3052, %v5336
    %v5529 = vadd.f32 %v3053, %v5510
    %v5530 = vadd.f32 %v3054, %v5338
    %v5531 = vadd.f32 %v3055, %v5512
    %v5532 = vadd.f32 %v3056, %v5341
    %v5533 = vadd.f32 %v3057, %v5515
    %v5534 = vadd.f32 %v3058, %v5343
    %v5535 = vadd.f32 %v3059, %v5517
    %v5536 = vadd.f32 %v3060, %v5346
    %v5537 = vadd.f32 %v3061, %v5520
    %v5538 = vadd.f32 %v3062, %v5348
    %v5539 = vadd.f32 %v3063, %v5522
    %5540 = vst [vmem:[#allocation17] sm:$0xff] %v5524
    %5541 = vst.msk [vmem:[#allocation17 + $0x8] sm:$0xff] %vm188, %v5525
    %5542 = vst [vmem:[#allocation17 + $0x10] sm:$0xff] %v5526
    %5543 = vst.msk [vmem:[#allocation17 + $0x18] sm:$0xff] %vm188, %v5527
    %5544 = vst [vmem:[#allocation17 + $0x20] sm:$0xff] %v5528
    %5545 = vst.msk [vmem:[#allocation17 + $0x28] sm:$0xff] %vm188, %v5529
    %5546 = vst [vmem:[#allocation17 + $0x30] sm:$0xff] %v5530
    %5547 = vst.msk [vmem:[#allocation17 + $0x38] sm:$0xff] %vm188, %v5531
    %5548 = vst [vmem:[#allocation17 + $0x40] sm:$0xff] %v5532
    %5549 = vst.msk [vmem:[#allocation17 + $0x48] sm:$0xff] %vm188, %v5533
    %5550 = vst [vmem:[#allocation17 + $0x50] sm:$0xff] %v5534
    %5551 = vst.msk [vmem:[#allocation17 + $0x58] sm:$0xff] %vm188, %v5535
    %5552 = vst [vmem:[#allocation17 + $0x60] sm:$0xff] %v5536
    %5553 = vst.msk [vmem:[#allocation17 + $0x68] sm:$0xff] %vm188, %v5537
    %5554 = vst [vmem:[#allocation17 + $0x70] sm:$0xff] %v5538
    %5555 = vst.msk [vmem:[#allocation17 + $0x78] sm:$0xff] %vm188, %v5539
    // Predicated region
    $region90: #{tpu_custom_call.1} parent=1 // pred_check
      _
    $region91: #{tpu_custom_call.1} parent=1 // pred_check_branch
      %5557 = sbr.rel (0) target = $region93
    $region92: #{tpu_custom_call.1} parent=1 // pred_region
      %5559 = vsyncadd [#allocation4], 0
      %s5560 = sshll.u32 [#allocation17], 4
      %s5561 = int_to_ptr.vmem [resolvable:$true] %s5560
      %s5562 = sshll.u32 %s13, 4
      %s5563 = int_to_ptr.hbm [resolvable:$true] %s5562
      %5568 = dma.vmem_to_hbm [thread:$0]  %s5561, 2048, %s5563, [#allocation4], 256, 256, 16
    $region93: #{tpu_custom_call.1} parent=1 // pred_fallthru
      _
    // Predicated region
    $region94: #{tpu_custom_call.1} parent=1 // pred_check
      _
    $region95: #{tpu_custom_call.1} parent=1 // pred_check_branch
      %5570 = sbr.rel (0) target = $region97
    $region96: #{tpu_custom_call.1} parent=1 // pred_region
      %5572 = dma.done [#allocation4], 2048
    $region97: #{tpu_custom_call.1} parent=1 // pred_fallthru
      _
    %5573 = vsyncpa [#allocation3], 1
    %5574 = vsyncpa [#allocation6], 1
    %5575 = vsyncpa [#allocation9], 1
    %5576 = vsyncpa [#allocation12], 1
    %5577 = vsyncpa [#allocation15], 1
    %5578 = vsyncpa [#allocation4], 1

</llo_original>
